<compile_context>
chip_gen: v7x
topology: tpu7x:2x2x1
jax: 0.10.0
libtpu: 0.0.40
codegen_flags: <defaults>
</compile_context>

<pallas_src>
import math
import jax
import jax.numpy as jnp
import numpy as np
from jax.experimental import pallas as pl
from jax.experimental.pallas import tpu as pltpu


# ----------------------------- Fused MHA kernel (one batch chunk per grid step) ----------------
def _make_fused_mha_kernel(Bc, num_heads, head_dim, T, S, E, temperature):
    # (q @ k^T)/sqrt(hd) followed by softmax(x / t): fold both scalings into one multiply.
    score_scale = 1.0 / (math.sqrt(head_dim) * temperature)
    H, hd = num_heads, head_dim
    G = Bc * H  # number of (batch, head) groups handled per grid step

    def kernel(q_ref, kv_ref, wq_ref, bq_ref, wkv_ref, bkv_ref, wo_ref, bo_ref, out_ref):
        f32 = jnp.float32

        # ---- two wide block-diagonal projections (q1|q2|q3 and k|v fused) ----
        pq = jnp.dot(q_ref[...], wq_ref[...], preferred_element_type=f32) + bq_ref[...]    # (Bc*T, 3E)
        pkv = jnp.dot(kv_ref[...], wkv_ref[...], preferred_element_type=f32) + bkv_ref[...]  # (Bc*S, 2E)

        # ---- regroup heads onto a single leading batch dim for head-batched matmuls ----
        q_groups, k_groups, v_groups = [], [], []
        for b in range(Bc):
            qrows = pq[b * T:(b + 1) * T, :]        # (T, 3E)
            krows = pkv[b * S:(b + 1) * S, :]       # (S, 2E)
            for h in range(H):
                # three query streams stacked along rows -> (3T, hd) per (b, h) group
                q_groups.append(jnp.concatenate(
                    [qrows[:, i * E + h * hd: i * E + (h + 1) * hd] for i in range(3)],
                    axis=0))
                k_groups.append(krows[:, h * hd:(h + 1) * hd])               # (S, hd)
                v_groups.append(krows[:, E + h * hd: E + (h + 1) * hd])      # (S, hd)
        q_g = jnp.stack(q_groups, axis=0)    # (G, 3T, hd)
        k_g = jnp.stack(k_groups, axis=0)    # (G, S,  hd)
        v_g = jnp.stack(v_groups, axis=0)    # (G, S,  hd)

        # ---- all (batch, head, stream) score matrices in one batched matmul ----
        s = jnp.einsum('gtd,gsd->gts', q_g, k_g,
                       preferred_element_type=f32) * score_scale             # (G, 3T, S)
        # move the 3 streams onto the leading dim so the flat softmax is fully batched
        s_all = jnp.concatenate([s[:, 0:T, :], s[:, T:2 * T, :], s[:, 2 * T:3 * T, :]],
                                axis=0)                                       # (3G, T, S)

        # ---- flat softmax over the whole (T, S) block per (stream, batch, head), then * T ----
        m = jnp.max(jnp.max(s_all, axis=-1, keepdims=True), axis=-2, keepdims=True)   # (3G,1,1)
        e = jnp.exp(s_all - m)
        den = jnp.sum(jnp.sum(e, axis=-1, keepdims=True), axis=-2, keepdims=True)     # (3G,1,1)
        # NOTE: pl.reciprocal(den, approx=True) would move the divide to the EUP slot but its
        # ~2e-4 relative error breaks the 1e-5 reference check, so keep the exact divide.
        w_all = e * (T / den)                                                  # softmax * T

        w1 = w_all[0:G]                                                        # (G, T, S)
        w_avg = (w1 + w_all[G:2 * G] + w_all[2 * G:3 * G]) * (1.0 / 3.0)
        # TODO(synk): nn.Dropout(p=0.0) is identity; nonzero-p dropout and attn_mask are not
        # implemented in this fused path.

        attn = jnp.einsum('gts,gsd->gtd', w_avg, v_g,
                          preferred_element_type=f32)                          # (G, T, hd)

        # ---- back to lane-dense row-major layouts ----
        y_rows, w1_rows = [], []
        for b in range(Bc):
            y_rows.append(jnp.concatenate([attn[b * H + h] for h in range(H)], axis=-1))  # (T, E)
            w1_rows.append(jnp.concatenate([w1[b * H + h] for h in range(H)], axis=-1))   # (T, H*S)
        attn_cat = y_rows[0] if Bc == 1 else jnp.concatenate(y_rows, axis=0)   # (Bc*T, E)
        w1_cat = w1_rows[0] if Bc == 1 else jnp.concatenate(w1_rows, axis=0)   # (Bc*T, H*S)

        # ---- fused out_proj ----
        y = jnp.dot(attn_cat, wo_ref[...], preferred_element_type=f32) + bo_ref[...]      # (Bc*T, E)

        # single merged lane-dense output slab: [ out | attn_weights1 ]
        out_ref[...] = jnp.concatenate([y, w1_cat], axis=-1).astype(out_ref.dtype)

    return kernel


# ----------------------------- One-time weight preparation (hoisted out of per-call path) ------
def prepare_mha_params(params):
    E = params["q1_w"].shape[0]
    f32 = jnp.float32

    def blkdiag(blocks):
        n = len(blocks)
        out = jnp.zeros((n * E, n * E), f32)
        for i, blk in enumerate(blocks):
            out = out.at[i * E:(i + 1) * E, i * E:(i + 1) * E].set(blk.astype(f32))
        return out

    return {
        "wq": blkdiag([params["q1_w"].T, params["q2_w"].T, params["q3_w"].T]),   # (3E, 3E)
        "bq": jnp.concatenate([params["q1_b"], params["q2_b"], params["q3_b"]])[None, :],
        "wkv": blkdiag([params["k_w"].T, params["v_w"].T]),                      # (2E, 2E)
        "bkv": jnp.concatenate([params["k_b"], params["v_b"]])[None, :],
        "wo": params["out_w"].T.astype(f32),                                     # (E, E)
        "bo": params["out_b"][None, :].astype(f32),                              # (1, E)
    }


def _default_batch_blocks(B):
    # v7x has 2 TensorCores per chip -> keep a 2-way "parallel" grid over batch halves there.
    # Single-core v5e/v6e -> a single fat step avoids the per-step overhead entirely.
    try:
        kind = jax.devices()[0].device_kind.lower()
        two_tc = ("v7" in kind) or ("7x" in kind)
    except Exception:
        two_tc = False
    return 2 if (two_tc and B % 2 == 0) else 1


# ----------------------------- Full forward -----------------------------
def simple_mha_forward(prepared, query1, query2, query3, key, value, num_heads, temperature,
                       attn_mask=None, batch_blocks=None):
    # TODO(synk): attn_mask-add not wired into the fused kernel.
    assert attn_mask is None, "attn_mask is not supported by the fused Pallas kernel"
    B, T, E = query1.shape
    S = key.shape[1]
    assert E % num_heads == 0, "Embedding dimension must be divisible by number of heads."
    head_dim = E // num_heads

    if batch_blocks is None:
        batch_blocks = _default_batch_blocks(B)
    assert B % batch_blocks == 0
    Bc = B // batch_blocks

    # Per-call activation packing: 2 input refs instead of 5, row-folded to 2D views.
    q_cat = jnp.concatenate([query1, query2, query3], axis=-1).reshape(B * T, 3 * E)
    kv_cat = jnp.concatenate([key, value], axis=-1).reshape(B * S, 2 * E)

    out_cols = E + num_heads * S

    flops = int(2 * B * T * (3 * E) * (3 * E)          # fused q projections (block-diag)
                + 2 * B * S * (2 * E) * (2 * E)        # fused k/v projection
                + 2 * B * num_heads * 3 * T * S * head_dim   # score matmuls
                + 2 * B * num_heads * T * S * head_dim       # attn @ v
                + 2 * B * T * E * E)                   # out_proj
    transcendentals = int(3 * B * num_heads * T * S)
    bytes_accessed = int(4 * (B * T * 3 * E + B * S * 2 * E          # activations in
                              + 9 * E * E + 4 * E * E + E * E + 6 * E  # weights + biases
                              + B * T * out_cols))                   # merged output slab

    kern = _make_fused_mha_kernel(Bc, num_heads, head_dim, T, S, E, temperature)

    def run(single_buffer_weights):
        def const_spec(shape):
            idx = lambda n: (0,) * len(shape)
            if single_buffer_weights:
                # weights/biases never change across grid steps -> one VMEM buffer is enough
                return pl.BlockSpec(shape, idx, pipeline_mode=pl.Buffered(1))
            return pl.BlockSpec(shape, idx)

        in_specs = [
            pl.BlockSpec((Bc * T, 3 * E), lambda n: (n, 0)),
            pl.BlockSpec((Bc * S, 2 * E), lambda n: (n, 0)),
            const_spec((3 * E, 3 * E)),
            const_spec((1, 3 * E)),
            const_spec((2 * E, 2 * E)),
            const_spec((1, 2 * E)),
            const_spec((E, E)),
            const_spec((1, E)),
        ]
        out_spec = pl.BlockSpec((Bc * T, out_cols), lambda n: (n, 0))

        # TODO(synk): at real CLIP shapes (E=512/768, T/S~200) re-derive the VMEM budget for
        # v7x's 64 MiB and set vmem_limit_bytes explicitly.
        slab = pl.pallas_call(
            kern,
            out_shape=jax.ShapeDtypeStruct((B * T, out_cols), jnp.float32),
            grid=(batch_blocks,),
            in_specs=in_specs,
            out_specs=out_spec,
            compiler_params=pltpu.CompilerParams(dimension_semantics=("parallel",)),
            cost_estimate=pl.CostEstimate(flops=flops, transcendentals=transcendentals,
                                          bytes_accessed=bytes_accessed),
        )(q_cat, kv_cat, prepared["wq"], prepared["bq"], prepared["wkv"], prepared["bkv"],
          prepared["wo"], prepared["bo"])
        return jax.block_until_ready(slab)

    try:
        slab = run(single_buffer_weights=True)
    except Exception:
        # Fallback if this JAX build rejects pipeline_mode=pl.Buffered(1).
        slab = run(single_buffer_weights=False)

    out = slab[:, :E].reshape(B, T, E).astype(query1.dtype)
    attn_w1 = slab[:, E:].reshape(B, T, num_heads, S).transpose(0, 2, 1, 3)
    return out, attn_w1


# ----------------------------- Pure-JAX reference (for correctness check) ----------------------
def reference_forward(params, query1, query2, query3, key, value, num_heads, temperature):
    def lin(x, w, b):
        return x @ w.T + b

    B, T, E = query1.shape
    S = key.shape[1]
    hd = E // num_heads

    def heads(x):
        return x.reshape(B, x.shape[1], num_heads, hd).transpose(0, 2, 1, 3)

    q1 = heads(lin(query1, params["q1_w"], params["q1_b"]))
    q2 = heads(lin(query2, params["q2_w"], params["q2_b"]))
    q3 = heads(lin(query3, params["q3_w"], params["q3_b"]))
    k = heads(lin(key, params["k_w"], params["k_b"]))
    v = heads(lin(value, params["v_w"], params["v_b"]))

    def attn_w(q):
        s = jnp.einsum("bhtd,bhsd->bhts", q, k) / math.sqrt(hd)
        flat = jax.nn.softmax(s.reshape(B, num_heads, -1) / temperature, axis=-1)
        return flat.reshape(B, num_heads, T, S) * T

    w1, w2, w3 = attn_w(q1), attn_w(q2), attn_w(q3)
    out = jnp.einsum("bhts,bhsd->bhtd", (w1 + w2 + w3) / 3.0, v)
    out = out.transpose(0, 2, 1, 3).reshape(B, T, E)
    out = lin(out, params["out_w"], params["out_b"])
    return out, w1


# ----------------------------- Parameter init -----------------------------
def init_params(rng, embed_dim, zero_out_proj=True):
    ks = jax.random.split(rng, 12)
    bound = 1.0 / math.sqrt(embed_dim)

    def w(k):
        return jax.random.uniform(k, (embed_dim, embed_dim), jnp.float32, -bound, bound)

    def b(k):
        return jax.random.uniform(k, (embed_dim,), jnp.float32, -bound, bound)

    params = {
        "q1_w": w(ks[0]), "q1_b": b(ks[1]),
        "q2_w": w(ks[2]), "q2_b": b(ks[3]),
        "q3_w": w(ks[4]), "q3_b": b(ks[5]),
        "k_w": w(ks[6]), "k_b": b(ks[7]),
        "v_w": w(ks[8]), "v_b": b(ks[9]),
    }
    if zero_out_proj:
        # Faithful to nn.init.constant_(out_proj.{weight,bias}, 0.0)
        params["out_w"] = jnp.zeros((embed_dim, embed_dim), jnp.float32)
        params["out_b"] = jnp.zeros((embed_dim,), jnp.float32)
    else:
        params["out_w"] = w(ks[10])
        params["out_b"] = b(ks[11])
    return params


if __name__ == "__main__":
    B, T, S, E, H = 2, 8, 8, 32, 4
    temperature = 2.0

    root = jax.random.PRNGKey(0)
    kp, k1, k2, k3, k4, k5 = jax.random.split(root, 6)

    query1 = jax.random.normal(k1, (B, T, E), jnp.float32)
    query2 = jax.random.normal(k2, (B, T, E), jnp.float32)
    query3 = jax.random.normal(k3, (B, T, E), jnp.float32)
    key = jax.random.normal(k4, (B, S, E), jnp.float32)
    value = jax.random.normal(k5, (B, S, E), jnp.float32)

    # 1) Faithful init (out_proj zero-initialized, as in the module), default grid config.
    params = init_params(kp, E, zero_out_proj=True)
    prepared = prepare_mha_params(params)
    out, w1 = simple_mha_forward(prepared, query1, query2, query3, key, value, H, temperature)
    out = jax.block_until_ready(out)
    w1 = jax.block_until_ready(w1)
    ref_out, ref_w1 = reference_forward(params, query1, query2, query3, key, value, H, temperature)
    np.testing.assert_allclose(np.asarray(out), np.asarray(ref_out), atol=1e-5, rtol=1e-5)
    np.testing.assert_allclose(np.asarray(w1), np.asarray(ref_w1), atol=1e-5, rtol=1e-5)

    # 2) Non-zero out_proj, exercising BOTH grid configurations:
    #    batch_blocks=1 (single fat step, v5e/v6e) and batch_blocks=2 (2-way parallel, v7x).
    params_rnd = init_params(kp, E, zero_out_proj=False)
    prepared_rnd = prepare_mha_params(params_rnd)
    ref_out2, ref_w12 = reference_forward(params_rnd, query1, query2, query3, key, value, H,
                                          temperature)
    for blocks in (1, 2):
        out2, w12 = simple_mha_forward(prepared_rnd, query1, query2, query3, key, value, H,
                                       temperature, batch_blocks=blocks)
        out2 = jax.block_until_ready(out2)
        w12 = jax.block_until_ready(w12)
        np.testing.assert_allclose(np.asarray(out2), np.asarray(ref_out2), atol=1e-5, rtol=1e-5)
        np.testing.assert_allclose(np.asarray(w12), np.asarray(ref_w12), atol=1e-5, rtol=1e-5)

    print("KERNEL_OK")
</pallas_src>

<mosaic_0001>
module attributes {stable_mosaic.version = 11 : i64} {
  func.func @kernel(%arg0: i32, %arg1: memref<16x96xf32, #tpu.memory_space<vmem>>, %arg2: memref<16x64xf32, #tpu.memory_space<vmem>>, %arg3: memref<96x96xf32, #tpu.memory_space<vmem>>, %arg4: memref<1x96xf32, #tpu.memory_space<vmem>>, %arg5: memref<64x64xf32, #tpu.memory_space<vmem>>, %arg6: memref<1x64xf32, #tpu.memory_space<vmem>>, %arg7: memref<32x32xf32, #tpu.memory_space<vmem>>, %arg8: memref<1x32xf32, #tpu.memory_space<vmem>>, %arg9: memref<16x64xf32, #tpu.memory_space<vmem>>) attributes {dimension_semantics = [#tpu.dimension_semantics<parallel>], iteration_bounds = array<i64: 1>, scalar_prefetch = 0 : i64, scratch_operands = 0 : i64, tpu.core_type = #tpu.core_type<tc>, window_params = [{transform_indices = @transform_0, window_bounds = array<i64: 16, 96>}, {transform_indices = @transform_1, window_bounds = array<i64: 16, 64>}, {pipeline_mode = #tpu.pipeline_mode<synchronous>, transform_indices = @transform_2, window_bounds = array<i64: 96, 96>}, {pipeline_mode = #tpu.pipeline_mode<synchronous>, transform_indices = @transform_3, window_bounds = array<i64: 1, 96>}, {pipeline_mode = #tpu.pipeline_mode<synchronous>, transform_indices = @transform_4, window_bounds = array<i64: 64, 64>}, {pipeline_mode = #tpu.pipeline_mode<synchronous>, transform_indices = @transform_5, window_bounds = array<i64: 1, 64>}, {pipeline_mode = #tpu.pipeline_mode<synchronous>, transform_indices = @transform_6, window_bounds = array<i64: 32, 32>}, {pipeline_mode = #tpu.pipeline_mode<synchronous>, transform_indices = @transform_7, window_bounds = array<i64: 1, 32>}, {transform_indices = @transform_8, window_bounds = array<i64: 16, 64>}]} {
    %c0 = arith.constant 0 : index
    %c0_0 = arith.constant 0 : index
    %0 = vector.load %arg1[%c0, %c0_0] : memref<16x96xf32, #tpu.memory_space<vmem>>, vector<16x96xf32>
    %c0_1 = arith.constant 0 : index
    %c0_2 = arith.constant 0 : index
    %1 = vector.load %arg3[%c0_1, %c0_2] : memref<96x96xf32, #tpu.memory_space<vmem>>, vector<96x96xf32>
    %cst = arith.constant dense<0.000000e+00> : vector<16x96xf32>
    %2 = tpu.matmul %0, %1, %cst {dimension_numbers = #tpu.dot_dimension_numbers<[1], [0], [0], [1], [0, 0, 1, 1], [], []>} : vector<16x96xf32>, vector<96x96xf32>, vector<16x96xf32> -> vector<16x96xf32>
    %c0_3 = arith.constant 0 : index
    %c0_4 = arith.constant 0 : index
    %3 = vector.load %arg4[%c0_3, %c0_4] : memref<1x96xf32, #tpu.memory_space<vmem>>, vector<1x96xf32>
    %4 = vector.broadcast %3 : vector<1x96xf32> to vector<16x96xf32>
    %5 = arith.addf %2, %4 : vector<16x96xf32>
    %c0_5 = arith.constant 0 : index
    %c0_6 = arith.constant 0 : index
    %6 = vector.load %arg2[%c0_5, %c0_6] : memref<16x64xf32, #tpu.memory_space<vmem>>, vector<16x64xf32>
    %c0_7 = arith.constant 0 : index
    %c0_8 = arith.constant 0 : index
    %7 = vector.load %arg5[%c0_7, %c0_8] : memref<64x64xf32, #tpu.memory_space<vmem>>, vector<64x64xf32>
    %cst_9 = arith.constant dense<0.000000e+00> : vector<16x64xf32>
    %8 = tpu.matmul %6, %7, %cst_9 {dimension_numbers = #tpu.dot_dimension_numbers<[1], [0], [0], [1], [0, 0, 1, 1], [], []>} : vector<16x64xf32>, vector<64x64xf32>, vector<16x64xf32> -> vector<16x64xf32>
    %c0_10 = arith.constant 0 : index
    %c0_11 = arith.constant 0 : index
    %9 = vector.load %arg6[%c0_10, %c0_11] : memref<1x64xf32, #tpu.memory_space<vmem>>, vector<1x64xf32>
    %10 = vector.broadcast %9 : vector<1x64xf32> to vector<16x64xf32>
    %11 = arith.addf %8, %10 : vector<16x64xf32>
    %12 = vector.extract_strided_slice %5 {offsets = [0, 0], sizes = [8, 96], strides = [1, 1]} : vector<16x96xf32> to vector<8x96xf32>
    %13 = vector.extract_strided_slice %11 {offsets = [0, 0], sizes = [8, 64], strides = [1, 1]} : vector<16x64xf32> to vector<8x64xf32>
    %14 = vector.extract_strided_slice %12 {offsets = [0, 0], sizes = [8, 8], strides = [1, 1]} : vector<8x96xf32> to vector<8x8xf32>
    %15 = vector.extract_strided_slice %12 {offsets = [0, 32], sizes = [8, 8], strides = [1, 1]} : vector<8x96xf32> to vector<8x8xf32>
    %16 = vector.extract_strided_slice %12 {offsets = [0, 64], sizes = [8, 8], strides = [1, 1]} : vector<8x96xf32> to vector<8x8xf32>
    %17 = tpu.concatenate %14, %15, %16 in 0 : vector<8x8xf32>, vector<8x8xf32>, vector<8x8xf32> -> vector<24x8xf32>
    %18 = vector.extract_strided_slice %13 {offsets = [0, 0], sizes = [8, 8], strides = [1, 1]} : vector<8x64xf32> to vector<8x8xf32>
    %19 = vector.extract_strided_slice %13 {offsets = [0, 32], sizes = [8, 8], strides = [1, 1]} : vector<8x64xf32> to vector<8x8xf32>
    %20 = vector.extract_strided_slice %12 {offsets = [0, 8], sizes = [8, 8], strides = [1, 1]} : vector<8x96xf32> to vector<8x8xf32>
    %21 = vector.extract_strided_slice %12 {offsets = [0, 40], sizes = [8, 8], strides = [1, 1]} : vector<8x96xf32> to vector<8x8xf32>
    %22 = vector.extract_strided_slice %12 {offsets = [0, 72], sizes = [8, 8], strides = [1, 1]} : vector<8x96xf32> to vector<8x8xf32>
    %23 = tpu.concatenate %20, %21, %22 in 0 : vector<8x8xf32>, vector<8x8xf32>, vector<8x8xf32> -> vector<24x8xf32>
    %24 = vector.extract_strided_slice %13 {offsets = [0, 8], sizes = [8, 8], strides = [1, 1]} : vector<8x64xf32> to vector<8x8xf32>
    %25 = vector.extract_strided_slice %13 {offsets = [0, 40], sizes = [8, 8], strides = [1, 1]} : vector<8x64xf32> to vector<8x8xf32>
    %26 = vector.extract_strided_slice %12 {offsets = [0, 16], sizes = [8, 8], strides = [1, 1]} : vector<8x96xf32> to vector<8x8xf32>
    %27 = vector.extract_strided_slice %12 {offsets = [0, 48], sizes = [8, 8], strides = [1, 1]} : vector<8x96xf32> to vector<8x8xf32>
    %28 = vector.extract_strided_slice %12 {offsets = [0, 80], sizes = [8, 8], strides = [1, 1]} : vector<8x96xf32> to vector<8x8xf32>
    %29 = tpu.concatenate %26, %27, %28 in 0 : vector<8x8xf32>, vector<8x8xf32>, vector<8x8xf32> -> vector<24x8xf32>
    %30 = vector.extract_strided_slice %13 {offsets = [0, 16], sizes = [8, 8], strides = [1, 1]} : vector<8x64xf32> to vector<8x8xf32>
    %31 = vector.extract_strided_slice %13 {offsets = [0, 48], sizes = [8, 8], strides = [1, 1]} : vector<8x64xf32> to vector<8x8xf32>
    %32 = vector.extract_strided_slice %12 {offsets = [0, 24], sizes = [8, 8], strides = [1, 1]} : vector<8x96xf32> to vector<8x8xf32>
    %33 = vector.extract_strided_slice %12 {offsets = [0, 56], sizes = [8, 8], strides = [1, 1]} : vector<8x96xf32> to vector<8x8xf32>
    %34 = vector.extract_strided_slice %12 {offsets = [0, 88], sizes = [8, 8], strides = [1, 1]} : vector<8x96xf32> to vector<8x8xf32>
    %35 = tpu.concatenate %32, %33, %34 in 0 : vector<8x8xf32>, vector<8x8xf32>, vector<8x8xf32> -> vector<24x8xf32>
    %36 = vector.extract_strided_slice %13 {offsets = [0, 24], sizes = [8, 8], strides = [1, 1]} : vector<8x64xf32> to vector<8x8xf32>
    %37 = vector.extract_strided_slice %13 {offsets = [0, 56], sizes = [8, 8], strides = [1, 1]} : vector<8x64xf32> to vector<8x8xf32>
    %38 = vector.extract_strided_slice %5 {offsets = [8, 0], sizes = [8, 96], strides = [1, 1]} : vector<16x96xf32> to vector<8x96xf32>
    %39 = vector.extract_strided_slice %11 {offsets = [8, 0], sizes = [8, 64], strides = [1, 1]} : vector<16x64xf32> to vector<8x64xf32>
    %40 = vector.extract_strided_slice %38 {offsets = [0, 0], sizes = [8, 8], strides = [1, 1]} : vector<8x96xf32> to vector<8x8xf32>
    %41 = vector.extract_strided_slice %38 {offsets = [0, 32], sizes = [8, 8], strides = [1, 1]} : vector<8x96xf32> to vector<8x8xf32>
    %42 = vector.extract_strided_slice %38 {offsets = [0, 64], sizes = [8, 8], strides = [1, 1]} : vector<8x96xf32> to vector<8x8xf32>
    %43 = tpu.concatenate %40, %41, %42 in 0 : vector<8x8xf32>, vector<8x8xf32>, vector<8x8xf32> -> vector<24x8xf32>
    %44 = vector.extract_strided_slice %39 {offsets = [0, 0], sizes = [8, 8], strides = [1, 1]} : vector<8x64xf32> to vector<8x8xf32>
    %45 = vector.extract_strided_slice %39 {offsets = [0, 32], sizes = [8, 8], strides = [1, 1]} : vector<8x64xf32> to vector<8x8xf32>
    %46 = vector.extract_strided_slice %38 {offsets = [0, 8], sizes = [8, 8], strides = [1, 1]} : vector<8x96xf32> to vector<8x8xf32>
    %47 = vector.extract_strided_slice %38 {offsets = [0, 40], sizes = [8, 8], strides = [1, 1]} : vector<8x96xf32> to vector<8x8xf32>
    %48 = vector.extract_strided_slice %38 {offsets = [0, 72], sizes = [8, 8], strides = [1, 1]} : vector<8x96xf32> to vector<8x8xf32>
    %49 = tpu.concatenate %46, %47, %48 in 0 : vector<8x8xf32>, vector<8x8xf32>, vector<8x8xf32> -> vector<24x8xf32>
    %50 = vector.extract_strided_slice %39 {offsets = [0, 8], sizes = [8, 8], strides = [1, 1]} : vector<8x64xf32> to vector<8x8xf32>
    %51 = vector.extract_strided_slice %39 {offsets = [0, 40], sizes = [8, 8], strides = [1, 1]} : vector<8x64xf32> to vector<8x8xf32>
    %52 = vector.extract_strided_slice %38 {offsets = [0, 16], sizes = [8, 8], strides = [1, 1]} : vector<8x96xf32> to vector<8x8xf32>
    %53 = vector.extract_strided_slice %38 {offsets = [0, 48], sizes = [8, 8], strides = [1, 1]} : vector<8x96xf32> to vector<8x8xf32>
    %54 = vector.extract_strided_slice %38 {offsets = [0, 80], sizes = [8, 8], strides = [1, 1]} : vector<8x96xf32> to vector<8x8xf32>
    %55 = tpu.concatenate %52, %53, %54 in 0 : vector<8x8xf32>, vector<8x8xf32>, vector<8x8xf32> -> vector<24x8xf32>
    %56 = vector.extract_strided_slice %39 {offsets = [0, 16], sizes = [8, 8], strides = [1, 1]} : vector<8x64xf32> to vector<8x8xf32>
    %57 = vector.extract_strided_slice %39 {offsets = [0, 48], sizes = [8, 8], strides = [1, 1]} : vector<8x64xf32> to vector<8x8xf32>
    %58 = vector.extract_strided_slice %38 {offsets = [0, 24], sizes = [8, 8], strides = [1, 1]} : vector<8x96xf32> to vector<8x8xf32>
    %59 = vector.extract_strided_slice %38 {offsets = [0, 56], sizes = [8, 8], strides = [1, 1]} : vector<8x96xf32> to vector<8x8xf32>
    %60 = vector.extract_strided_slice %38 {offsets = [0, 88], sizes = [8, 8], strides = [1, 1]} : vector<8x96xf32> to vector<8x8xf32>
    %61 = tpu.concatenate %58, %59, %60 in 0 : vector<8x8xf32>, vector<8x8xf32>, vector<8x8xf32> -> vector<24x8xf32>
    %62 = vector.extract_strided_slice %39 {offsets = [0, 24], sizes = [8, 8], strides = [1, 1]} : vector<8x64xf32> to vector<8x8xf32>
    %63 = vector.extract_strided_slice %39 {offsets = [0, 56], sizes = [8, 8], strides = [1, 1]} : vector<8x64xf32> to vector<8x8xf32>
    %64 = vector.shape_cast %17 : vector<24x8xf32> to vector<1x24x8xf32>
    %65 = vector.shape_cast %23 : vector<24x8xf32> to vector<1x24x8xf32>
    %66 = vector.shape_cast %29 : vector<24x8xf32> to vector<1x24x8xf32>
    %67 = vector.shape_cast %35 : vector<24x8xf32> to vector<1x24x8xf32>
    %68 = vector.shape_cast %43 : vector<24x8xf32> to vector<1x24x8xf32>
    %69 = vector.shape_cast %49 : vector<24x8xf32> to vector<1x24x8xf32>
    %70 = vector.shape_cast %55 : vector<24x8xf32> to vector<1x24x8xf32>
    %71 = vector.shape_cast %61 : vector<24x8xf32> to vector<1x24x8xf32>
    %72 = tpu.concatenate %64, %65, %66, %67, %68, %69, %70, %71 in 0 : vector<1x24x8xf32>, vector<1x24x8xf32>, vector<1x24x8xf32>, vector<1x24x8xf32>, vector<1x24x8xf32>, vector<1x24x8xf32>, vector<1x24x8xf32>, vector<1x24x8xf32> -> vector<8x24x8xf32>
    %73 = vector.shape_cast %18 : vector<8x8xf32> to vector<1x8x8xf32>
    %74 = vector.shape_cast %24 : vector<8x8xf32> to vector<1x8x8xf32>
    %75 = vector.shape_cast %30 : vector<8x8xf32> to vector<1x8x8xf32>
    %76 = vector.shape_cast %36 : vector<8x8xf32> to vector<1x8x8xf32>
    %77 = vector.shape_cast %44 : vector<8x8xf32> to vector<1x8x8xf32>
    %78 = vector.shape_cast %50 : vector<8x8xf32> to vector<1x8x8xf32>
    %79 = vector.shape_cast %56 : vector<8x8xf32> to vector<1x8x8xf32>
    %80 = vector.shape_cast %62 : vector<8x8xf32> to vector<1x8x8xf32>
    %81 = tpu.concatenate %73, %74, %75, %76, %77, %78, %79, %80 in 0 : vector<1x8x8xf32>, vector<1x8x8xf32>, vector<1x8x8xf32>, vector<1x8x8xf32>, vector<1x8x8xf32>, vector<1x8x8xf32>, vector<1x8x8xf32>, vector<1x8x8xf32> -> vector<8x8x8xf32>
    %82 = vector.shape_cast %19 : vector<8x8xf32> to vector<1x8x8xf32>
    %83 = vector.shape_cast %25 : vector<8x8xf32> to vector<1x8x8xf32>
    %84 = vector.shape_cast %31 : vector<8x8xf32> to vector<1x8x8xf32>
    %85 = vector.shape_cast %37 : vector<8x8xf32> to vector<1x8x8xf32>
    %86 = vector.shape_cast %45 : vector<8x8xf32> to vector<1x8x8xf32>
    %87 = vector.shape_cast %51 : vector<8x8xf32> to vector<1x8x8xf32>
    %88 = vector.shape_cast %57 : vector<8x8xf32> to vector<1x8x8xf32>
    %89 = vector.shape_cast %63 : vector<8x8xf32> to vector<1x8x8xf32>
    %90 = tpu.concatenate %82, %83, %84, %85, %86, %87, %88, %89 in 0 : vector<1x8x8xf32>, vector<1x8x8xf32>, vector<1x8x8xf32>, vector<1x8x8xf32>, vector<1x8x8xf32>, vector<1x8x8xf32>, vector<1x8x8xf32>, vector<1x8x8xf32> -> vector<8x8x8xf32>
    "tpu.trace_start"() <{level = 10 : i32, message = "gtd,gsd->gts"}> : () -> ()
    %cst_12 = arith.constant dense<0.000000e+00> : vector<8x24x8xf32>
    %91 = tpu.matmul %72, %81, %cst_12 {dimension_numbers = #tpu.dot_dimension_numbers<[2], [2], [1], [1], [0, 0, 0, 1, 1, 1], [0], [0]>} : vector<8x24x8xf32>, vector<8x8x8xf32>, vector<8x24x8xf32> -> vector<8x24x8xf32>
    "tpu.trace_stop"() : () -> ()
    %cst_13 = arith.constant 0.176776692 : f32
    %92 = vector.broadcast %cst_13 : f32 to vector<8x24x8xf32>
    %93 = arith.mulf %91, %92 : vector<8x24x8xf32>
    %94 = vector.extract_strided_slice %93 {offsets = [0, 0, 0], sizes = [8, 8, 8], strides = [1, 1, 1]} : vector<8x24x8xf32> to vector<8x8x8xf32>
    %95 = vector.extract_strided_slice %93 {offsets = [0, 8, 0], sizes = [8, 8, 8], strides = [1, 1, 1]} : vector<8x24x8xf32> to vector<8x8x8xf32>
    %96 = vector.extract_strided_slice %93 {offsets = [0, 16, 0], sizes = [8, 8, 8], strides = [1, 1, 1]} : vector<8x24x8xf32> to vector<8x8x8xf32>
    %97 = tpu.concatenate %94, %95, %96 in 0 : vector<8x8x8xf32>, vector<8x8x8xf32>, vector<8x8x8xf32> -> vector<24x8x8xf32>
    %cst_14 = arith.constant dense<0xFF800000> : vector<24x8xf32>
    %98 = vector.multi_reduction <maximumf>, %97, %cst_14 [2] : vector<24x8x8xf32> to vector<24x8xf32>
    %99 = vector.shape_cast %98 : vector<24x8xf32> to vector<24x8x1xf32>
    %cst_15 = arith.constant dense<0xFF800000> : vector<24x1xf32>
    %100 = vector.multi_reduction <maximumf>, %99, %cst_15 [1] : vector<24x8x1xf32> to vector<24x1xf32>
    %101 = vector.shape_cast %100 : vector<24x1xf32> to vector<24x1x1xf32>
    %102 = vector.broadcast %101 : vector<24x1x1xf32> to vector<24x8x8xf32>
    %103 = arith.subf %97, %102 : vector<24x8x8xf32>
    %104 = math.exp %103 : vector<24x8x8xf32>
    %cst_16 = arith.constant dense<0.000000e+00> : vector<24x8xf32>
    %105 = vector.multi_reduction <add>, %104, %cst_16 [2] : vector<24x8x8xf32> to vector<24x8xf32>
    %106 = vector.shape_cast %105 : vector<24x8xf32> to vector<24x8x1xf32>
    %cst_17 = arith.constant dense<0.000000e+00> : vector<24x1xf32>
    %107 = vector.multi_reduction <add>, %106, %cst_17 [1] : vector<24x8x1xf32> to vector<24x1xf32>
    %108 = vector.shape_cast %107 : vector<24x1xf32> to vector<24x1x1xf32>
    %cst_18 = arith.constant 8.000000e+00 : f32
    %109 = vector.broadcast %cst_18 : f32 to vector<24x1x1xf32>
    %110 = arith.divf %109, %108 : vector<24x1x1xf32>
    %111 = vector.broadcast %110 : vector<24x1x1xf32> to vector<24x8x8xf32>
    %112 = arith.mulf %104, %111 : vector<24x8x8xf32>
    %113 = vector.extract_strided_slice %112 {offsets = [0, 0, 0], sizes = [8, 8, 8], strides = [1, 1, 1]} : vector<24x8x8xf32> to vector<8x8x8xf32>
    %114 = vector.extract_strided_slice %112 {offsets = [8, 0, 0], sizes = [8, 8, 8], strides = [1, 1, 1]} : vector<24x8x8xf32> to vector<8x8x8xf32>
    %115 = arith.addf %113, %114 : vector<8x8x8xf32>
    %116 = vector.extract_strided_slice %112 {offsets = [16, 0, 0], sizes = [8, 8, 8], strides = [1, 1, 1]} : vector<24x8x8xf32> to vector<8x8x8xf32>
    %117 = arith.addf %115, %116 : vector<8x8x8xf32>
    %cst_19 = arith.constant 0.333333343 : f32
    %118 = vector.broadcast %cst_19 : f32 to vector<8x8x8xf32>
    %119 = arith.mulf %117, %118 : vector<8x8x8xf32>
    "tpu.trace_start"() <{level = 10 : i32, message = "gts,gsd->gtd"}> : () -> ()
    %cst_20 = arith.constant dense<0.000000e+00> : vector<8x8x8xf32>
    %120 = tpu.matmul %119, %90, %cst_20 {dimension_numbers = #tpu.dot_dimension_numbers<[2], [1], [1], [2], [0, 0, 0, 1, 1, 2], [0], [0]>} : vector<8x8x8xf32>, vector<8x8x8xf32>, vector<8x8x8xf32> -> vector<8x8x8xf32>
    "tpu.trace_stop"() : () -> ()
    %121 = vector.extract_strided_slice %120 {offsets = [0, 0, 0], sizes = [1, 8, 8], strides = [1, 1, 1]} : vector<8x8x8xf32> to vector<1x8x8xf32>
    %122 = vector.shape_cast %121 : vector<1x8x8xf32> to vector<8x8xf32>
    %123 = vector.extract_strided_slice %120 {offsets = [1, 0, 0], sizes = [1, 8, 8], strides = [1, 1, 1]} : vector<8x8x8xf32> to vector<1x8x8xf32>
    %124 = vector.shape_cast %123 : vector<1x8x8xf32> to vector<8x8xf32>
    %125 = vector.extract_strided_slice %120 {offsets = [2, 0, 0], sizes = [1, 8, 8], strides = [1, 1, 1]} : vector<8x8x8xf32> to vector<1x8x8xf32>
    %126 = vector.shape_cast %125 : vector<1x8x8xf32> to vector<8x8xf32>
    %127 = vector.extract_strided_slice %120 {offsets = [3, 0, 0], sizes = [1, 8, 8], strides = [1, 1, 1]} : vector<8x8x8xf32> to vector<1x8x8xf32>
    %128 = vector.shape_cast %127 : vector<1x8x8xf32> to vector<8x8xf32>
    %129 = tpu.concatenate %122, %124, %126, %128 in 1 : vector<8x8xf32>, vector<8x8xf32>, vector<8x8xf32>, vector<8x8xf32> -> vector<8x32xf32>
    %130 = vector.extract_strided_slice %113 {offsets = [0, 0, 0], sizes = [1, 8, 8], strides = [1, 1, 1]} : vector<8x8x8xf32> to vector<1x8x8xf32>
    %131 = vector.shape_cast %130 : vector<1x8x8xf32> to vector<8x8xf32>
    %132 = vector.extract_strided_slice %113 {offsets = [1, 0, 0], sizes = [1, 8, 8], strides = [1, 1, 1]} : vector<8x8x8xf32> to vector<1x8x8xf32>
    %133 = vector.shape_cast %132 : vector<1x8x8xf32> to vector<8x8xf32>
    %134 = vector.extract_strided_slice %113 {offsets = [2, 0, 0], sizes = [1, 8, 8], strides = [1, 1, 1]} : vector<8x8x8xf32> to vector<1x8x8xf32>
    %135 = vector.shape_cast %134 : vector<1x8x8xf32> to vector<8x8xf32>
    %136 = vector.extract_strided_slice %113 {offsets = [3, 0, 0], sizes = [1, 8, 8], strides = [1, 1, 1]} : vector<8x8x8xf32> to vector<1x8x8xf32>
    %137 = vector.shape_cast %136 : vector<1x8x8xf32> to vector<8x8xf32>
    %138 = tpu.concatenate %131, %133, %135, %137 in 1 : vector<8x8xf32>, vector<8x8xf32>, vector<8x8xf32>, vector<8x8xf32> -> vector<8x32xf32>
    %139 = vector.extract_strided_slice %120 {offsets = [4, 0, 0], sizes = [1, 8, 8], strides = [1, 1, 1]} : vector<8x8x8xf32> to vector<1x8x8xf32>
    %140 = vector.shape_cast %139 : vector<1x8x8xf32> to vector<8x8xf32>
    %141 = vector.extract_strided_slice %120 {offsets = [5, 0, 0], sizes = [1, 8, 8], strides = [1, 1, 1]} : vector<8x8x8xf32> to vector<1x8x8xf32>
    %142 = vector.shape_cast %141 : vector<1x8x8xf32> to vector<8x8xf32>
    %143 = vector.extract_strided_slice %120 {offsets = [6, 0, 0], sizes = [1, 8, 8], strides = [1, 1, 1]} : vector<8x8x8xf32> to vector<1x8x8xf32>
    %144 = vector.shape_cast %143 : vector<1x8x8xf32> to vector<8x8xf32>
    %145 = vector.extract_strided_slice %120 {offsets = [7, 0, 0], sizes = [1, 8, 8], strides = [1, 1, 1]} : vector<8x8x8xf32> to vector<1x8x8xf32>
    %146 = vector.shape_cast %145 : vector<1x8x8xf32> to vector<8x8xf32>
    %147 = tpu.concatenate %140, %142, %144, %146 in 1 : vector<8x8xf32>, vector<8x8xf32>, vector<8x8xf32>, vector<8x8xf32> -> vector<8x32xf32>
    %148 = vector.extract_strided_slice %113 {offsets = [4, 0, 0], sizes = [1, 8, 8], strides = [1, 1, 1]} : vector<8x8x8xf32> to vector<1x8x8xf32>
    %149 = vector.shape_cast %148 : vector<1x8x8xf32> to vector<8x8xf32>
    %150 = vector.extract_strided_slice %113 {offsets = [5, 0, 0], sizes = [1, 8, 8], strides = [1, 1, 1]} : vector<8x8x8xf32> to vector<1x8x8xf32>
    %151 = vector.shape_cast %150 : vector<1x8x8xf32> to vector<8x8xf32>
    %152 = vector.extract_strided_slice %113 {offsets = [6, 0, 0], sizes = [1, 8, 8], strides = [1, 1, 1]} : vector<8x8x8xf32> to vector<1x8x8xf32>
    %153 = vector.shape_cast %152 : vector<1x8x8xf32> to vector<8x8xf32>
    %154 = vector.extract_strided_slice %113 {offsets = [7, 0, 0], sizes = [1, 8, 8], strides = [1, 1, 1]} : vector<8x8x8xf32> to vector<1x8x8xf32>
    %155 = vector.shape_cast %154 : vector<1x8x8xf32> to vector<8x8xf32>
    %156 = tpu.concatenate %149, %151, %153, %155 in 1 : vector<8x8xf32>, vector<8x8xf32>, vector<8x8xf32>, vector<8x8xf32> -> vector<8x32xf32>
    %157 = tpu.concatenate %129, %147 in 0 : vector<8x32xf32>, vector<8x32xf32> -> vector<16x32xf32>
    %158 = tpu.concatenate %138, %156 in 0 : vector<8x32xf32>, vector<8x32xf32> -> vector<16x32xf32>
    %c0_21 = arith.constant 0 : index
    %c0_22 = arith.constant 0 : index
    %159 = vector.load %arg7[%c0_21, %c0_22] : memref<32x32xf32, #tpu.memory_space<vmem>>, vector<32x32xf32>
    %cst_23 = arith.constant dense<0.000000e+00> : vector<16x32xf32>
    %160 = tpu.matmul %157, %159, %cst_23 {dimension_numbers = #tpu.dot_dimension_numbers<[1], [0], [0], [1], [0, 0, 1, 1], [], []>} : vector<16x32xf32>, vector<32x32xf32>, vector<16x32xf32> -> vector<16x32xf32>
    %c0_24 = arith.constant 0 : index
    %c0_25 = arith.constant 0 : index
    %161 = vector.load %arg8[%c0_24, %c0_25] : memref<1x32xf32, #tpu.memory_space<vmem>>, vector<1x32xf32>
    %162 = vector.broadcast %161 : vector<1x32xf32> to vector<16x32xf32>
    %163 = arith.addf %160, %162 : vector<16x32xf32>
    %164 = tpu.concatenate %163, %158 in 1 : vector<16x32xf32>, vector<16x32xf32> -> vector<16x64xf32>
    %c0_26 = arith.constant 0 : index
    %c0_27 = arith.constant 0 : index
    %165 = vector.load %arg9[%c0_26, %c0_27] : memref<16x64xf32, #tpu.memory_space<vmem>>, vector<16x64xf32>
    tpu.vector_store %arg9[%c0_26, %c0_27], %164 {strides = array<i32>} : memref<16x64xf32, #tpu.memory_space<vmem>>, vector<16x64xf32>,
    return
  }
  func.func @transform_0(%arg0: i32) -> (i32, i32) {
    %c0_i32 = arith.constant 0 : i32
    %c0_i32_0 = arith.constant 0 : i32
    return %arg0, %c0_i32 : i32, i32
  }
  func.func @transform_1(%arg0: i32) -> (i32, i32) {
    %c0_i32 = arith.constant 0 : i32
    %c0_i32_0 = arith.constant 0 : i32
    return %arg0, %c0_i32 : i32, i32
  }
  func.func @transform_2(%arg0: i32) -> (i32, i32) {
    %c0_i32 = arith.constant 0 : i32
    %c0_i32_0 = arith.constant 0 : i32
    %c0_i32_1 = arith.constant 0 : i32
    return %c0_i32, %c0_i32_0 : i32, i32
  }
  func.func @transform_3(%arg0: i32) -> (i32, i32) {
    %c0_i32 = arith.constant 0 : i32
    %c0_i32_0 = arith.constant 0 : i32
    %c0_i32_1 = arith.constant 0 : i32
    return %c0_i32, %c0_i32_0 : i32, i32
  }
  func.func @transform_4(%arg0: i32) -> (i32, i32) {
    %c0_i32 = arith.constant 0 : i32
    %c0_i32_0 = arith.constant 0 : i32
    %c0_i32_1 = arith.constant 0 : i32
    return %c0_i32, %c0_i32_0 : i32, i32
  }
  func.func @transform_5(%arg0: i32) -> (i32, i32) {
    %c0_i32 = arith.constant 0 : i32
    %c0_i32_0 = arith.constant 0 : i32
    %c0_i32_1 = arith.constant 0 : i32
    return %c0_i32, %c0_i32_0 : i32, i32
  }
  func.func @transform_6(%arg0: i32) -> (i32, i32) {
    %c0_i32 = arith.constant 0 : i32
    %c0_i32_0 = arith.constant 0 : i32
    %c0_i32_1 = arith.constant 0 : i32
    return %c0_i32, %c0_i32_0 : i32, i32
  }
  func.func @transform_7(%arg0: i32) -> (i32, i32) {
    %c0_i32 = arith.constant 0 : i32
    %c0_i32_0 = arith.constant 0 : i32
    %c0_i32_1 = arith.constant 0 : i32
    return %c0_i32, %c0_i32_0 : i32, i32
  }
  func.func @transform_8(%arg0: i32) -> (i32, i32) {
    %c0_i32 = arith.constant 0 : i32
    %c0_i32_0 = arith.constant 0 : i32
    return %arg0, %c0_i32 : i32, i32
  }
}

module attributes {stable_mosaic.version = 11 : i64} {
  func.func @kernel(%arg0: i32, %arg1: memref<16x96xf32, #tpu.memory_space<vmem>>, %arg2: memref<16x64xf32, #tpu.memory_space<vmem>>, %arg3: memref<96x96xf32, #tpu.memory_space<vmem>>, %arg4: memref<1x96xf32, #tpu.memory_space<vmem>>, %arg5: memref<64x64xf32, #tpu.memory_space<vmem>>, %arg6: memref<1x64xf32, #tpu.memory_space<vmem>>, %arg7: memref<32x32xf32, #tpu.memory_space<vmem>>, %arg8: memref<1x32xf32, #tpu.memory_space<vmem>>, %arg9: memref<16x64xf32, #tpu.memory_space<vmem>>) attributes {dimension_semantics = [#tpu.dimension_semantics<parallel>], iteration_bounds = array<i64: 1>, scalar_prefetch = 0 : i64, scratch_operands = 0 : i64, tpu.core_type = #tpu.core_type<tc>, window_params = [{transform_indices = @transform_0, window_bounds = array<i64: 16, 96>}, {transform_indices = @transform_1, window_bounds = array<i64: 16, 64>}, {pipeline_mode = #tpu.pipeline_mode<synchronous>, transform_indices = @transform_2, window_bounds = array<i64: 96, 96>}, {pipeline_mode = #tpu.pipeline_mode<synchronous>, transform_indices = @transform_3, window_bounds = array<i64: 1, 96>}, {pipeline_mode = #tpu.pipeline_mode<synchronous>, transform_indices = @transform_4, window_bounds = array<i64: 64, 64>}, {pipeline_mode = #tpu.pipeline_mode<synchronous>, transform_indices = @transform_5, window_bounds = array<i64: 1, 64>}, {pipeline_mode = #tpu.pipeline_mode<synchronous>, transform_indices = @transform_6, window_bounds = array<i64: 32, 32>}, {pipeline_mode = #tpu.pipeline_mode<synchronous>, transform_indices = @transform_7, window_bounds = array<i64: 1, 32>}, {transform_indices = @transform_8, window_bounds = array<i64: 16, 64>}]} {
    %c0 = arith.constant 0 : index
    %c0_0 = arith.constant 0 : index
    %0 = vector.load %arg1[%c0, %c0_0] : memref<16x96xf32, #tpu.memory_space<vmem>>, vector<16x96xf32>
    %c0_1 = arith.constant 0 : index
    %c0_2 = arith.constant 0 : index
    %1 = vector.load %arg3[%c0_1, %c0_2] : memref<96x96xf32, #tpu.memory_space<vmem>>, vector<96x96xf32>
    %cst = arith.constant dense<0.000000e+00> : vector<16x96xf32>
    %2 = tpu.matmul %0, %1, %cst {dimension_numbers = #tpu.dot_dimension_numbers<[1], [0], [0], [1], [0, 0, 1, 1], [], []>} : vector<16x96xf32>, vector<96x96xf32>, vector<16x96xf32> -> vector<16x96xf32>
    %c0_3 = arith.constant 0 : index
    %c0_4 = arith.constant 0 : index
    %3 = vector.load %arg4[%c0_3, %c0_4] : memref<1x96xf32, #tpu.memory_space<vmem>>, vector<1x96xf32>
    %4 = vector.broadcast %3 : vector<1x96xf32> to vector<16x96xf32>
    %5 = arith.addf %2, %4 : vector<16x96xf32>
    %c0_5 = arith.constant 0 : index
    %c0_6 = arith.constant 0 : index
    %6 = vector.load %arg2[%c0_5, %c0_6] : memref<16x64xf32, #tpu.memory_space<vmem>>, vector<16x64xf32>
    %c0_7 = arith.constant 0 : index
    %c0_8 = arith.constant 0 : index
    %7 = vector.load %arg5[%c0_7, %c0_8] : memref<64x64xf32, #tpu.memory_space<vmem>>, vector<64x64xf32>
    %cst_9 = arith.constant dense<0.000000e+00> : vector<16x64xf32>
    %8 = tpu.matmul %6, %7, %cst_9 {dimension_numbers = #tpu.dot_dimension_numbers<[1], [0], [0], [1], [0, 0, 1, 1], [], []>} : vector<16x64xf32>, vector<64x64xf32>, vector<16x64xf32> -> vector<16x64xf32>
    %c0_10 = arith.constant 0 : index
    %c0_11 = arith.constant 0 : index
    %9 = vector.load %arg6[%c0_10, %c0_11] : memref<1x64xf32, #tpu.memory_space<vmem>>, vector<1x64xf32>
    %10 = vector.broadcast %9 : vector<1x64xf32> to vector<16x64xf32>
    %11 = arith.addf %8, %10 : vector<16x64xf32>
    %12 = vector.extract_strided_slice %5 {offsets = [0, 0], sizes = [8, 96], strides = [1, 1]} : vector<16x96xf32> to vector<8x96xf32>
    %13 = vector.extract_strided_slice %11 {offsets = [0, 0], sizes = [8, 64], strides = [1, 1]} : vector<16x64xf32> to vector<8x64xf32>
    %14 = vector.extract_strided_slice %12 {offsets = [0, 0], sizes = [8, 8], strides = [1, 1]} : vector<8x96xf32> to vector<8x8xf32>
    %15 = vector.extract_strided_slice %12 {offsets = [0, 32], sizes = [8, 8], strides = [1, 1]} : vector<8x96xf32> to vector<8x8xf32>
    %16 = vector.extract_strided_slice %12 {offsets = [0, 64], sizes = [8, 8], strides = [1, 1]} : vector<8x96xf32> to vector<8x8xf32>
    %17 = tpu.concatenate %14, %15, %16 in 0 : vector<8x8xf32>, vector<8x8xf32>, vector<8x8xf32> -> vector<24x8xf32>
    %18 = vector.extract_strided_slice %13 {offsets = [0, 0], sizes = [8, 8], strides = [1, 1]} : vector<8x64xf32> to vector<8x8xf32>
    %19 = vector.extract_strided_slice %13 {offsets = [0, 32], sizes = [8, 8], strides = [1, 1]} : vector<8x64xf32> to vector<8x8xf32>
    %20 = vector.extract_strided_slice %12 {offsets = [0, 8], sizes = [8, 8], strides = [1, 1]} : vector<8x96xf32> to vector<8x8xf32>
    %21 = vector.extract_strided_slice %12 {offsets = [0, 40], sizes = [8, 8], strides = [1, 1]} : vector<8x96xf32> to vector<8x8xf32>
    %22 = vector.extract_strided_slice %12 {offsets = [0, 72], sizes = [8, 8], strides = [1, 1]} : vector<8x96xf32> to vector<8x8xf32>
    %23 = tpu.concatenate %20, %21, %22 in 0 : vector<8x8xf32>, vector<8x8xf32>, vector<8x8xf32> -> vector<24x8xf32>
    %24 = vector.extract_strided_slice %13 {offsets = [0, 8], sizes = [8, 8], strides = [1, 1]} : vector<8x64xf32> to vector<8x8xf32>
    %25 = vector.extract_strided_slice %13 {offsets = [0, 40], sizes = [8, 8], strides = [1, 1]} : vector<8x64xf32> to vector<8x8xf32>
    %26 = vector.extract_strided_slice %12 {offsets = [0, 16], sizes = [8, 8], strides = [1, 1]} : vector<8x96xf32> to vector<8x8xf32>
    %27 = vector.extract_strided_slice %12 {offsets = [0, 48], sizes = [8, 8], strides = [1, 1]} : vector<8x96xf32> to vector<8x8xf32>
    %28 = vector.extract_strided_slice %12 {offsets = [0, 80], sizes = [8, 8], strides = [1, 1]} : vector<8x96xf32> to vector<8x8xf32>
    %29 = tpu.concatenate %26, %27, %28 in 0 : vector<8x8xf32>, vector<8x8xf32>, vector<8x8xf32> -> vector<24x8xf32>
    %30 = vector.extract_strided_slice %13 {offsets = [0, 16], sizes = [8, 8], strides = [1, 1]} : vector<8x64xf32> to vector<8x8xf32>
    %31 = vector.extract_strided_slice %13 {offsets = [0, 48], sizes = [8, 8], strides = [1, 1]} : vector<8x64xf32> to vector<8x8xf32>
    %32 = vector.extract_strided_slice %12 {offsets = [0, 24], sizes = [8, 8], strides = [1, 1]} : vector<8x96xf32> to vector<8x8xf32>
    %33 = vector.extract_strided_slice %12 {offsets = [0, 56], sizes = [8, 8], strides = [1, 1]} : vector<8x96xf32> to vector<8x8xf32>
    %34 = vector.extract_strided_slice %12 {offsets = [0, 88], sizes = [8, 8], strides = [1, 1]} : vector<8x96xf32> to vector<8x8xf32>
    %35 = tpu.concatenate %32, %33, %34 in 0 : vector<8x8xf32>, vector<8x8xf32>, vector<8x8xf32> -> vector<24x8xf32>
    %36 = vector.extract_strided_slice %13 {offsets = [0, 24], sizes = [8, 8], strides = [1, 1]} : vector<8x64xf32> to vector<8x8xf32>
    %37 = vector.extract_strided_slice %13 {offsets = [0, 56], sizes = [8, 8], strides = [1, 1]} : vector<8x64xf32> to vector<8x8xf32>
    %38 = vector.extract_strided_slice %5 {offsets = [8, 0], sizes = [8, 96], strides = [1, 1]} : vector<16x96xf32> to vector<8x96xf32>
    %39 = vector.extract_strided_slice %11 {offsets = [8, 0], sizes = [8, 64], strides = [1, 1]} : vector<16x64xf32> to vector<8x64xf32>
    %40 = vector.extract_strided_slice %38 {offsets = [0, 0], sizes = [8, 8], strides = [1, 1]} : vector<8x96xf32> to vector<8x8xf32>
    %41 = vector.extract_strided_slice %38 {offsets = [0, 32], sizes = [8, 8], strides = [1, 1]} : vector<8x96xf32> to vector<8x8xf32>
    %42 = vector.extract_strided_slice %38 {offsets = [0, 64], sizes = [8, 8], strides = [1, 1]} : vector<8x96xf32> to vector<8x8xf32>
    %43 = tpu.concatenate %40, %41, %42 in 0 : vector<8x8xf32>, vector<8x8xf32>, vector<8x8xf32> -> vector<24x8xf32>
    %44 = vector.extract_strided_slice %39 {offsets = [0, 0], sizes = [8, 8], strides = [1, 1]} : vector<8x64xf32> to vector<8x8xf32>
    %45 = vector.extract_strided_slice %39 {offsets = [0, 32], sizes = [8, 8], strides = [1, 1]} : vector<8x64xf32> to vector<8x8xf32>
    %46 = vector.extract_strided_slice %38 {offsets = [0, 8], sizes = [8, 8], strides = [1, 1]} : vector<8x96xf32> to vector<8x8xf32>
    %47 = vector.extract_strided_slice %38 {offsets = [0, 40], sizes = [8, 8], strides = [1, 1]} : vector<8x96xf32> to vector<8x8xf32>
    %48 = vector.extract_strided_slice %38 {offsets = [0, 72], sizes = [8, 8], strides = [1, 1]} : vector<8x96xf32> to vector<8x8xf32>
    %49 = tpu.concatenate %46, %47, %48 in 0 : vector<8x8xf32>, vector<8x8xf32>, vector<8x8xf32> -> vector<24x8xf32>
    %50 = vector.extract_strided_slice %39 {offsets = [0, 8], sizes = [8, 8], strides = [1, 1]} : vector<8x64xf32> to vector<8x8xf32>
    %51 = vector.extract_strided_slice %39 {offsets = [0, 40], sizes = [8, 8], strides = [1, 1]} : vector<8x64xf32> to vector<8x8xf32>
    %52 = vector.extract_strided_slice %38 {offsets = [0, 16], sizes = [8, 8], strides = [1, 1]} : vector<8x96xf32> to vector<8x8xf32>
    %53 = vector.extract_strided_slice %38 {offsets = [0, 48], sizes = [8, 8], strides = [1, 1]} : vector<8x96xf32> to vector<8x8xf32>
    %54 = vector.extract_strided_slice %38 {offsets = [0, 80], sizes = [8, 8], strides = [1, 1]} : vector<8x96xf32> to vector<8x8xf32>
    %55 = tpu.concatenate %52, %53, %54 in 0 : vector<8x8xf32>, vector<8x8xf32>, vector<8x8xf32> -> vector<24x8xf32>
    %56 = vector.extract_strided_slice %39 {offsets = [0, 16], sizes = [8, 8], strides = [1, 1]} : vector<8x64xf32> to vector<8x8xf32>
    %57 = vector.extract_strided_slice %39 {offsets = [0, 48], sizes = [8, 8], strides = [1, 1]} : vector<8x64xf32> to vector<8x8xf32>
    %58 = vector.extract_strided_slice %38 {offsets = [0, 24], sizes = [8, 8], strides = [1, 1]} : vector<8x96xf32> to vector<8x8xf32>
    %59 = vector.extract_strided_slice %38 {offsets = [0, 56], sizes = [8, 8], strides = [1, 1]} : vector<8x96xf32> to vector<8x8xf32>
    %60 = vector.extract_strided_slice %38 {offsets = [0, 88], sizes = [8, 8], strides = [1, 1]} : vector<8x96xf32> to vector<8x8xf32>
    %61 = tpu.concatenate %58, %59, %60 in 0 : vector<8x8xf32>, vector<8x8xf32>, vector<8x8xf32> -> vector<24x8xf32>
    %62 = vector.extract_strided_slice %39 {offsets = [0, 24], sizes = [8, 8], strides = [1, 1]} : vector<8x64xf32> to vector<8x8xf32>
    %63 = vector.extract_strided_slice %39 {offsets = [0, 56], sizes = [8, 8], strides = [1, 1]} : vector<8x64xf32> to vector<8x8xf32>
    %64 = vector.shape_cast %17 : vector<24x8xf32> to vector<1x24x8xf32>
    %65 = vector.shape_cast %23 : vector<24x8xf32> to vector<1x24x8xf32>
    %66 = vector.shape_cast %29 : vector<24x8xf32> to vector<1x24x8xf32>
    %67 = vector.shape_cast %35 : vector<24x8xf32> to vector<1x24x8xf32>
    %68 = vector.shape_cast %43 : vector<24x8xf32> to vector<1x24x8xf32>
    %69 = vector.shape_cast %49 : vector<24x8xf32> to vector<1x24x8xf32>
    %70 = vector.shape_cast %55 : vector<24x8xf32> to vector<1x24x8xf32>
    %71 = vector.shape_cast %61 : vector<24x8xf32> to vector<1x24x8xf32>
    %72 = tpu.concatenate %64, %65, %66, %67, %68, %69, %70, %71 in 0 : vector<1x24x8xf32>, vector<1x24x8xf32>, vector<1x24x8xf32>, vector<1x24x8xf32>, vector<1x24x8xf32>, vector<1x24x8xf32>, vector<1x24x8xf32>, vector<1x24x8xf32> -> vector<8x24x8xf32>
    %73 = vector.shape_cast %18 : vector<8x8xf32> to vector<1x8x8xf32>
    %74 = vector.shape_cast %24 : vector<8x8xf32> to vector<1x8x8xf32>
    %75 = vector.shape_cast %30 : vector<8x8xf32> to vector<1x8x8xf32>
    %76 = vector.shape_cast %36 : vector<8x8xf32> to vector<1x8x8xf32>
    %77 = vector.shape_cast %44 : vector<8x8xf32> to vector<1x8x8xf32>
    %78 = vector.shape_cast %50 : vector<8x8xf32> to vector<1x8x8xf32>
    %79 = vector.shape_cast %56 : vector<8x8xf32> to vector<1x8x8xf32>
    %80 = vector.shape_cast %62 : vector<8x8xf32> to vector<1x8x8xf32>
    %81 = tpu.concatenate %73, %74, %75, %76, %77, %78, %79, %80 in 0 : vector<1x8x8xf32>, vector<1x8x8xf32>, vector<1x8x8xf32>, vector<1x8x8xf32>, vector<1x8x8xf32>, vector<1x8x8xf32>, vector<1x8x8xf32>, vector<1x8x8xf32> -> vector<8x8x8xf32>
    %82 = vector.shape_cast %19 : vector<8x8xf32> to vector<1x8x8xf32>
    %83 = vector.shape_cast %25 : vector<8x8xf32> to vector<1x8x8xf32>
    %84 = vector.shape_cast %31 : vector<8x8xf32> to vector<1x8x8xf32>
    %85 = vector.shape_cast %37 : vector<8x8xf32> to vector<1x8x8xf32>
    %86 = vector.shape_cast %45 : vector<8x8xf32> to vector<1x8x8xf32>
    %87 = vector.shape_cast %51 : vector<8x8xf32> to vector<1x8x8xf32>
    %88 = vector.shape_cast %57 : vector<8x8xf32> to vector<1x8x8xf32>
    %89 = vector.shape_cast %63 : vector<8x8xf32> to vector<1x8x8xf32>
    %90 = tpu.concatenate %82, %83, %84, %85, %86, %87, %88, %89 in 0 : vector<1x8x8xf32>, vector<1x8x8xf32>, vector<1x8x8xf32>, vector<1x8x8xf32>, vector<1x8x8xf32>, vector<1x8x8xf32>, vector<1x8x8xf32>, vector<1x8x8xf32> -> vector<8x8x8xf32>
    "tpu.trace_start"() <{level = 10 : i32, message = "gtd,gsd->gts"}> : () -> ()
    %cst_12 = arith.constant dense<0.000000e+00> : vector<8x24x8xf32>
    %91 = tpu.matmul %72, %81, %cst_12 {dimension_numbers = #tpu.dot_dimension_numbers<[2], [2], [1], [1], [0, 0, 0, 1, 1, 1], [0], [0]>} : vector<8x24x8xf32>, vector<8x8x8xf32>, vector<8x24x8xf32> -> vector<8x24x8xf32>
    "tpu.trace_stop"() : () -> ()
    %cst_13 = arith.constant 0.176776692 : f32
    %92 = vector.broadcast %cst_13 : f32 to vector<8x24x8xf32>
    %93 = arith.mulf %91, %92 : vector<8x24x8xf32>
    %94 = vector.extract_strided_slice %93 {offsets = [0, 0, 0], sizes = [8, 8, 8], strides = [1, 1, 1]} : vector<8x24x8xf32> to vector<8x8x8xf32>
    %95 = vector.extract_strided_slice %93 {offsets = [0, 8, 0], sizes = [8, 8, 8], strides = [1, 1, 1]} : vector<8x24x8xf32> to vector<8x8x8xf32>
    %96 = vector.extract_strided_slice %93 {offsets = [0, 16, 0], sizes = [8, 8, 8], strides = [1, 1, 1]} : vector<8x24x8xf32> to vector<8x8x8xf32>
    %97 = tpu.concatenate %94, %95, %96 in 0 : vector<8x8x8xf32>, vector<8x8x8xf32>, vector<8x8x8xf32> -> vector<24x8x8xf32>
    %cst_14 = arith.constant dense<0xFF800000> : vector<24x8xf32>
    %98 = vector.multi_reduction <maximumf>, %97, %cst_14 [2] : vector<24x8x8xf32> to vector<24x8xf32>
    %99 = vector.shape_cast %98 : vector<24x8xf32> to vector<24x8x1xf32>
    %cst_15 = arith.constant dense<0xFF800000> : vector<24x1xf32>
    %100 = vector.multi_reduction <maximumf>, %99, %cst_15 [1] : vector<24x8x1xf32> to vector<24x1xf32>
    %101 = vector.shape_cast %100 : vector<24x1xf32> to vector<24x1x1xf32>
    %102 = vector.broadcast %101 : vector<24x1x1xf32> to vector<24x8x8xf32>
    %103 = arith.subf %97, %102 : vector<24x8x8xf32>
    %104 = math.exp %103 : vector<24x8x8xf32>
    %cst_16 = arith.constant dense<0.000000e+00> : vector<24x8xf32>
    %105 = vector.multi_reduction <add>, %104, %cst_16 [2] : vector<24x8x8xf32> to vector<24x8xf32>
    %106 = vector.shape_cast %105 : vector<24x8xf32> to vector<24x8x1xf32>
    %cst_17 = arith.constant dense<0.000000e+00> : vector<24x1xf32>
    %107 = vector.multi_reduction <add>, %106, %cst_17 [1] : vector<24x8x1xf32> to vector<24x1xf32>
    %108 = vector.shape_cast %107 : vector<24x1xf32> to vector<24x1x1xf32>
    %cst_18 = arith.constant 8.000000e+00 : f32
    %109 = vector.broadcast %cst_18 : f32 to vector<24x1x1xf32>
    %110 = arith.divf %109, %108 : vector<24x1x1xf32>
    %111 = vector.broadcast %110 : vector<24x1x1xf32> to vector<24x8x8xf32>
    %112 = arith.mulf %104, %111 : vector<24x8x8xf32>
    %113 = vector.extract_strided_slice %112 {offsets = [0, 0, 0], sizes = [8, 8, 8], strides = [1, 1, 1]} : vector<24x8x8xf32> to vector<8x8x8xf32>
    %114 = vector.extract_strided_slice %112 {offsets = [8, 0, 0], sizes = [8, 8, 8], strides = [1, 1, 1]} : vector<24x8x8xf32> to vector<8x8x8xf32>
    %115 = arith.addf %113, %114 : vector<8x8x8xf32>
    %116 = vector.extract_strided_slice %112 {offsets = [16, 0, 0], sizes = [8, 8, 8], strides = [1, 1, 1]} : vector<24x8x8xf32> to vector<8x8x8xf32>
    %117 = arith.addf %115, %116 : vector<8x8x8xf32>
    %cst_19 = arith.constant 0.333333343 : f32
    %118 = vector.broadcast %cst_19 : f32 to vector<8x8x8xf32>
    %119 = arith.mulf %117, %118 : vector<8x8x8xf32>
    "tpu.trace_start"() <{level = 10 : i32, message = "gts,gsd->gtd"}> : () -> ()
    %cst_20 = arith.constant dense<0.000000e+00> : vector<8x8x8xf32>
    %120 = tpu.matmul %119, %90, %cst_20 {dimension_numbers = #tpu.dot_dimension_numbers<[2], [1], [1], [2], [0, 0, 0, 1, 1, 2], [0], [0]>} : vector<8x8x8xf32>, vector<8x8x8xf32>, vector<8x8x8xf32> -> vector<8x8x8xf32>
    "tpu.trace_stop"() : () -> ()
    %121 = vector.extract_strided_slice %120 {offsets = [0, 0, 0], sizes = [1, 8, 8], strides = [1, 1, 1]} : vector<8x8x8xf32> to vector<1x8x8xf32>
    %122 = vector.shape_cast %121 : vector<1x8x8xf32> to vector<8x8xf32>
    %123 = vector.extract_strided_slice %120 {offsets = [1, 0, 0], sizes = [1, 8, 8], strides = [1, 1, 1]} : vector<8x8x8xf32> to vector<1x8x8xf32>
    %124 = vector.shape_cast %123 : vector<1x8x8xf32> to vector<8x8xf32>
    %125 = vector.extract_strided_slice %120 {offsets = [2, 0, 0], sizes = [1, 8, 8], strides = [1, 1, 1]} : vector<8x8x8xf32> to vector<1x8x8xf32>
    %126 = vector.shape_cast %125 : vector<1x8x8xf32> to vector<8x8xf32>
    %127 = vector.extract_strided_slice %120 {offsets = [3, 0, 0], sizes = [1, 8, 8], strides = [1, 1, 1]} : vector<8x8x8xf32> to vector<1x8x8xf32>
    %128 = vector.shape_cast %127 : vector<1x8x8xf32> to vector<8x8xf32>
    %129 = tpu.concatenate %122, %124, %126, %128 in 1 : vector<8x8xf32>, vector<8x8xf32>, vector<8x8xf32>, vector<8x8xf32> -> vector<8x32xf32>
    %130 = vector.extract_strided_slice %113 {offsets = [0, 0, 0], sizes = [1, 8, 8], strides = [1, 1, 1]} : vector<8x8x8xf32> to vector<1x8x8xf32>
    %131 = vector.shape_cast %130 : vector<1x8x8xf32> to vector<8x8xf32>
    %132 = vector.extract_strided_slice %113 {offsets = [1, 0, 0], sizes = [1, 8, 8], strides = [1, 1, 1]} : vector<8x8x8xf32> to vector<1x8x8xf32>
    %133 = vector.shape_cast %132 : vector<1x8x8xf32> to vector<8x8xf32>
    %134 = vector.extract_strided_slice %113 {offsets = [2, 0, 0], sizes = [1, 8, 8], strides = [1, 1, 1]} : vector<8x8x8xf32> to vector<1x8x8xf32>
    %135 = vector.shape_cast %134 : vector<1x8x8xf32> to vector<8x8xf32>
    %136 = vector.extract_strided_slice %113 {offsets = [3, 0, 0], sizes = [1, 8, 8], strides = [1, 1, 1]} : vector<8x8x8xf32> to vector<1x8x8xf32>
    %137 = vector.shape_cast %136 : vector<1x8x8xf32> to vector<8x8xf32>
    %138 = tpu.concatenate %131, %133, %135, %137 in 1 : vector<8x8xf32>, vector<8x8xf32>, vector<8x8xf32>, vector<8x8xf32> -> vector<8x32xf32>
    %139 = vector.extract_strided_slice %120 {offsets = [4, 0, 0], sizes = [1, 8, 8], strides = [1, 1, 1]} : vector<8x8x8xf32> to vector<1x8x8xf32>
    %140 = vector.shape_cast %139 : vector<1x8x8xf32> to vector<8x8xf32>
    %141 = vector.extract_strided_slice %120 {offsets = [5, 0, 0], sizes = [1, 8, 8], strides = [1, 1, 1]} : vector<8x8x8xf32> to vector<1x8x8xf32>
    %142 = vector.shape_cast %141 : vector<1x8x8xf32> to vector<8x8xf32>
    %143 = vector.extract_strided_slice %120 {offsets = [6, 0, 0], sizes = [1, 8, 8], strides = [1, 1, 1]} : vector<8x8x8xf32> to vector<1x8x8xf32>
    %144 = vector.shape_cast %143 : vector<1x8x8xf32> to vector<8x8xf32>
    %145 = vector.extract_strided_slice %120 {offsets = [7, 0, 0], sizes = [1, 8, 8], strides = [1, 1, 1]} : vector<8x8x8xf32> to vector<1x8x8xf32>
    %146 = vector.shape_cast %145 : vector<1x8x8xf32> to vector<8x8xf32>
    %147 = tpu.concatenate %140, %142, %144, %146 in 1 : vector<8x8xf32>, vector<8x8xf32>, vector<8x8xf32>, vector<8x8xf32> -> vector<8x32xf32>
    %148 = vector.extract_strided_slice %113 {offsets = [4, 0, 0], sizes = [1, 8, 8], strides = [1, 1, 1]} : vector<8x8x8xf32> to vector<1x8x8xf32>
    %149 = vector.shape_cast %148 : vector<1x8x8xf32> to vector<8x8xf32>
    %150 = vector.extract_strided_slice %113 {offsets = [5, 0, 0], sizes = [1, 8, 8], strides = [1, 1, 1]} : vector<8x8x8xf32> to vector<1x8x8xf32>
    %151 = vector.shape_cast %150 : vector<1x8x8xf32> to vector<8x8xf32>
    %152 = vector.extract_strided_slice %113 {offsets = [6, 0, 0], sizes = [1, 8, 8], strides = [1, 1, 1]} : vector<8x8x8xf32> to vector<1x8x8xf32>
    %153 = vector.shape_cast %152 : vector<1x8x8xf32> to vector<8x8xf32>
    %154 = vector.extract_strided_slice %113 {offsets = [7, 0, 0], sizes = [1, 8, 8], strides = [1, 1, 1]} : vector<8x8x8xf32> to vector<1x8x8xf32>
    %155 = vector.shape_cast %154 : vector<1x8x8xf32> to vector<8x8xf32>
    %156 = tpu.concatenate %149, %151, %153, %155 in 1 : vector<8x8xf32>, vector<8x8xf32>, vector<8x8xf32>, vector<8x8xf32> -> vector<8x32xf32>
    %157 = tpu.concatenate %129, %147 in 0 : vector<8x32xf32>, vector<8x32xf32> -> vector<16x32xf32>
    %158 = tpu.concatenate %138, %156 in 0 : vector<8x32xf32>, vector<8x32xf32> -> vector<16x32xf32>
    %c0_21 = arith.constant 0 : index
    %c0_22 = arith.constant 0 : index
    %159 = vector.load %arg7[%c0_21, %c0_22] : memref<32x32xf32, #tpu.memory_space<vmem>>, vector<32x32xf32>
    %cst_23 = arith.constant dense<0.000000e+00> : vector<16x32xf32>
    %160 = tpu.matmul %157, %159, %cst_23 {dimension_numbers = #tpu.dot_dimension_numbers<[1], [0], [0], [1], [0, 0, 1, 1], [], []>} : vector<16x32xf32>, vector<32x32xf32>, vector<16x32xf32> -> vector<16x32xf32>
    %c0_24 = arith.constant 0 : index
    %c0_25 = arith.constant 0 : index
    %161 = vector.load %arg8[%c0_24, %c0_25] : memref<1x32xf32, #tpu.memory_space<vmem>>, vector<1x32xf32>
    %162 = vector.broadcast %161 : vector<1x32xf32> to vector<16x32xf32>
    %163 = arith.addf %160, %162 : vector<16x32xf32>
    %164 = tpu.concatenate %163, %158 in 1 : vector<16x32xf32>, vector<16x32xf32> -> vector<16x64xf32>
    %c0_26 = arith.constant 0 : index
    %c0_27 = arith.constant 0 : index
    %165 = vector.load %arg9[%c0_26, %c0_27] : memref<16x64xf32, #tpu.memory_space<vmem>>, vector<16x64xf32>
    tpu.vector_store %arg9[%c0_26, %c0_27], %164 {strides = array<i32>} : memref<16x64xf32, #tpu.memory_space<vmem>>, vector<16x64xf32>,
    return
  }
  func.func @transform_0(%arg0: i32) -> (i32, i32) {
    %c0_i32 = arith.constant 0 : i32
    %c0_i32_0 = arith.constant 0 : i32
    return %arg0, %c0_i32 : i32, i32
  }
  func.func @transform_1(%arg0: i32) -> (i32, i32) {
    %c0_i32 = arith.constant 0 : i32
    %c0_i32_0 = arith.constant 0 : i32
    return %arg0, %c0_i32 : i32, i32
  }
  func.func @transform_2(%arg0: i32) -> (i32, i32) {
    %c0_i32 = arith.constant 0 : i32
    %c0_i32_0 = arith.constant 0 : i32
    %c0_i32_1 = arith.constant 0 : i32
    return %c0_i32, %c0_i32_0 : i32, i32
  }
  func.func @transform_3(%arg0: i32) -> (i32, i32) {
    %c0_i32 = arith.constant 0 : i32
    %c0_i32_0 = arith.constant 0 : i32
    %c0_i32_1 = arith.constant 0 : i32
    return %c0_i32, %c0_i32_0 : i32, i32
  }
  func.func @transform_4(%arg0: i32) -> (i32, i32) {
    %c0_i32 = arith.constant 0 : i32
    %c0_i32_0 = arith.constant 0 : i32
    %c0_i32_1 = arith.constant 0 : i32
    return %c0_i32, %c0_i32_0 : i32, i32
  }
  func.func @transform_5(%arg0: i32) -> (i32, i32) {
    %c0_i32 = arith.constant 0 : i32
    %c0_i32_0 = arith.constant 0 : i32
    %c0_i32_1 = arith.constant 0 : i32
    return %c0_i32, %c0_i32_0 : i32, i32
  }
  func.func @transform_6(%arg0: i32) -> (i32, i32) {
    %c0_i32 = arith.constant 0 : i32
    %c0_i32_0 = arith.constant 0 : i32
    %c0_i32_1 = arith.constant 0 : i32
    return %c0_i32, %c0_i32_0 : i32, i32
  }
  func.func @transform_7(%arg0: i32) -> (i32, i32) {
    %c0_i32 = arith.constant 0 : i32
    %c0_i32_0 = arith.constant 0 : i32
    %c0_i32_1 = arith.constant 0 : i32
    return %c0_i32, %c0_i32_0 : i32, i32
  }
  func.func @transform_8(%arg0: i32) -> (i32, i32) {
    %c0_i32 = arith.constant 0 : i32
    %c0_i32_0 = arith.constant 0 : i32
    return %arg0, %c0_i32 : i32, i32
  }
}

</mosaic_0001>

<llo_original>
// kernel: tpu_custom_call.1
$region0: #{tpu_custom_call.1}
  #allocation0 [shape = 'u32[]', space=smem, size = 0x4, offset = 0x4, fixed_abs, tag = 'smem constant byte address 0x4 - core index']
  #allocation1 [shape = 'u32[144,128]{1,0:T(1,128)}', space=vmem, size = 0x12000, scoped, tag = 'internal scratch']
  %s0 = inlined_call_operand.hbm [shape: f32[16,96], index: 0, kind: input, shape index: {}]
  %s1 = inlined_call_operand.hbm [shape: f32[16,64], index: 1, kind: input, shape index: {}]
  %s2 = inlined_call_operand.hbm [shape: f32[96,96], index: 2, kind: input, shape index: {}]
  %s3 = inlined_call_operand.vmem [shape: f32[1,96], index: 3, kind: input, shape index: {}]
  %s4 = inlined_call_operand.hbm [shape: f32[64,64], index: 4, kind: input, shape index: {}]
  %s5 = inlined_call_operand.vmem [shape: f32[1,64], index: 5, kind: input, shape index: {}]
  %s6 = inlined_call_operand.hbm [shape: f32[32,32], index: 6, kind: input, shape index: {}]
  %s7 = inlined_call_operand.vmem [shape: f32[1,32], index: 7, kind: input, shape index: {}]
  %s8 = inlined_call_operand.hbm [shape: f32[16,64], index: 8, kind: output, shape index: {}]
  %s9 = sld [smem:[#allocation0]]
  $region62: #{tpu_custom_call.1} parent=0
    _
  %s11 = ssub.s32 1, %s9
  %s12 = scalar_select 0, %s11, %s9
  $region1: #{tpu_custom_call.1} parent=0
    #allocation2 [shape = 'u8[8192]{0}', space=vmem, size = 0x2000, scoped, tag = 'input window, operand 0, single buffered']
    #allocation3 [shape = 's32[1]{0}', space=sflag, size = 0x4, scoped, tag = 'scoped memory for tpu_custom_call.1']
    #allocation4 [shape = 's32[1]{0}', space=sflag, size = 0x4, scoped, tag = 'scoped memory for tpu_custom_call.1']
    #allocation5 [shape = 'u8[8192]{0}', space=vmem, size = 0x2000, scoped, tag = 'input window, operand 1, single buffered']
    #allocation6 [shape = 's32[1]{0}', space=sflag, size = 0x4, scoped, tag = 'scoped memory for tpu_custom_call.1']
    #allocation7 [shape = 'u8[49152]{0}', space=vmem, size = 0xc000, scoped, tag = 'input window, operand 2, single buffered']
    #allocation8 [shape = 'u8[32768]{0}', space=vmem, size = 0x8000, scoped, tag = 'input window, operand 4, single buffered']
    #allocation9 [shape = 's32[1]{0}', space=sflag, size = 0x4, scoped, tag = 'scoped memory for tpu_custom_call.1']
    #allocation10 [shape = 'u8[16384]{0}', space=vmem, size = 0x4000, scoped, tag = 'input window, operand 6, single buffered']
    #allocation11 [shape = 'u8[8192]{0}', space=vmem, size = 0x2000, scoped, tag = 'output window, operand 0, single buffered']
    %13 = vsyncpa [#allocation3], 0
    %14 = vsyncpa [#allocation6], 0
    %15 = vsyncpa [#allocation9], 0
    %16 = vsyncpa [#allocation4], 0
    // Predicated region
    $region2: #{tpu_custom_call.1} parent=1 // pred_check
      _
    $region3: #{tpu_custom_call.1} parent=1 // pred_check_branch
      %18 = sbr.rel (0) target = $region5
    $region4: #{tpu_custom_call.1} parent=1 // pred_region
      %s20 = ssub.s32 256, 256
      %21 = vsyncadd [#allocation3], %s20
      %s22 = sshll.u32 [#allocation2], 4
      %s23 = int_to_ptr.vmem [resolvable:$true] %s22
      %28 = dma.hbm_to_vmem [thread:$0]  %s0, 256, %s23, [#allocation3], 128, 128, 8
    $region5: #{tpu_custom_call.1} parent=1 // pred_fallthru
      _
    // Predicated region
    $region6: #{tpu_custom_call.1} parent=1 // pred_check
      _
    $region7: #{tpu_custom_call.1} parent=1 // pred_check_branch
      %30 = sbr.rel (0) target = $region9
    $region8: #{tpu_custom_call.1} parent=1 // pred_region
      %s32 = ssub.s32 256, 256
      %33 = vsyncadd [#allocation6], %s32
      %s34 = sshll.u32 [#allocation5], 4
      %s35 = int_to_ptr.vmem [resolvable:$true] %s34
      %40 = dma.hbm_to_vmem [thread:$0]  %s1, 256, %s35, [#allocation6], 128, 128, 8
    $region9: #{tpu_custom_call.1} parent=1 // pred_fallthru
      _
    // Predicated region
    $region10: #{tpu_custom_call.1} parent=1 // pred_check
      _
    $region11: #{tpu_custom_call.1} parent=1 // pred_check_branch
      %42 = sbr.rel (0) target = $region13
    $region12: #{tpu_custom_call.1} parent=1 // pred_region
      %s44 = ssub.s32 1536, 1536
      %45 = vsyncadd [#allocation6], %s44
      %s46 = sshll.u32 [#allocation7], 4
      %s47 = int_to_ptr.vmem [resolvable:$true] %s46
      %52 = dma.hbm_to_vmem [thread:$0]  %s2, 1536, %s47, [#allocation6], 128, 128, 8
    $region13: #{tpu_custom_call.1} parent=1 // pred_fallthru
      _
    // Predicated region
    $region14: #{tpu_custom_call.1} parent=1 // pred_check
      _
    $region15: #{tpu_custom_call.1} parent=1 // pred_check_branch
      %54 = sbr.rel (0) target = $region17
    $region16: #{tpu_custom_call.1} parent=1 // pred_region
      _
    $region17: #{tpu_custom_call.1} parent=1 // pred_fallthru
      _
    // Predicated region
    $region18: #{tpu_custom_call.1} parent=1 // pred_check
      _
    $region19: #{tpu_custom_call.1} parent=1 // pred_check_branch
      %56 = sbr.rel (0) target = $region21
    $region20: #{tpu_custom_call.1} parent=1 // pred_region
      %s58 = ssub.s32 1024, 1024
      %59 = vsyncadd [#allocation9], %s58
      %s60 = sshll.u32 [#allocation8], 4
      %s61 = int_to_ptr.vmem [resolvable:$true] %s60
      %66 = dma.hbm_to_vmem [thread:$0]  %s4, 1024, %s61, [#allocation9], 128, 128, 8
    $region21: #{tpu_custom_call.1} parent=1 // pred_fallthru
      _
    // Predicated region
    $region22: #{tpu_custom_call.1} parent=1 // pred_check
      _
    $region23: #{tpu_custom_call.1} parent=1 // pred_check_branch
      %68 = sbr.rel (0) target = $region25
    $region24: #{tpu_custom_call.1} parent=1 // pred_region
      _
    $region25: #{tpu_custom_call.1} parent=1 // pred_fallthru
      _
    // Predicated region
    $region26: #{tpu_custom_call.1} parent=1 // pred_check
      _
    $region27: #{tpu_custom_call.1} parent=1 // pred_check_branch
      %70 = sbr.rel (0) target = $region29
    $region28: #{tpu_custom_call.1} parent=1 // pred_region
      %s72 = ssub.s32 512, 512
      %73 = vsyncadd [#allocation9], %s72
      %s74 = sshll.u32 [#allocation10], 4
      %s75 = int_to_ptr.vmem [resolvable:$true] %s74
      %80 = dma.hbm_to_vmem [thread:$0]  %s6, 512, %s75, [#allocation9], 128, 128, 8
    $region29: #{tpu_custom_call.1} parent=1 // pred_fallthru
      _
    // Predicated region
    $region30: #{tpu_custom_call.1} parent=1 // pred_check
      _
    $region31: #{tpu_custom_call.1} parent=1 // pred_check_branch
      %82 = sbr.rel (0) target = $region33
    $region32: #{tpu_custom_call.1} parent=1 // pred_region
      _
    $region33: #{tpu_custom_call.1} parent=1 // pred_fallthru
      _
    // Predicated region
    $region34: #{tpu_custom_call.1} parent=1 // pred_check
      _
    $region35: #{tpu_custom_call.1} parent=1 // pred_check_branch
      %84 = sbr.rel (0) target = $region37
    $region36: #{tpu_custom_call.1} parent=1 // pred_region
      %85 = dma.done [#allocation3], 256
    $region37: #{tpu_custom_call.1} parent=1 // pred_fallthru
      _
    // Predicated region
    $region38: #{tpu_custom_call.1} parent=1 // pred_check
      _
    $region39: #{tpu_custom_call.1} parent=1 // pred_check_branch
      %87 = sbr.rel (0) target = $region41
    $region40: #{tpu_custom_call.1} parent=1 // pred_region
      %88 = dma.done [#allocation6], 256
    $region41: #{tpu_custom_call.1} parent=1 // pred_fallthru
      _
    // Predicated region
    $region42: #{tpu_custom_call.1} parent=1 // pred_check
      _
    $region43: #{tpu_custom_call.1} parent=1 // pred_check_branch
      %90 = sbr.rel (0) target = $region45
    $region44: #{tpu_custom_call.1} parent=1 // pred_region
      %91 = dma.done [#allocation6], 1536
    $region45: #{tpu_custom_call.1} parent=1 // pred_fallthru
      _
    // Predicated region
    $region46: #{tpu_custom_call.1} parent=1 // pred_check
      _
    $region47: #{tpu_custom_call.1} parent=1 // pred_check_branch
      %93 = sbr.rel (0) target = $region49
    $region48: #{tpu_custom_call.1} parent=1 // pred_region
      %94 = dma.done [#allocation9], 1024
    $region49: #{tpu_custom_call.1} parent=1 // pred_fallthru
      _
    // Predicated region
    $region50: #{tpu_custom_call.1} parent=1 // pred_check
      _
    $region51: #{tpu_custom_call.1} parent=1 // pred_check_branch
      %96 = sbr.rel (0) target = $region53
    $region52: #{tpu_custom_call.1} parent=1 // pred_region
      %97 = dma.done [#allocation9], 512
    $region53: #{tpu_custom_call.1} parent=1 // pred_fallthru
      _
    %v98 = vld [vmem:[#allocation2] sm:$0xff]
    %v99 = vld [vmem:[#allocation2 + $0x8] sm:$0xff]
    %v100 = vld [vmem:[#allocation7] sm:$0xff]
    %v101 = vld [vmem:[#allocation7 + $0x8] sm:$0xff]
    %v102 = vld [vmem:[#allocation7 + $0x10] sm:$0xff]
    %v103 = vld [vmem:[#allocation7 + $0x18] sm:$0xff]
    %v104 = vld [vmem:[#allocation7 + $0x20] sm:$0xff]
    %v105 = vld [vmem:[#allocation7 + $0x28] sm:$0xff]
    %v106 = vld [vmem:[#allocation7 + $0x30] sm:$0xff]
    %v107 = vld [vmem:[#allocation7 + $0x38] sm:$0xff]
    %v108 = vld [vmem:[#allocation7 + $0x40] sm:$0xff]
    %v109 = vld [vmem:[#allocation7 + $0x48] sm:$0xff]
    %v110 = vld [vmem:[#allocation7 + $0x50] sm:$0xff]
    %v111 = vld [vmem:[#allocation7 + $0x58] sm:$0xff]
    %v112 = vld [vmem:[%s3] sm:$0x1]
    %v114 = vlaneseq
    %v115 = vshrl.u32 %v114, 7
    %v116 = vsub.s32 0, %v115
    %v117 = vrot.slane %v112, %v116
    %vm119 = vcmask 785408
    %v121 = vsel %vm119, %v98, 0
    %v124 = vsel %vm119, %v99, 0
    %126 = vmatprep.subr.mxu0 0.0
    %127 = vmatpush1.msra.mxu0 %v100
    %128 = vmatprep.subr.mxu0 0.0
    %129 = vmatpush1.msra.mxu0 %v101
    %130 = vmatprep.subr.mxu0 0.0
    %131 = vmatpush1.msra.mxu0 %v102
    %132 = vmatprep.subr.mxu0 0.0
    %133 = vmatpush1.msra.mxu0 %v103
    %134 = vmatprep.subr.mxu0 0.0
    %135 = vmatpush1.msra.mxu0 %v104
    %136 = vmatprep.subr.mxu0 0.0
    %137 = vmatpush1.msra.mxu0 %v105
    %138 = vmatprep.subr.mxu0 0.0
    %139 = vmatpush1.msra.mxu0 %v106
    %140 = vmatprep.subr.mxu0 0.0
    %141 = vmatpush1.msra.mxu0 %v107
    %142 = vmatprep.subr.mxu0 0.0
    %143 = vmatpush1.msra.mxu0 %v108
    %144 = vmatprep.subr.mxu0 0.0
    %145 = vmatpush1.msra.mxu0 %v109
    %146 = vmatprep.subr.mxu0 0.0
    %147 = vmatpush1.msra.mxu0 %v110
    %148 = vmatprep.subr.mxu0 0.0
    %149 = vmatpush1.msra.mxu0 %v111
    %150 = vmatprep.subr.mxu0 0.0
    %151 = vmatpush1.msra.mxu0 0.0
    %152 = vmatprep.subr.mxu0 0.0
    %153 = vmatpush1.msra.mxu0 0.0
    %154 = vmatprep.subr.mxu0 0.0
    %155 = vmatpush1.msra.mxu0 0.0
    %156 = vmatprep.subr.mxu0 0.0
    %157 = vmatpush1.msra.mxu0 0.0
    %158 = vmatprep.subr.mxu0 0.0
    %159 = vmatpush1.msra.mxu0 0.0
    %160 = vmatprep.subr.mxu0 0.0
    %161 = vmatpush1.msra.mxu0 0.0
    %162 = vmatprep.subr.mxu0 0.0
    %163 = vmatpush1.msra.mxu0 0.0
    %164 = vmatprep.subr.mxu0 0.0
    %165 = vmatpush1.msra.mxu0 0.0
    %166 = vmatprep.subr.mxu0 0.0
    %167 = vmatpush1.msra.mxu0 0.0
    %168 = vmatprep.subr.mxu0 0.0
    %169 = vmatpush1.msra.mxu0 0.0
    %170 = vmatprep.subr.mxu0 0.0
    %171 = vmatpush1.msra.mxu0 0.0
    %172 = vmatprep.subr.mxu0 0.0
    %173 = vmatpush1.msra.mxu0 0.0
    %174 = vmatprep.subr.mxu0 0.0
    %175 = vmatpush1.msra.mxu0 0.0
    %176 = vmatprep.subr.mxu0 0.0
    %177 = vmatpush1.msra.mxu0 0.0
    %178 = vmatprep.subr.mxu0 0.0
    %179 = vmatpush1.msra.mxu0 0.0
    %180 = vmatprep.subr.mxu0 0.0
    %181 = vmatpush1.msra.mxu0 0.0
    %182 = vmatprep.subr.mxu0 0.0
    %183 = vmatpush1.msra.mxu0 0.0
    %184 = vmatprep.subr.mxu0 0.0
    %185 = vmatpush1.msra.mxu0 0.0
    %186 = vmatprep.subr.mxu0 0.0
    %187 = vmatpush1.msra.mxu0 0.0
    %188 = vmatprep.subr.mxu0 0.0
    %189 = vmatpush1.msra.mxu0 0.0
    %190 = vmatprep.mubr.f32.mxu0 0.0
    %191 = vmatmul.mubr.f32.gmra.mrb[0].mxu0 %v121
    %v192 = vpop.f32.mrb[0].mxu0
    %v193 = vadd.f32 %v117, %v192
    %v194 = vpop.f32.mrb[0].mxu0
    %195 = vmatprep.mubr.f32.mxu0 0.0
    %196 = vmatmul.mubr.f32.gmra.mrb[0].mxu0 %v124
    %v197 = vpop.f32.mrb[0].mxu0
    %v198 = vadd.f32 %v117, %v197
    %v199 = vpop.f32.mrb[0].mxu0
    %200 = vdwg.mxu0
    %v201 = vld [vmem:[#allocation5] sm:$0xff]
    %v202 = vld [vmem:[#allocation5 + $0x8] sm:$0xff]
    %v203 = vld [vmem:[#allocation8] sm:$0xff]
    %v204 = vld [vmem:[#allocation8 + $0x8] sm:$0xff]
    %v205 = vld [vmem:[#allocation8 + $0x10] sm:$0xff]
    %v206 = vld [vmem:[#allocation8 + $0x18] sm:$0xff]
    %v207 = vld [vmem:[#allocation8 + $0x20] sm:$0xff]
    %v208 = vld [vmem:[#allocation8 + $0x28] sm:$0xff]
    %v209 = vld [vmem:[#allocation8 + $0x30] sm:$0xff]
    %v210 = vld [vmem:[#allocation8 + $0x38] sm:$0xff]
    %v211 = vld [vmem:[%s5] sm:$0x1]
    %v213 = vlaneseq
    %v214 = vshrl.u32 %v213, 7
    %v215 = vsub.s32 0, %v214
    %v216 = vrot.slane %v211, %v215
    %vm218 = vcmask 523264
    %v220 = vsel %vm218, %v201, 0
    %v223 = vsel %vm218, %v202, 0
    %225 = vmatprep.subr.mxu0 0.0
    %226 = vmatpush1.msra.mxu0 %v203
    %227 = vmatprep.subr.mxu0 0.0
    %228 = vmatpush1.msra.mxu0 %v204
    %229 = vmatprep.subr.mxu0 0.0
    %230 = vmatpush1.msra.mxu0 %v205
    %231 = vmatprep.subr.mxu0 0.0
    %232 = vmatpush1.msra.mxu0 %v206
    %233 = vmatprep.subr.mxu0 0.0
    %234 = vmatpush1.msra.mxu0 %v207
    %235 = vmatprep.subr.mxu0 0.0
    %236 = vmatpush1.msra.mxu0 %v208
    %237 = vmatprep.subr.mxu0 0.0
    %238 = vmatpush1.msra.mxu0 %v209
    %239 = vmatprep.subr.mxu0 0.0
    %240 = vmatpush1.msra.mxu0 %v210
    %241 = vmatprep.subr.mxu0 0.0
    %242 = vmatpush1.msra.mxu0 0.0
    %243 = vmatprep.subr.mxu0 0.0
    %244 = vmatpush1.msra.mxu0 0.0
    %245 = vmatprep.subr.mxu0 0.0
    %246 = vmatpush1.msra.mxu0 0.0
    %247 = vmatprep.subr.mxu0 0.0
    %248 = vmatpush1.msra.mxu0 0.0
    %249 = vmatprep.subr.mxu0 0.0
    %250 = vmatpush1.msra.mxu0 0.0
    %251 = vmatprep.subr.mxu0 0.0
    %252 = vmatpush1.msra.mxu0 0.0
    %253 = vmatprep.subr.mxu0 0.0
    %254 = vmatpush1.msra.mxu0 0.0
    %255 = vmatprep.subr.mxu0 0.0
    %256 = vmatpush1.msra.mxu0 0.0
    %257 = vmatprep.subr.mxu0 0.0
    %258 = vmatpush1.msra.mxu0 0.0
    %259 = vmatprep.subr.mxu0 0.0
    %260 = vmatpush1.msra.mxu0 0.0
    %261 = vmatprep.subr.mxu0 0.0
    %262 = vmatpush1.msra.mxu0 0.0
    %263 = vmatprep.subr.mxu0 0.0
    %264 = vmatpush1.msra.mxu0 0.0
    %265 = vmatprep.subr.mxu0 0.0
    %266 = vmatpush1.msra.mxu0 0.0
    %267 = vmatprep.subr.mxu0 0.0
    %268 = vmatpush1.msra.mxu0 0.0
    %269 = vmatprep.subr.mxu0 0.0
    %270 = vmatpush1.msra.mxu0 0.0
    %271 = vmatprep.subr.mxu0 0.0
    %272 = vmatpush1.msra.mxu0 0.0
    %273 = vmatprep.subr.mxu0 0.0
    %274 = vmatpush1.msra.mxu0 0.0
    %275 = vmatprep.subr.mxu0 0.0
    %276 = vmatpush1.msra.mxu0 0.0
    %277 = vmatprep.subr.mxu0 0.0
    %278 = vmatpush1.msra.mxu0 0.0
    %279 = vmatprep.subr.mxu0 0.0
    %280 = vmatpush1.msra.mxu0 0.0
    %281 = vmatprep.subr.mxu0 0.0
    %282 = vmatpush1.msra.mxu0 0.0
    %283 = vmatprep.subr.mxu0 0.0
    %284 = vmatpush1.msra.mxu0 0.0
    %285 = vmatprep.subr.mxu0 0.0
    %286 = vmatpush1.msra.mxu0 0.0
    %287 = vmatprep.subr.mxu0 0.0
    %288 = vmatpush1.msra.mxu0 0.0
    %289 = vmatprep.mubr.f32.mxu0 0.0
    %290 = vmatmul.mubr.f32.gmra.mrb[0].mxu0 %v220
    %v291 = vpop.f32.mrb[0].mxu0
    %v292 = vadd.f32 %v216, %v291
    %v293 = vpop.f32.mrb[0].mxu0
    %294 = vmatprep.mubr.f32.mxu0 0.0
    %295 = vmatmul.mubr.f32.gmra.mrb[0].mxu0 %v223
    %v296 = vpop.f32.mrb[0].mxu0
    %v297 = vadd.f32 %v216, %v296
    %v298 = vpop.f32.mrb[0].mxu0
    %299 = vdwg.mxu0
    %301 = vrot.lane.b32.xlu0 %v193, 96
    %v302 = vpop.permute.xlu0 %301
    %303 = vrot.lane.b32.xlu0 %v193, 64
    %v304 = vpop.permute.xlu0 %303
    %306 = vrot.lane.b32.xlu0 %v198, 96
    %v307 = vpop.permute.xlu0 %306
    %308 = vrot.lane.b32.xlu0 %v198, 64
    %v309 = vpop.permute.xlu0 %308
    %310 = vrot.lane.b32.xlu0 %v193, 120
    %v311 = vpop.permute.xlu0 %310
    %312 = vrot.lane.b32.xlu0 %v302, 120
    %v313 = vpop.permute.xlu0 %312
    %314 = vrot.lane.b32.xlu0 %v304, 120
    %v315 = vpop.permute.xlu0 %314
    %316 = vrot.lane.b32.xlu0 %v193, 112
    %v317 = vpop.permute.xlu0 %316
    %318 = vrot.lane.b32.xlu0 %v302, 112
    %v319 = vpop.permute.xlu0 %318
    %320 = vrot.lane.b32.xlu0 %v304, 112
    %v321 = vpop.permute.xlu0 %320
    %322 = vrot.lane.b32.xlu0 %v193, 104
    %v323 = vpop.permute.xlu0 %322
    %324 = vrot.lane.b32.xlu0 %v302, 104
    %v325 = vpop.permute.xlu0 %324
    %326 = vrot.lane.b32.xlu0 %v304, 104
    %v327 = vpop.permute.xlu0 %326
    %328 = vrot.lane.b32.xlu0 %v198, 120
    %v329 = vpop.permute.xlu0 %328
    %330 = vrot.lane.b32.xlu0 %v307, 120
    %v331 = vpop.permute.xlu0 %330
    %332 = vrot.lane.b32.xlu0 %v309, 120
    %v333 = vpop.permute.xlu0 %332
    %334 = vrot.lane.b32.xlu0 %v198, 112
    %v335 = vpop.permute.xlu0 %334
    %336 = vrot.lane.b32.xlu0 %v307, 112
    %v337 = vpop.permute.xlu0 %336
    %338 = vrot.lane.b32.xlu0 %v309, 112
    %v339 = vpop.permute.xlu0 %338
    %340 = vrot.lane.b32.xlu0 %v198, 104
    %v341 = vpop.permute.xlu0 %340
    %342 = vrot.lane.b32.xlu0 %v307, 104
    %v343 = vpop.permute.xlu0 %342
    %344 = vrot.lane.b32.xlu0 %v309, 104
    %v345 = vpop.permute.xlu0 %344
    %347 = vrot.lane.b32.xlu0 %v292, 120
    %v348 = vpop.permute.xlu0 %347
    %349 = vrot.lane.b32.xlu0 %v292, 112
    %v350 = vpop.permute.xlu0 %349
    %351 = vrot.lane.b32.xlu0 %v292, 104
    %v352 = vpop.permute.xlu0 %351
    %354 = vrot.lane.b32.xlu0 %v297, 120
    %v355 = vpop.permute.xlu0 %354
    %356 = vrot.lane.b32.xlu0 %v297, 112
    %v357 = vpop.permute.xlu0 %356
    %358 = vrot.lane.b32.xlu0 %v297, 104
    %v359 = vpop.permute.xlu0 %358
    %vm360 = vcmask 64512
    %v361 = vsel %vm360, %v193, 0
    %v363 = vsel %vm360, %v302, 0
    %v365 = vsel %vm360, %v304, 0
    %v367 = vsel %vm360, %v292, 0
    %369 = vmatprep.subr.mxu0 0.0
    %370 = vmatpush1.xpose.msra.mxu0 %v367
    %371 = vmatprep.subr.mxu0 0.0
    %372 = vmatpush1.xpose.msra.mxu0 0.0
    %373 = vmatprep.subr.mxu0 0.0
    %374 = vmatpush1.xpose.msra.mxu0 0.0
    %375 = vmatprep.subr.mxu0 0.0
    %376 = vmatpush1.xpose.msra.mxu0 0.0
    %377 = vmatprep.subr.mxu0 0.0
    %378 = vmatpush1.xpose.msra.mxu0 0.0
    %379 = vmatprep.subr.mxu0 0.0
    %380 = vmatpush1.xpose.msra.mxu0 0.0
    %381 = vmatprep.subr.mxu0 0.0
    %382 = vmatpush1.xpose.msra.mxu0 0.0
    %383 = vmatprep.subr.mxu0 0.0
    %384 = vmatpush1.xpose.msra.mxu0 0.0
    %385 = vmatprep.subr.mxu0 0.0
    %386 = vmatpush1.xpose.msra.mxu0 0.0
    %387 = vmatprep.subr.mxu0 0.0
    %388 = vmatpush1.xpose.msra.mxu0 0.0
    %389 = vmatprep.subr.mxu0 0.0
    %390 = vmatpush1.xpose.msra.mxu0 0.0
    %391 = vmatprep.subr.mxu0 0.0
    %392 = vmatpush1.xpose.msra.mxu0 0.0
    %393 = vmatprep.subr.mxu0 0.0
    %394 = vmatpush1.xpose.msra.mxu0 0.0
    %395 = vmatprep.subr.mxu0 0.0
    %396 = vmatpush1.xpose.msra.mxu0 0.0
    %397 = vmatprep.subr.mxu0 0.0
    %398 = vmatpush1.xpose.msra.mxu0 0.0
    %399 = vmatprep.subr.mxu0 0.0
    %400 = vmatpush1.xpose.msra.mxu0 0.0
    %401 = vmatprep.subr.mxu0 0.0
    %402 = vmatpush1.xpose.msra.mxu0 0.0
    %403 = vmatprep.subr.mxu0 0.0
    %404 = vmatpush1.xpose.msra.mxu0 0.0
    %405 = vmatprep.subr.mxu0 0.0
    %406 = vmatpush1.xpose.msra.mxu0 0.0
    %407 = vmatprep.subr.mxu0 0.0
    %408 = vmatpush1.xpose.msra.mxu0 0.0
    %409 = vmatprep.subr.mxu0 0.0
    %410 = vmatpush1.xpose.msra.mxu0 0.0
    %411 = vmatprep.subr.mxu0 0.0
    %412 = vmatpush1.xpose.msra.mxu0 0.0
    %413 = vmatprep.subr.mxu0 0.0
    %414 = vmatpush1.xpose.msra.mxu0 0.0
    %415 = vmatprep.subr.mxu0 0.0
    %416 = vmatpush1.xpose.msra.mxu0 0.0
    %417 = vmatprep.subr.mxu0 0.0
    %418 = vmatpush1.xpose.msra.mxu0 0.0
    %419 = vmatprep.subr.mxu0 0.0
    %420 = vmatpush1.xpose.msra.mxu0 0.0
    %421 = vmatprep.subr.mxu0 0.0
    %422 = vmatpush1.xpose.msra.mxu0 0.0
    %423 = vmatprep.subr.mxu0 0.0
    %424 = vmatpush1.xpose.msra.mxu0 0.0
    %425 = vmatprep.subr.mxu0 0.0
    %426 = vmatpush1.xpose.msra.mxu0 0.0
    %427 = vmatprep.subr.mxu0 0.0
    %428 = vmatpush1.xpose.msra.mxu0 0.0
    %429 = vmatprep.subr.mxu0 0.0
    %430 = vmatpush1.xpose.msra.mxu0 0.0
    %431 = vmatprep.subr.mxu0 0.0
    %432 = vmatpush1.xpose.msra.mxu0 0.0
    %433 = vmatprep.mubr.f32.mxu0 0.0
    %434 = vmatmul.mubr.f32.gmra.mrb[0].mxu0 %v361
    %v435 = vpop.f32.mrb[0].mxu0
    %v436 = vadd.f32 0.0, %v435
    %v437 = vpop.f32.mrb[0].mxu0
    %438 = vmatprep.mubr.f32.mxu0 0.0
    %439 = vmatmul.mubr.f32.gmra.mrb[0].mxu0 %v363
    %v440 = vpop.f32.mrb[0].mxu0
    %v441 = vadd.f32 0.0, %v440
    %v442 = vpop.f32.mrb[0].mxu0
    %443 = vmatprep.mubr.f32.mxu0 0.0
    %444 = vmatmul.mubr.f32.gmra.mrb[0].mxu0 %v365
    %v445 = vpop.f32.mrb[0].mxu0
    %v446 = vadd.f32 0.0, %v445
    %v447 = vpop.f32.mrb[0].mxu0
    %448 = vdwg.mxu0
    %v449 = vsel %vm360, %v311, 0
    %v451 = vsel %vm360, %v313, 0
    %v453 = vsel %vm360, %v315, 0
    %v455 = vsel %vm360, %v348, 0
    %457 = vmatprep.subr.mxu0 0.0
    %458 = vmatpush1.xpose.msra.mxu0 %v455
    %459 = vmatprep.subr.mxu0 0.0
    %460 = vmatpush1.xpose.msra.mxu0 0.0
    %461 = vmatprep.subr.mxu0 0.0
    %462 = vmatpush1.xpose.msra.mxu0 0.0
    %463 = vmatprep.subr.mxu0 0.0
    %464 = vmatpush1.xpose.msra.mxu0 0.0
    %465 = vmatprep.subr.mxu0 0.0
    %466 = vmatpush1.xpose.msra.mxu0 0.0
    %467 = vmatprep.subr.mxu0 0.0
    %468 = vmatpush1.xpose.msra.mxu0 0.0
    %469 = vmatprep.subr.mxu0 0.0
    %470 = vmatpush1.xpose.msra.mxu0 0.0
    %471 = vmatprep.subr.mxu0 0.0
    %472 = vmatpush1.xpose.msra.mxu0 0.0
    %473 = vmatprep.subr.mxu0 0.0
    %474 = vmatpush1.xpose.msra.mxu0 0.0
    %475 = vmatprep.subr.mxu0 0.0
    %476 = vmatpush1.xpose.msra.mxu0 0.0
    %477 = vmatprep.subr.mxu0 0.0
    %478 = vmatpush1.xpose.msra.mxu0 0.0
    %479 = vmatprep.subr.mxu0 0.0
    %480 = vmatpush1.xpose.msra.mxu0 0.0
    %481 = vmatprep.subr.mxu0 0.0
    %482 = vmatpush1.xpose.msra.mxu0 0.0
    %483 = vmatprep.subr.mxu0 0.0
    %484 = vmatpush1.xpose.msra.mxu0 0.0
    %485 = vmatprep.subr.mxu0 0.0
    %486 = vmatpush1.xpose.msra.mxu0 0.0
    %487 = vmatprep.subr.mxu0 0.0
    %488 = vmatpush1.xpose.msra.mxu0 0.0
    %489 = vmatprep.subr.mxu0 0.0
    %490 = vmatpush1.xpose.msra.mxu0 0.0
    %491 = vmatprep.subr.mxu0 0.0
    %492 = vmatpush1.xpose.msra.mxu0 0.0
    %493 = vmatprep.subr.mxu0 0.0
    %494 = vmatpush1.xpose.msra.mxu0 0.0
    %495 = vmatprep.subr.mxu0 0.0
    %496 = vmatpush1.xpose.msra.mxu0 0.0
    %497 = vmatprep.subr.mxu0 0.0
    %498 = vmatpush1.xpose.msra.mxu0 0.0
    %499 = vmatprep.subr.mxu0 0.0
    %500 = vmatpush1.xpose.msra.mxu0 0.0
    %501 = vmatprep.subr.mxu0 0.0
    %502 = vmatpush1.xpose.msra.mxu0 0.0
    %503 = vmatprep.subr.mxu0 0.0
    %504 = vmatpush1.xpose.msra.mxu0 0.0
    %505 = vmatprep.subr.mxu0 0.0
    %506 = vmatpush1.xpose.msra.mxu0 0.0
    %507 = vmatprep.subr.mxu0 0.0
    %508 = vmatpush1.xpose.msra.mxu0 0.0
    %509 = vmatprep.subr.mxu0 0.0
    %510 = vmatpush1.xpose.msra.mxu0 0.0
    %511 = vmatprep.subr.mxu0 0.0
    %512 = vmatpush1.xpose.msra.mxu0 0.0
    %513 = vmatprep.subr.mxu0 0.0
    %514 = vmatpush1.xpose.msra.mxu0 0.0
    %515 = vmatprep.subr.mxu0 0.0
    %516 = vmatpush1.xpose.msra.mxu0 0.0
    %517 = vmatprep.subr.mxu0 0.0
    %518 = vmatpush1.xpose.msra.mxu0 0.0
    %519 = vmatprep.subr.mxu0 0.0
    %520 = vmatpush1.xpose.msra.mxu0 0.0
    %521 = vmatprep.mubr.f32.mxu0 0.0
    %522 = vmatmul.mubr.f32.gmra.mrb[0].mxu0 %v449
    %v523 = vpop.f32.mrb[0].mxu0
    %v524 = vadd.f32 0.0, %v523
    %v525 = vpop.f32.mrb[0].mxu0
    %526 = vmatprep.mubr.f32.mxu0 0.0
    %527 = vmatmul.mubr.f32.gmra.mrb[0].mxu0 %v451
    %v528 = vpop.f32.mrb[0].mxu0
    %v529 = vadd.f32 0.0, %v528
    %v530 = vpop.f32.mrb[0].mxu0
    %531 = vmatprep.mubr.f32.mxu0 0.0
    %532 = vmatmul.mubr.f32.gmra.mrb[0].mxu0 %v453
    %v533 = vpop.f32.mrb[0].mxu0
    %v534 = vadd.f32 0.0, %v533
    %v535 = vpop.f32.mrb[0].mxu0
    %536 = vdwg.mxu0
    %v537 = vsel %vm360, %v317, 0
    %v539 = vsel %vm360, %v319, 0
    %v541 = vsel %vm360, %v321, 0
    %v543 = vsel %vm360, %v350, 0
    %545 = vmatprep.subr.mxu0 0.0
    %546 = vmatpush1.xpose.msra.mxu0 %v543
    %547 = vmatprep.subr.mxu0 0.0
    %548 = vmatpush1.xpose.msra.mxu0 0.0
    %549 = vmatprep.subr.mxu0 0.0
    %550 = vmatpush1.xpose.msra.mxu0 0.0
    %551 = vmatprep.subr.mxu0 0.0
    %552 = vmatpush1.xpose.msra.mxu0 0.0
    %553 = vmatprep.subr.mxu0 0.0
    %554 = vmatpush1.xpose.msra.mxu0 0.0
    %555 = vmatprep.subr.mxu0 0.0
    %556 = vmatpush1.xpose.msra.mxu0 0.0
    %557 = vmatprep.subr.mxu0 0.0
    %558 = vmatpush1.xpose.msra.mxu0 0.0
    %559 = vmatprep.subr.mxu0 0.0
    %560 = vmatpush1.xpose.msra.mxu0 0.0
    %561 = vmatprep.subr.mxu0 0.0
    %562 = vmatpush1.xpose.msra.mxu0 0.0
    %563 = vmatprep.subr.mxu0 0.0
    %564 = vmatpush1.xpose.msra.mxu0 0.0
    %565 = vmatprep.subr.mxu0 0.0
    %566 = vmatpush1.xpose.msra.mxu0 0.0
    %567 = vmatprep.subr.mxu0 0.0
    %568 = vmatpush1.xpose.msra.mxu0 0.0
    %569 = vmatprep.subr.mxu0 0.0
    %570 = vmatpush1.xpose.msra.mxu0 0.0
    %571 = vmatprep.subr.mxu0 0.0
    %572 = vmatpush1.xpose.msra.mxu0 0.0
    %573 = vmatprep.subr.mxu0 0.0
    %574 = vmatpush1.xpose.msra.mxu0 0.0
    %575 = vmatprep.subr.mxu0 0.0
    %576 = vmatpush1.xpose.msra.mxu0 0.0
    %577 = vmatprep.subr.mxu0 0.0
    %578 = vmatpush1.xpose.msra.mxu0 0.0
    %579 = vmatprep.subr.mxu0 0.0
    %580 = vmatpush1.xpose.msra.mxu0 0.0
    %581 = vmatprep.subr.mxu0 0.0
    %582 = vmatpush1.xpose.msra.mxu0 0.0
    %583 = vmatprep.subr.mxu0 0.0
    %584 = vmatpush1.xpose.msra.mxu0 0.0
    %585 = vmatprep.subr.mxu0 0.0
    %586 = vmatpush1.xpose.msra.mxu0 0.0
    %587 = vmatprep.subr.mxu0 0.0
    %588 = vmatpush1.xpose.msra.mxu0 0.0
    %589 = vmatprep.subr.mxu0 0.0
    %590 = vmatpush1.xpose.msra.mxu0 0.0
    %591 = vmatprep.subr.mxu0 0.0
    %592 = vmatpush1.xpose.msra.mxu0 0.0
    %593 = vmatprep.subr.mxu0 0.0
    %594 = vmatpush1.xpose.msra.mxu0 0.0
    %595 = vmatprep.subr.mxu0 0.0
    %596 = vmatpush1.xpose.msra.mxu0 0.0
    %597 = vmatprep.subr.mxu0 0.0
    %598 = vmatpush1.xpose.msra.mxu0 0.0
    %599 = vmatprep.subr.mxu0 0.0
    %600 = vmatpush1.xpose.msra.mxu0 0.0
    %601 = vmatprep.subr.mxu0 0.0
    %602 = vmatpush1.xpose.msra.mxu0 0.0
    %603 = vmatprep.subr.mxu0 0.0
    %604 = vmatpush1.xpose.msra.mxu0 0.0
    %605 = vmatprep.subr.mxu0 0.0
    %606 = vmatpush1.xpose.msra.mxu0 0.0
    %607 = vmatprep.subr.mxu0 0.0
    %608 = vmatpush1.xpose.msra.mxu0 0.0
    %609 = vmatprep.mubr.f32.mxu0 0.0
    %610 = vmatmul.mubr.f32.gmra.mrb[0].mxu0 %v537
    %v611 = vpop.f32.mrb[0].mxu0
    %v612 = vadd.f32 0.0, %v611
    %v613 = vpop.f32.mrb[0].mxu0
    %614 = vmatprep.mubr.f32.mxu0 0.0
    %615 = vmatmul.mubr.f32.gmra.mrb[0].mxu0 %v539
    %v616 = vpop.f32.mrb[0].mxu0
    %v617 = vadd.f32 0.0, %v616
    %v618 = vpop.f32.mrb[0].mxu0
    %619 = vmatprep.mubr.f32.mxu0 0.0
    %620 = vmatmul.mubr.f32.gmra.mrb[0].mxu0 %v541
    %v621 = vpop.f32.mrb[0].mxu0
    %v622 = vadd.f32 0.0, %v621
    %v623 = vpop.f32.mrb[0].mxu0
    %624 = vdwg.mxu0
    %v625 = vsel %vm360, %v323, 0
    %v627 = vsel %vm360, %v325, 0
    %v629 = vsel %vm360, %v327, 0
    %v631 = vsel %vm360, %v352, 0
    %633 = vmatprep.subr.mxu0 0.0
    %634 = vmatpush1.xpose.msra.mxu0 %v631
    %635 = vmatprep.subr.mxu0 0.0
    %636 = vmatpush1.xpose.msra.mxu0 0.0
    %637 = vmatprep.subr.mxu0 0.0
    %638 = vmatpush1.xpose.msra.mxu0 0.0
    %639 = vmatprep.subr.mxu0 0.0
    %640 = vmatpush1.xpose.msra.mxu0 0.0
    %641 = vmatprep.subr.mxu0 0.0
    %642 = vmatpush1.xpose.msra.mxu0 0.0
    %643 = vmatprep.subr.mxu0 0.0
    %644 = vmatpush1.xpose.msra.mxu0 0.0
    %645 = vmatprep.subr.mxu0 0.0
    %646 = vmatpush1.xpose.msra.mxu0 0.0
    %647 = vmatprep.subr.mxu0 0.0
    %648 = vmatpush1.xpose.msra.mxu0 0.0
    %649 = vmatprep.subr.mxu0 0.0
    %650 = vmatpush1.xpose.msra.mxu0 0.0
    %651 = vmatprep.subr.mxu0 0.0
    %652 = vmatpush1.xpose.msra.mxu0 0.0
    %653 = vmatprep.subr.mxu0 0.0
    %654 = vmatpush1.xpose.msra.mxu0 0.0
    %655 = vmatprep.subr.mxu0 0.0
    %656 = vmatpush1.xpose.msra.mxu0 0.0
    %657 = vmatprep.subr.mxu0 0.0
    %658 = vmatpush1.xpose.msra.mxu0 0.0
    %659 = vmatprep.subr.mxu0 0.0
    %660 = vmatpush1.xpose.msra.mxu0 0.0
    %661 = vmatprep.subr.mxu0 0.0
    %662 = vmatpush1.xpose.msra.mxu0 0.0
    %663 = vmatprep.subr.mxu0 0.0
    %664 = vmatpush1.xpose.msra.mxu0 0.0
    %665 = vmatprep.subr.mxu0 0.0
    %666 = vmatpush1.xpose.msra.mxu0 0.0
    %667 = vmatprep.subr.mxu0 0.0
    %668 = vmatpush1.xpose.msra.mxu0 0.0
    %669 = vmatprep.subr.mxu0 0.0
    %670 = vmatpush1.xpose.msra.mxu0 0.0
    %671 = vmatprep.subr.mxu0 0.0
    %672 = vmatpush1.xpose.msra.mxu0 0.0
    %673 = vmatprep.subr.mxu0 0.0
    %674 = vmatpush1.xpose.msra.mxu0 0.0
    %675 = vmatprep.subr.mxu0 0.0
    %676 = vmatpush1.xpose.msra.mxu0 0.0
    %677 = vmatprep.subr.mxu0 0.0
    %678 = vmatpush1.xpose.msra.mxu0 0.0
    %679 = vmatprep.subr.mxu0 0.0
    %680 = vmatpush1.xpose.msra.mxu0 0.0
    %681 = vmatprep.subr.mxu0 0.0
    %682 = vmatpush1.xpose.msra.mxu0 0.0
    %683 = vmatprep.subr.mxu0 0.0
    %684 = vmatpush1.xpose.msra.mxu0 0.0
    %685 = vmatprep.subr.mxu0 0.0
    %686 = vmatpush1.xpose.msra.mxu0 0.0
    %687 = vmatprep.subr.mxu0 0.0
    %688 = vmatpush1.xpose.msra.mxu0 0.0
    %689 = vmatprep.subr.mxu0 0.0
    %690 = vmatpush1.xpose.msra.mxu0 0.0
    %691 = vmatprep.subr.mxu0 0.0
    %692 = vmatpush1.xpose.msra.mxu0 0.0
    %693 = vmatprep.subr.mxu0 0.0
    %694 = vmatpush1.xpose.msra.mxu0 0.0
    %695 = vmatprep.subr.mxu0 0.0
    %696 = vmatpush1.xpose.msra.mxu0 0.0
    %697 = vmatprep.mubr.f32.mxu0 0.0
    %698 = vmatmul.mubr.f32.gmra.mrb[0].mxu0 %v625
    %v699 = vpop.f32.mrb[0].mxu0
    %v700 = vadd.f32 0.0, %v699
    %v701 = vpop.f32.mrb[0].mxu0
    %702 = vmatprep.mubr.f32.mxu0 0.0
    %703 = vmatmul.mubr.f32.gmra.mrb[0].mxu0 %v627
    %v704 = vpop.f32.mrb[0].mxu0
    %v705 = vadd.f32 0.0, %v704
    %v706 = vpop.f32.mrb[0].mxu0
    %707 = vmatprep.mubr.f32.mxu0 0.0
    %708 = vmatmul.mubr.f32.gmra.mrb[0].mxu0 %v629
    %v709 = vpop.f32.mrb[0].mxu0
    %v710 = vadd.f32 0.0, %v709
    %v711 = vpop.f32.mrb[0].mxu0
    %712 = vdwg.mxu0
    %v713 = vsel %vm360, %v198, 0
    %v715 = vsel %vm360, %v307, 0
    %v717 = vsel %vm360, %v309, 0
    %v719 = vsel %vm360, %v297, 0
    %721 = vmatprep.subr.mxu0 0.0
    %722 = vmatpush1.xpose.msra.mxu0 %v719
    %723 = vmatprep.subr.mxu0 0.0
    %724 = vmatpush1.xpose.msra.mxu0 0.0
    %725 = vmatprep.subr.mxu0 0.0
    %726 = vmatpush1.xpose.msra.mxu0 0.0
    %727 = vmatprep.subr.mxu0 0.0
    %728 = vmatpush1.xpose.msra.mxu0 0.0
    %729 = vmatprep.subr.mxu0 0.0
    %730 = vmatpush1.xpose.msra.mxu0 0.0
    %731 = vmatprep.subr.mxu0 0.0
    %732 = vmatpush1.xpose.msra.mxu0 0.0
    %733 = vmatprep.subr.mxu0 0.0
    %734 = vmatpush1.xpose.msra.mxu0 0.0
    %735 = vmatprep.subr.mxu0 0.0
    %736 = vmatpush1.xpose.msra.mxu0 0.0
    %737 = vmatprep.subr.mxu0 0.0
    %738 = vmatpush1.xpose.msra.mxu0 0.0
    %739 = vmatprep.subr.mxu0 0.0
    %740 = vmatpush1.xpose.msra.mxu0 0.0
    %741 = vmatprep.subr.mxu0 0.0
    %742 = vmatpush1.xpose.msra.mxu0 0.0
    %743 = vmatprep.subr.mxu0 0.0
    %744 = vmatpush1.xpose.msra.mxu0 0.0
    %745 = vmatprep.subr.mxu0 0.0
    %746 = vmatpush1.xpose.msra.mxu0 0.0
    %747 = vmatprep.subr.mxu0 0.0
    %748 = vmatpush1.xpose.msra.mxu0 0.0
    %749 = vmatprep.subr.mxu0 0.0
    %750 = vmatpush1.xpose.msra.mxu0 0.0
    %751 = vmatprep.subr.mxu0 0.0
    %752 = vmatpush1.xpose.msra.mxu0 0.0
    %753 = vmatprep.subr.mxu0 0.0
    %754 = vmatpush1.xpose.msra.mxu0 0.0
    %755 = vmatprep.subr.mxu0 0.0
    %756 = vmatpush1.xpose.msra.mxu0 0.0
    %757 = vmatprep.subr.mxu0 0.0
    %758 = vmatpush1.xpose.msra.mxu0 0.0
    %759 = vmatprep.subr.mxu0 0.0
    %760 = vmatpush1.xpose.msra.mxu0 0.0
    %761 = vmatprep.subr.mxu0 0.0
    %762 = vmatpush1.xpose.msra.mxu0 0.0
    %763 = vmatprep.subr.mxu0 0.0
    %764 = vmatpush1.xpose.msra.mxu0 0.0
    %765 = vmatprep.subr.mxu0 0.0
    %766 = vmatpush1.xpose.msra.mxu0 0.0
    %767 = vmatprep.subr.mxu0 0.0
    %768 = vmatpush1.xpose.msra.mxu0 0.0
    %769 = vmatprep.subr.mxu0 0.0
    %770 = vmatpush1.xpose.msra.mxu0 0.0
    %771 = vmatprep.subr.mxu0 0.0
    %772 = vmatpush1.xpose.msra.mxu0 0.0
    %773 = vmatprep.subr.mxu0 0.0
    %774 = vmatpush1.xpose.msra.mxu0 0.0
    %775 = vmatprep.subr.mxu0 0.0
    %776 = vmatpush1.xpose.msra.mxu0 0.0
    %777 = vmatprep.subr.mxu0 0.0
    %778 = vmatpush1.xpose.msra.mxu0 0.0
    %779 = vmatprep.subr.mxu0 0.0
    %780 = vmatpush1.xpose.msra.mxu0 0.0
    %781 = vmatprep.subr.mxu0 0.0
    %782 = vmatpush1.xpose.msra.mxu0 0.0
    %783 = vmatprep.subr.mxu0 0.0
    %784 = vmatpush1.xpose.msra.mxu0 0.0
    %785 = vmatprep.mubr.f32.mxu0 0.0
    %786 = vmatmul.mubr.f32.gmra.mrb[0].mxu0 %v713
    %v787 = vpop.f32.mrb[0].mxu0
    %v788 = vadd.f32 0.0, %v787
    %v789 = vpop.f32.mrb[0].mxu0
    %790 = vmatprep.mubr.f32.mxu0 0.0
    %791 = vmatmul.mubr.f32.gmra.mrb[0].mxu0 %v715
    %v792 = vpop.f32.mrb[0].mxu0
    %v793 = vadd.f32 0.0, %v792
    %v794 = vpop.f32.mrb[0].mxu0
    %795 = vmatprep.mubr.f32.mxu0 0.0
    %796 = vmatmul.mubr.f32.gmra.mrb[0].mxu0 %v717
    %v797 = vpop.f32.mrb[0].mxu0
    %v798 = vadd.f32 0.0, %v797
    %v799 = vpop.f32.mrb[0].mxu0
    %800 = vdwg.mxu0
    %v801 = vsel %vm360, %v329, 0
    %v803 = vsel %vm360, %v331, 0
    %v805 = vsel %vm360, %v333, 0
    %v807 = vsel %vm360, %v355, 0
    %809 = vmatprep.subr.mxu0 0.0
    %810 = vmatpush1.xpose.msra.mxu0 %v807
    %811 = vmatprep.subr.mxu0 0.0
    %812 = vmatpush1.xpose.msra.mxu0 0.0
    %813 = vmatprep.subr.mxu0 0.0
    %814 = vmatpush1.xpose.msra.mxu0 0.0
    %815 = vmatprep.subr.mxu0 0.0
    %816 = vmatpush1.xpose.msra.mxu0 0.0
    %817 = vmatprep.subr.mxu0 0.0
    %818 = vmatpush1.xpose.msra.mxu0 0.0
    %819 = vmatprep.subr.mxu0 0.0
    %820 = vmatpush1.xpose.msra.mxu0 0.0
    %821 = vmatprep.subr.mxu0 0.0
    %822 = vmatpush1.xpose.msra.mxu0 0.0
    %823 = vmatprep.subr.mxu0 0.0
    %824 = vmatpush1.xpose.msra.mxu0 0.0
    %825 = vmatprep.subr.mxu0 0.0
    %826 = vmatpush1.xpose.msra.mxu0 0.0
    %827 = vmatprep.subr.mxu0 0.0
    %828 = vmatpush1.xpose.msra.mxu0 0.0
    %829 = vmatprep.subr.mxu0 0.0
    %830 = vmatpush1.xpose.msra.mxu0 0.0
    %831 = vmatprep.subr.mxu0 0.0
    %832 = vmatpush1.xpose.msra.mxu0 0.0
    %833 = vmatprep.subr.mxu0 0.0
    %834 = vmatpush1.xpose.msra.mxu0 0.0
    %835 = vmatprep.subr.mxu0 0.0
    %836 = vmatpush1.xpose.msra.mxu0 0.0
    %837 = vmatprep.subr.mxu0 0.0
    %838 = vmatpush1.xpose.msra.mxu0 0.0
    %839 = vmatprep.subr.mxu0 0.0
    %840 = vmatpush1.xpose.msra.mxu0 0.0
    %841 = vmatprep.subr.mxu0 0.0
    %842 = vmatpush1.xpose.msra.mxu0 0.0
    %843 = vmatprep.subr.mxu0 0.0
    %844 = vmatpush1.xpose.msra.mxu0 0.0
    %845 = vmatprep.subr.mxu0 0.0
    %846 = vmatpush1.xpose.msra.mxu0 0.0
    %847 = vmatprep.subr.mxu0 0.0
    %848 = vmatpush1.xpose.msra.mxu0 0.0
    %849 = vmatprep.subr.mxu0 0.0
    %850 = vmatpush1.xpose.msra.mxu0 0.0
    %851 = vmatprep.subr.mxu0 0.0
    %852 = vmatpush1.xpose.msra.mxu0 0.0
    %853 = vmatprep.subr.mxu0 0.0
    %854 = vmatpush1.xpose.msra.mxu0 0.0
    %855 = vmatprep.subr.mxu0 0.0
    %856 = vmatpush1.xpose.msra.mxu0 0.0
    %857 = vmatprep.subr.mxu0 0.0
    %858 = vmatpush1.xpose.msra.mxu0 0.0
    %859 = vmatprep.subr.mxu0 0.0
    %860 = vmatpush1.xpose.msra.mxu0 0.0
    %861 = vmatprep.subr.mxu0 0.0
    %862 = vmatpush1.xpose.msra.mxu0 0.0
    %863 = vmatprep.subr.mxu0 0.0
    %864 = vmatpush1.xpose.msra.mxu0 0.0
    %865 = vmatprep.subr.mxu0 0.0
    %866 = vmatpush1.xpose.msra.mxu0 0.0
    %867 = vmatprep.subr.mxu0 0.0
    %868 = vmatpush1.xpose.msra.mxu0 0.0
    %869 = vmatprep.subr.mxu0 0.0
    %870 = vmatpush1.xpose.msra.mxu0 0.0
    %871 = vmatprep.subr.mxu0 0.0
    %872 = vmatpush1.xpose.msra.mxu0 0.0
    %873 = vmatprep.mubr.f32.mxu0 0.0
    %874 = vmatmul.mubr.f32.gmra.mrb[0].mxu0 %v801
    %v875 = vpop.f32.mrb[0].mxu0
    %v876 = vadd.f32 0.0, %v875
    %v877 = vpop.f32.mrb[0].mxu0
    %878 = vmatprep.mubr.f32.mxu0 0.0
    %879 = vmatmul.mubr.f32.gmra.mrb[0].mxu0 %v803
    %v880 = vpop.f32.mrb[0].mxu0
    %v881 = vadd.f32 0.0, %v880
    %v882 = vpop.f32.mrb[0].mxu0
    %883 = vmatprep.mubr.f32.mxu0 0.0
    %884 = vmatmul.mubr.f32.gmra.mrb[0].mxu0 %v805
    %v885 = vpop.f32.mrb[0].mxu0
    %v886 = vadd.f32 0.0, %v885
    %v887 = vpop.f32.mrb[0].mxu0
    %888 = vdwg.mxu0
    %v889 = vsel %vm360, %v335, 0
    %v891 = vsel %vm360, %v337, 0
    %v893 = vsel %vm360, %v339, 0
    %v895 = vsel %vm360, %v357, 0
    %897 = vmatprep.subr.mxu0 0.0
    %898 = vmatpush1.xpose.msra.mxu0 %v895
    %899 = vmatprep.subr.mxu0 0.0
    %900 = vmatpush1.xpose.msra.mxu0 0.0
    %901 = vmatprep.subr.mxu0 0.0
    %902 = vmatpush1.xpose.msra.mxu0 0.0
    %903 = vmatprep.subr.mxu0 0.0
    %904 = vmatpush1.xpose.msra.mxu0 0.0
    %905 = vmatprep.subr.mxu0 0.0
    %906 = vmatpush1.xpose.msra.mxu0 0.0
    %907 = vmatprep.subr.mxu0 0.0
    %908 = vmatpush1.xpose.msra.mxu0 0.0
    %909 = vmatprep.subr.mxu0 0.0
    %910 = vmatpush1.xpose.msra.mxu0 0.0
    %911 = vmatprep.subr.mxu0 0.0
    %912 = vmatpush1.xpose.msra.mxu0 0.0
    %913 = vmatprep.subr.mxu0 0.0
    %914 = vmatpush1.xpose.msra.mxu0 0.0
    %915 = vmatprep.subr.mxu0 0.0
    %916 = vmatpush1.xpose.msra.mxu0 0.0
    %917 = vmatprep.subr.mxu0 0.0
    %918 = vmatpush1.xpose.msra.mxu0 0.0
    %919 = vmatprep.subr.mxu0 0.0
    %920 = vmatpush1.xpose.msra.mxu0 0.0
    %921 = vmatprep.subr.mxu0 0.0
    %922 = vmatpush1.xpose.msra.mxu0 0.0
    %923 = vmatprep.subr.mxu0 0.0
    %924 = vmatpush1.xpose.msra.mxu0 0.0
    %925 = vmatprep.subr.mxu0 0.0
    %926 = vmatpush1.xpose.msra.mxu0 0.0
    %927 = vmatprep.subr.mxu0 0.0
    %928 = vmatpush1.xpose.msra.mxu0 0.0
    %929 = vmatprep.subr.mxu0 0.0
    %930 = vmatpush1.xpose.msra.mxu0 0.0
    %931 = vmatprep.subr.mxu0 0.0
    %932 = vmatpush1.xpose.msra.mxu0 0.0
    %933 = vmatprep.subr.mxu0 0.0
    %934 = vmatpush1.xpose.msra.mxu0 0.0
    %935 = vmatprep.subr.mxu0 0.0
    %936 = vmatpush1.xpose.msra.mxu0 0.0
    %937 = vmatprep.subr.mxu0 0.0
    %938 = vmatpush1.xpose.msra.mxu0 0.0
    %939 = vmatprep.subr.mxu0 0.0
    %940 = vmatpush1.xpose.msra.mxu0 0.0
    %941 = vmatprep.subr.mxu0 0.0
    %942 = vmatpush1.xpose.msra.mxu0 0.0
    %943 = vmatprep.subr.mxu0 0.0
    %944 = vmatpush1.xpose.msra.mxu0 0.0
    %945 = vmatprep.subr.mxu0 0.0
    %946 = vmatpush1.xpose.msra.mxu0 0.0
    %947 = vmatprep.subr.mxu0 0.0
    %948 = vmatpush1.xpose.msra.mxu0 0.0
    %949 = vmatprep.subr.mxu0 0.0
    %950 = vmatpush1.xpose.msra.mxu0 0.0
    %951 = vmatprep.subr.mxu0 0.0
    %952 = vmatpush1.xpose.msra.mxu0 0.0
    %953 = vmatprep.subr.mxu0 0.0
    %954 = vmatpush1.xpose.msra.mxu0 0.0
    %955 = vmatprep.subr.mxu0 0.0
    %956 = vmatpush1.xpose.msra.mxu0 0.0
    %957 = vmatprep.subr.mxu0 0.0
    %958 = vmatpush1.xpose.msra.mxu0 0.0
    %959 = vmatprep.subr.mxu0 0.0
    %960 = vmatpush1.xpose.msra.mxu0 0.0
    %961 = vmatprep.mubr.f32.mxu0 0.0
    %962 = vmatmul.mubr.f32.gmra.mrb[0].mxu0 %v889
    %v963 = vpop.f32.mrb[0].mxu0
    %v964 = vadd.f32 0.0, %v963
    %v965 = vpop.f32.mrb[0].mxu0
    %966 = vmatprep.mubr.f32.mxu0 0.0
    %967 = vmatmul.mubr.f32.gmra.mrb[0].mxu0 %v891
    %v968 = vpop.f32.mrb[0].mxu0
    %v969 = vadd.f32 0.0, %v968
    %v970 = vpop.f32.mrb[0].mxu0
    %971 = vmatprep.mubr.f32.mxu0 0.0
    %972 = vmatmul.mubr.f32.gmra.mrb[0].mxu0 %v893
    %v973 = vpop.f32.mrb[0].mxu0
    %v974 = vadd.f32 0.0, %v973
    %v975 = vpop.f32.mrb[0].mxu0
    %976 = vdwg.mxu0
    %v977 = vsel %vm360, %v341, 0
    %v979 = vsel %vm360, %v343, 0
    %v981 = vsel %vm360, %v345, 0
    %v983 = vsel %vm360, %v359, 0
    %985 = vmatprep.subr.mxu0 0.0
    %986 = vmatpush1.xpose.msra.mxu0 %v983
    %987 = vmatprep.subr.mxu0 0.0
    %988 = vmatpush1.xpose.msra.mxu0 0.0
    %989 = vmatprep.subr.mxu0 0.0
    %990 = vmatpush1.xpose.msra.mxu0 0.0
    %991 = vmatprep.subr.mxu0 0.0
    %992 = vmatpush1.xpose.msra.mxu0 0.0
    %993 = vmatprep.subr.mxu0 0.0
    %994 = vmatpush1.xpose.msra.mxu0 0.0
    %995 = vmatprep.subr.mxu0 0.0
    %996 = vmatpush1.xpose.msra.mxu0 0.0
    %997 = vmatprep.subr.mxu0 0.0
    %998 = vmatpush1.xpose.msra.mxu0 0.0
    %999 = vmatprep.subr.mxu0 0.0
    %1000 = vmatpush1.xpose.msra.mxu0 0.0
    %1001 = vmatprep.subr.mxu0 0.0
    %1002 = vmatpush1.xpose.msra.mxu0 0.0
    %1003 = vmatprep.subr.mxu0 0.0
    %1004 = vmatpush1.xpose.msra.mxu0 0.0
    %1005 = vmatprep.subr.mxu0 0.0
    %1006 = vmatpush1.xpose.msra.mxu0 0.0
    %1007 = vmatprep.subr.mxu0 0.0
    %1008 = vmatpush1.xpose.msra.mxu0 0.0
    %1009 = vmatprep.subr.mxu0 0.0
    %1010 = vmatpush1.xpose.msra.mxu0 0.0
    %1011 = vmatprep.subr.mxu0 0.0
    %1012 = vmatpush1.xpose.msra.mxu0 0.0
    %1013 = vmatprep.subr.mxu0 0.0
    %1014 = vmatpush1.xpose.msra.mxu0 0.0
    %1015 = vmatprep.subr.mxu0 0.0
    %1016 = vmatpush1.xpose.msra.mxu0 0.0
    %1017 = vmatprep.subr.mxu0 0.0
    %1018 = vmatpush1.xpose.msra.mxu0 0.0
    %1019 = vmatprep.subr.mxu0 0.0
    %1020 = vmatpush1.xpose.msra.mxu0 0.0
    %1021 = vmatprep.subr.mxu0 0.0
    %1022 = vmatpush1.xpose.msra.mxu0 0.0
    %1023 = vmatprep.subr.mxu0 0.0
    %1024 = vmatpush1.xpose.msra.mxu0 0.0
    %1025 = vmatprep.subr.mxu0 0.0
    %1026 = vmatpush1.xpose.msra.mxu0 0.0
    %1027 = vmatprep.subr.mxu0 0.0
    %1028 = vmatpush1.xpose.msra.mxu0 0.0
    %1029 = vmatprep.subr.mxu0 0.0
    %1030 = vmatpush1.xpose.msra.mxu0 0.0
    %1031 = vmatprep.subr.mxu0 0.0
    %1032 = vmatpush1.xpose.msra.mxu0 0.0
    %1033 = vmatprep.subr.mxu0 0.0
    %1034 = vmatpush1.xpose.msra.mxu0 0.0
    %1035 = vmatprep.subr.mxu0 0.0
    %1036 = vmatpush1.xpose.msra.mxu0 0.0
    %1037 = vmatprep.subr.mxu0 0.0
    %1038 = vmatpush1.xpose.msra.mxu0 0.0
    %1039 = vmatprep.subr.mxu0 0.0
    %1040 = vmatpush1.xpose.msra.mxu0 0.0
    %1041 = vmatprep.subr.mxu0 0.0
    %1042 = vmatpush1.xpose.msra.mxu0 0.0
    %1043 = vmatprep.subr.mxu0 0.0
    %1044 = vmatpush1.xpose.msra.mxu0 0.0
    %1045 = vmatprep.subr.mxu0 0.0
    %1046 = vmatpush1.xpose.msra.mxu0 0.0
    %1047 = vmatprep.subr.mxu0 0.0
    %1048 = vmatpush1.xpose.msra.mxu0 0.0
    %1049 = vmatprep.mubr.f32.mxu0 0.0
    %1050 = vmatmul.mubr.f32.gmra.mrb[0].mxu0 %v977
    %v1051 = vpop.f32.mrb[0].mxu0
    %v1052 = vadd.f32 0.0, %v1051
    %v1053 = vpop.f32.mrb[0].mxu0
    %1054 = vmatprep.mubr.f32.mxu0 0.0
    %1055 = vmatmul.mubr.f32.gmra.mrb[0].mxu0 %v979
    %v1056 = vpop.f32.mrb[0].mxu0
    %v1057 = vadd.f32 0.0, %v1056
    %v1058 = vpop.f32.mrb[0].mxu0
    %1059 = vmatprep.mubr.f32.mxu0 0.0
    %1060 = vmatmul.mubr.f32.gmra.mrb[0].mxu0 %v981
    %v1061 = vpop.f32.mrb[0].mxu0
    %v1062 = vadd.f32 0.0, %v1061
    %v1063 = vpop.f32.mrb[0].mxu0
    %1064 = vdwg.mxu0
    %v1065 = vmul.f32 %v436, 0.17677669
    %v1066 = vmul.f32 %v441, 0.17677669
    %v1067 = vmul.f32 %v446, 0.17677669
    %v1068 = vmul.f32 %v524, 0.17677669
    %v1069 = vmul.f32 %v529, 0.17677669
    %v1070 = vmul.f32 %v534, 0.17677669
    %v1071 = vmul.f32 %v612, 0.17677669
    %v1072 = vmul.f32 %v617, 0.17677669
    %v1073 = vmul.f32 %v622, 0.17677669
    %v1074 = vmul.f32 %v700, 0.17677669
    %v1075 = vmul.f32 %v705, 0.17677669
    %v1076 = vmul.f32 %v710, 0.17677669
    %v1077 = vmul.f32 %v788, 0.17677669
    %v1078 = vmul.f32 %v793, 0.17677669
    %v1079 = vmul.f32 %v798, 0.17677669
    %v1080 = vmul.f32 %v876, 0.17677669
    %v1081 = vmul.f32 %v881, 0.17677669
    %v1082 = vmul.f32 %v886, 0.17677669
    %v1083 = vmul.f32 %v964, 0.17677669
    %v1084 = vmul.f32 %v969, 0.17677669
    %v1085 = vmul.f32 %v974, 0.17677669
    %v1086 = vmul.f32 %v1052, 0.17677669
    %v1087 = vmul.f32 %v1057, 0.17677669
    %v1088 = vmul.f32 %v1062, 0.17677669
    %v1089 = vsel %vm360, %v1065, -inf
    %1090 = vmax.xlane.f32.xlu0 %v1089
    %v1091 = vpop.xlane.xlu0 %1090
    %v1092 = vsel %vm360, %v1068, -inf
    %1093 = vmax.xlane.f32.xlu0 %v1092
    %v1094 = vpop.xlane.xlu0 %1093
    %v1095 = vsel %vm360, %v1071, -inf
    %1096 = vmax.xlane.f32.xlu0 %v1095
    %v1097 = vpop.xlane.xlu0 %1096
    %v1098 = vsel %vm360, %v1074, -inf
    %1099 = vmax.xlane.f32.xlu0 %v1098
    %v1100 = vpop.xlane.xlu0 %1099
    %v1101 = vsel %vm360, %v1077, -inf
    %1102 = vmax.xlane.f32.xlu0 %v1101
    %v1103 = vpop.xlane.xlu0 %1102
    %v1104 = vsel %vm360, %v1080, -inf
    %1105 = vmax.xlane.f32.xlu0 %v1104
    %v1106 = vpop.xlane.xlu0 %1105
    %v1107 = vsel %vm360, %v1083, -inf
    %1108 = vmax.xlane.f32.xlu0 %v1107
    %v1109 = vpop.xlane.xlu0 %1108
    %v1110 = vsel %vm360, %v1086, -inf
    %1111 = vmax.xlane.f32.xlu0 %v1110
    %v1112 = vpop.xlane.xlu0 %1111
    %v1113 = vsel %vm360, %v1066, -inf
    %1114 = vmax.xlane.f32.xlu0 %v1113
    %v1115 = vpop.xlane.xlu0 %1114
    %v1116 = vsel %vm360, %v1069, -inf
    %1117 = vmax.xlane.f32.xlu0 %v1116
    %v1118 = vpop.xlane.xlu0 %1117
    %v1119 = vsel %vm360, %v1072, -inf
    %1120 = vmax.xlane.f32.xlu0 %v1119
    %v1121 = vpop.xlane.xlu0 %1120
    %v1122 = vsel %vm360, %v1075, -inf
    %1123 = vmax.xlane.f32.xlu0 %v1122
    %v1124 = vpop.xlane.xlu0 %1123
    %v1125 = vsel %vm360, %v1078, -inf
    %1126 = vmax.xlane.f32.xlu0 %v1125
    %v1127 = vpop.xlane.xlu0 %1126
    %v1128 = vsel %vm360, %v1081, -inf
    %1129 = vmax.xlane.f32.xlu0 %v1128
    %v1130 = vpop.xlane.xlu0 %1129
    %v1131 = vsel %vm360, %v1084, -inf
    %1132 = vmax.xlane.f32.xlu0 %v1131
    %v1133 = vpop.xlane.xlu0 %1132
    %v1134 = vsel %vm360, %v1087, -inf
    %1135 = vmax.xlane.f32.xlu0 %v1134
    %v1136 = vpop.xlane.xlu0 %1135
    %v1137 = vsel %vm360, %v1067, -inf
    %1138 = vmax.xlane.f32.xlu0 %v1137
    %v1139 = vpop.xlane.xlu0 %1138
    %v1140 = vsel %vm360, %v1070, -inf
    %1141 = vmax.xlane.f32.xlu0 %v1140
    %v1142 = vpop.xlane.xlu0 %1141
    %v1143 = vsel %vm360, %v1073, -inf
    %1144 = vmax.xlane.f32.xlu0 %v1143
    %v1145 = vpop.xlane.xlu0 %1144
    %v1146 = vsel %vm360, %v1076, -inf
    %1147 = vmax.xlane.f32.xlu0 %v1146
    %v1148 = vpop.xlane.xlu0 %1147
    %v1149 = vsel %vm360, %v1079, -inf
    %1150 = vmax.xlane.f32.xlu0 %v1149
    %v1151 = vpop.xlane.xlu0 %1150
    %v1152 = vsel %vm360, %v1082, -inf
    %1153 = vmax.xlane.f32.xlu0 %v1152
    %v1154 = vpop.xlane.xlu0 %1153
    %v1155 = vsel %vm360, %v1085, -inf
    %1156 = vmax.xlane.f32.xlu0 %v1155
    %v1157 = vpop.xlane.xlu0 %1156
    %v1158 = vsel %vm360, %v1088, -inf
    %1159 = vmax.xlane.f32.xlu0 %v1158
    %v1160 = vpop.xlane.xlu0 %1159
    %v1161 = vrot.slane %v1091, 4
    %v1162 = vmax.f32 %v1091, %v1161
    %v1163 = vrot.slane %v1162, 2
    %v1164 = vmax.f32 %v1162, %v1163
    %v1165 = vrot.slane %v1164, 1
    %v1166 = vmax.f32 %v1164, %v1165
    %v1167 = vrot.slane %v1094, 4
    %v1168 = vmax.f32 %v1094, %v1167
    %v1169 = vrot.slane %v1168, 2
    %v1170 = vmax.f32 %v1168, %v1169
    %v1171 = vrot.slane %v1170, 1
    %v1172 = vmax.f32 %v1170, %v1171
    %v1173 = vrot.slane %v1097, 4
    %v1174 = vmax.f32 %v1097, %v1173
    %v1175 = vrot.slane %v1174, 2
    %v1176 = vmax.f32 %v1174, %v1175
    %v1177 = vrot.slane %v1176, 1
    %v1178 = vmax.f32 %v1176, %v1177
    %v1179 = vrot.slane %v1100, 4
    %v1180 = vmax.f32 %v1100, %v1179
    %v1181 = vrot.slane %v1180, 2
    %v1182 = vmax.f32 %v1180, %v1181
    %v1183 = vrot.slane %v1182, 1
    %v1184 = vmax.f32 %v1182, %v1183
    %v1185 = vrot.slane %v1103, 4
    %v1186 = vmax.f32 %v1103, %v1185
    %v1187 = vrot.slane %v1186, 2
    %v1188 = vmax.f32 %v1186, %v1187
    %v1189 = vrot.slane %v1188, 1
    %v1190 = vmax.f32 %v1188, %v1189
    %v1191 = vrot.slane %v1106, 4
    %v1192 = vmax.f32 %v1106, %v1191
    %v1193 = vrot.slane %v1192, 2
    %v1194 = vmax.f32 %v1192, %v1193
    %v1195 = vrot.slane %v1194, 1
    %v1196 = vmax.f32 %v1194, %v1195
    %v1197 = vrot.slane %v1109, 4
    %v1198 = vmax.f32 %v1109, %v1197
    %v1199 = vrot.slane %v1198, 2
    %v1200 = vmax.f32 %v1198, %v1199
    %v1201 = vrot.slane %v1200, 1
    %v1202 = vmax.f32 %v1200, %v1201
    %v1203 = vrot.slane %v1112, 4
    %v1204 = vmax.f32 %v1112, %v1203
    %v1205 = vrot.slane %v1204, 2
    %v1206 = vmax.f32 %v1204, %v1205
    %v1207 = vrot.slane %v1206, 1
    %v1208 = vmax.f32 %v1206, %v1207
    %v1209 = vrot.slane %v1115, 4
    %v1210 = vmax.f32 %v1115, %v1209
    %v1211 = vrot.slane %v1210, 2
    %v1212 = vmax.f32 %v1210, %v1211
    %v1213 = vrot.slane %v1212, 1
    %v1214 = vmax.f32 %v1212, %v1213
    %v1215 = vrot.slane %v1118, 4
    %v1216 = vmax.f32 %v1118, %v1215
    %v1217 = vrot.slane %v1216, 2
    %v1218 = vmax.f32 %v1216, %v1217
    %v1219 = vrot.slane %v1218, 1
    %v1220 = vmax.f32 %v1218, %v1219
    %v1221 = vrot.slane %v1121, 4
    %v1222 = vmax.f32 %v1121, %v1221
    %v1223 = vrot.slane %v1222, 2
    %v1224 = vmax.f32 %v1222, %v1223
    %v1225 = vrot.slane %v1224, 1
    %v1226 = vmax.f32 %v1224, %v1225
    %v1227 = vrot.slane %v1124, 4
    %v1228 = vmax.f32 %v1124, %v1227
    %v1229 = vrot.slane %v1228, 2
    %v1230 = vmax.f32 %v1228, %v1229
    %v1231 = vrot.slane %v1230, 1
    %v1232 = vmax.f32 %v1230, %v1231
    %v1233 = vrot.slane %v1127, 4
    %v1234 = vmax.f32 %v1127, %v1233
    %v1235 = vrot.slane %v1234, 2
    %v1236 = vmax.f32 %v1234, %v1235
    %v1237 = vrot.slane %v1236, 1
    %v1238 = vmax.f32 %v1236, %v1237
    %v1239 = vrot.slane %v1130, 4
    %v1240 = vmax.f32 %v1130, %v1239
    %v1241 = vrot.slane %v1240, 2
    %v1242 = vmax.f32 %v1240, %v1241
    %v1243 = vrot.slane %v1242, 1
    %v1244 = vmax.f32 %v1242, %v1243
    %v1245 = vrot.slane %v1133, 4
    %v1246 = vmax.f32 %v1133, %v1245
    %v1247 = vrot.slane %v1246, 2
    %v1248 = vmax.f32 %v1246, %v1247
    %v1249 = vrot.slane %v1248, 1
    %v1250 = vmax.f32 %v1248, %v1249
    %v1251 = vrot.slane %v1136, 4
    %v1252 = vmax.f32 %v1136, %v1251
    %v1253 = vrot.slane %v1252, 2
    %v1254 = vmax.f32 %v1252, %v1253
    %v1255 = vrot.slane %v1254, 1
    %v1256 = vmax.f32 %v1254, %v1255
    %v1257 = vrot.slane %v1139, 4
    %v1258 = vmax.f32 %v1139, %v1257
    %v1259 = vrot.slane %v1258, 2
    %v1260 = vmax.f32 %v1258, %v1259
    %v1261 = vrot.slane %v1260, 1
    %v1262 = vmax.f32 %v1260, %v1261
    %v1263 = vrot.slane %v1142, 4
    %v1264 = vmax.f32 %v1142, %v1263
    %v1265 = vrot.slane %v1264, 2
    %v1266 = vmax.f32 %v1264, %v1265
    %v1267 = vrot.slane %v1266, 1
    %v1268 = vmax.f32 %v1266, %v1267
    %v1269 = vrot.slane %v1145, 4
    %v1270 = vmax.f32 %v1145, %v1269
    %v1271 = vrot.slane %v1270, 2
    %v1272 = vmax.f32 %v1270, %v1271
    %v1273 = vrot.slane %v1272, 1
    %v1274 = vmax.f32 %v1272, %v1273
    %v1275 = vrot.slane %v1148, 4
    %v1276 = vmax.f32 %v1148, %v1275
    %v1277 = vrot.slane %v1276, 2
    %v1278 = vmax.f32 %v1276, %v1277
    %v1279 = vrot.slane %v1278, 1
    %v1280 = vmax.f32 %v1278, %v1279
    %v1281 = vrot.slane %v1151, 4
    %v1282 = vmax.f32 %v1151, %v1281
    %v1283 = vrot.slane %v1282, 2
    %v1284 = vmax.f32 %v1282, %v1283
    %v1285 = vrot.slane %v1284, 1
    %v1286 = vmax.f32 %v1284, %v1285
    %v1287 = vrot.slane %v1154, 4
    %v1288 = vmax.f32 %v1154, %v1287
    %v1289 = vrot.slane %v1288, 2
    %v1290 = vmax.f32 %v1288, %v1289
    %v1291 = vrot.slane %v1290, 1
    %v1292 = vmax.f32 %v1290, %v1291
    %v1293 = vrot.slane %v1157, 4
    %v1294 = vmax.f32 %v1157, %v1293
    %v1295 = vrot.slane %v1294, 2
    %v1296 = vmax.f32 %v1294, %v1295
    %v1297 = vrot.slane %v1296, 1
    %v1298 = vmax.f32 %v1296, %v1297
    %v1299 = vrot.slane %v1160, 4
    %v1300 = vmax.f32 %v1160, %v1299
    %v1301 = vrot.slane %v1300, 2
    %v1302 = vmax.f32 %v1300, %v1301
    %v1303 = vrot.slane %v1302, 1
    %v1304 = vmax.f32 %v1302, %v1303
    %v1305 = vsub.f32 %v1065, %v1166
    %v1306 = vsub.f32 %v1068, %v1172
    %v1307 = vsub.f32 %v1071, %v1178
    %v1308 = vsub.f32 %v1074, %v1184
    %v1309 = vsub.f32 %v1077, %v1190
    %v1310 = vsub.f32 %v1080, %v1196
    %v1311 = vsub.f32 %v1083, %v1202
    %v1312 = vsub.f32 %v1086, %v1208
    %v1313 = vsub.f32 %v1066, %v1214
    %v1314 = vsub.f32 %v1069, %v1220
    %v1315 = vsub.f32 %v1072, %v1226
    %v1316 = vsub.f32 %v1075, %v1232
    %v1317 = vsub.f32 %v1078, %v1238
    %v1318 = vsub.f32 %v1081, %v1244
    %v1319 = vsub.f32 %v1084, %v1250
    %v1320 = vsub.f32 %v1087, %v1256
    %v1321 = vsub.f32 %v1067, %v1262
    %v1322 = vsub.f32 %v1070, %v1268
    %v1323 = vsub.f32 %v1073, %v1274
    %v1324 = vsub.f32 %v1076, %v1280
    %v1325 = vsub.f32 %v1079, %v1286
    %v1326 = vsub.f32 %v1082, %v1292
    %v1327 = vsub.f32 %v1085, %v1298
    %v1328 = vsub.f32 %v1088, %v1304
    %v1329 = vmul.f32 %v1305, 1.442695
    %v1330 = vpow.pop %v1329
    %v1331 = vmul.f32 %v1306, 1.442695
    %v1332 = vpow.pop %v1331
    %v1333 = vmul.f32 %v1307, 1.442695
    %v1334 = vpow.pop %v1333
    %v1335 = vmul.f32 %v1308, 1.442695
    %v1336 = vpow.pop %v1335
    %v1337 = vmul.f32 %v1309, 1.442695
    %v1338 = vpow.pop %v1337
    %v1339 = vmul.f32 %v1310, 1.442695
    %v1340 = vpow.pop %v1339
    %v1341 = vmul.f32 %v1311, 1.442695
    %v1342 = vpow.pop %v1341
    %v1343 = vmul.f32 %v1312, 1.442695
    %v1344 = vpow.pop %v1343
    %v1345 = vmul.f32 %v1313, 1.442695
    %v1346 = vpow.pop %v1345
    %v1347 = vmul.f32 %v1314, 1.442695
    %v1348 = vpow.pop %v1347
    %v1349 = vmul.f32 %v1315, 1.442695
    %v1350 = vpow.pop %v1349
    %v1351 = vmul.f32 %v1316, 1.442695
    %v1352 = vpow.pop %v1351
    %v1353 = vmul.f32 %v1317, 1.442695
    %v1354 = vpow.pop %v1353
    %v1355 = vmul.f32 %v1318, 1.442695
    %v1356 = vpow.pop %v1355
    %v1357 = vmul.f32 %v1319, 1.442695
    %v1358 = vpow.pop %v1357
    %v1359 = vmul.f32 %v1320, 1.442695
    %v1360 = vpow.pop %v1359
    %v1361 = vmul.f32 %v1321, 1.442695
    %v1362 = vpow.pop %v1361
    %v1363 = vmul.f32 %v1322, 1.442695
    %v1364 = vpow.pop %v1363
    %v1365 = vmul.f32 %v1323, 1.442695
    %v1366 = vpow.pop %v1365
    %v1367 = vmul.f32 %v1324, 1.442695
    %v1368 = vpow.pop %v1367
    %v1369 = vmul.f32 %v1325, 1.442695
    %v1370 = vpow.pop %v1369
    %v1371 = vmul.f32 %v1326, 1.442695
    %v1372 = vpow.pop %v1371
    %v1373 = vmul.f32 %v1327, 1.442695
    %v1374 = vpow.pop %v1373
    %v1375 = vmul.f32 %v1328, 1.442695
    %v1376 = vpow.pop %v1375
    %v1377 = vsel %vm360, %v1330, 0.0
    %1378 = vadd.xlane.f32.xlu0 %v1377
    %v1379 = vpop.xlane.xlu0 %1378
    %v1380 = vsel %vm360, %v1332, 0.0
    %1381 = vadd.xlane.f32.xlu0 %v1380
    %v1382 = vpop.xlane.xlu0 %1381
    %v1383 = vsel %vm360, %v1334, 0.0
    %1384 = vadd.xlane.f32.xlu0 %v1383
    %v1385 = vpop.xlane.xlu0 %1384
    %v1386 = vsel %vm360, %v1336, 0.0
    %1387 = vadd.xlane.f32.xlu0 %v1386
    %v1388 = vpop.xlane.xlu0 %1387
    %v1389 = vsel %vm360, %v1338, 0.0
    %1390 = vadd.xlane.f32.xlu0 %v1389
    %v1391 = vpop.xlane.xlu0 %1390
    %v1392 = vsel %vm360, %v1340, 0.0
    %1393 = vadd.xlane.f32.xlu0 %v1392
    %v1394 = vpop.xlane.xlu0 %1393
    %v1395 = vsel %vm360, %v1342, 0.0
    %1396 = vadd.xlane.f32.xlu0 %v1395
    %v1397 = vpop.xlane.xlu0 %1396
    %v1398 = vsel %vm360, %v1344, 0.0
    %1399 = vadd.xlane.f32.xlu0 %v1398
    %v1400 = vpop.xlane.xlu0 %1399
    %v1401 = vsel %vm360, %v1346, 0.0
    %1402 = vadd.xlane.f32.xlu0 %v1401
    %v1403 = vpop.xlane.xlu0 %1402
    %v1404 = vsel %vm360, %v1348, 0.0
    %1405 = vadd.xlane.f32.xlu0 %v1404
    %v1406 = vpop.xlane.xlu0 %1405
    %v1407 = vsel %vm360, %v1350, 0.0
    %1408 = vadd.xlane.f32.xlu0 %v1407
    %v1409 = vpop.xlane.xlu0 %1408
    %v1410 = vsel %vm360, %v1352, 0.0
    %1411 = vadd.xlane.f32.xlu0 %v1410
    %v1412 = vpop.xlane.xlu0 %1411
    %v1413 = vsel %vm360, %v1354, 0.0
    %1414 = vadd.xlane.f32.xlu0 %v1413
    %v1415 = vpop.xlane.xlu0 %1414
    %v1416 = vsel %vm360, %v1356, 0.0
    %1417 = vadd.xlane.f32.xlu0 %v1416
    %v1418 = vpop.xlane.xlu0 %1417
    %v1419 = vsel %vm360, %v1358, 0.0
    %1420 = vadd.xlane.f32.xlu0 %v1419
    %v1421 = vpop.xlane.xlu0 %1420
    %v1422 = vsel %vm360, %v1360, 0.0
    %1423 = vadd.xlane.f32.xlu0 %v1422
    %v1424 = vpop.xlane.xlu0 %1423
    %v1425 = vsel %vm360, %v1362, 0.0
    %1426 = vadd.xlane.f32.xlu0 %v1425
    %v1427 = vpop.xlane.xlu0 %1426
    %v1428 = vsel %vm360, %v1364, 0.0
    %1429 = vadd.xlane.f32.xlu0 %v1428
    %v1430 = vpop.xlane.xlu0 %1429
    %v1431 = vsel %vm360, %v1366, 0.0
    %1432 = vadd.xlane.f32.xlu0 %v1431
    %v1433 = vpop.xlane.xlu0 %1432
    %v1434 = vsel %vm360, %v1368, 0.0
    %1435 = vadd.xlane.f32.xlu0 %v1434
    %v1436 = vpop.xlane.xlu0 %1435
    %v1437 = vsel %vm360, %v1370, 0.0
    %1438 = vadd.xlane.f32.xlu0 %v1437
    %v1439 = vpop.xlane.xlu0 %1438
    %v1440 = vsel %vm360, %v1372, 0.0
    %1441 = vadd.xlane.f32.xlu0 %v1440
    %v1442 = vpop.xlane.xlu0 %1441
    %v1443 = vsel %vm360, %v1374, 0.0
    %1444 = vadd.xlane.f32.xlu0 %v1443
    %v1445 = vpop.xlane.xlu0 %1444
    %v1446 = vsel %vm360, %v1376, 0.0
    %1447 = vadd.xlane.f32.xlu0 %v1446
    %v1448 = vpop.xlane.xlu0 %1447
    %v1449 = vrot.slane %v1379, 4
    %v1450 = vadd.f32 %v1379, %v1449
    %v1451 = vrot.slane %v1450, 2
    %v1452 = vadd.f32 %v1450, %v1451
    %v1453 = vrot.slane %v1452, 1
    %v1454 = vadd.f32 %v1452, %v1453
    %v1455 = vrot.slane %v1382, 4
    %v1456 = vadd.f32 %v1382, %v1455
    %v1457 = vrot.slane %v1456, 2
    %v1458 = vadd.f32 %v1456, %v1457
    %v1459 = vrot.slane %v1458, 1
    %v1460 = vadd.f32 %v1458, %v1459
    %v1461 = vrot.slane %v1385, 4
    %v1462 = vadd.f32 %v1385, %v1461
    %v1463 = vrot.slane %v1462, 2
    %v1464 = vadd.f32 %v1462, %v1463
    %v1465 = vrot.slane %v1464, 1
    %v1466 = vadd.f32 %v1464, %v1465
    %v1467 = vrot.slane %v1388, 4
    %v1468 = vadd.f32 %v1388, %v1467
    %v1469 = vrot.slane %v1468, 2
    %v1470 = vadd.f32 %v1468, %v1469
    %v1471 = vrot.slane %v1470, 1
    %v1472 = vadd.f32 %v1470, %v1471
    %v1473 = vrot.slane %v1391, 4
    %v1474 = vadd.f32 %v1391, %v1473
    %v1475 = vrot.slane %v1474, 2
    %v1476 = vadd.f32 %v1474, %v1475
    %v1477 = vrot.slane %v1476, 1
    %v1478 = vadd.f32 %v1476, %v1477
    %v1479 = vrot.slane %v1394, 4
    %v1480 = vadd.f32 %v1394, %v1479
    %v1481 = vrot.slane %v1480, 2
    %v1482 = vadd.f32 %v1480, %v1481
    %v1483 = vrot.slane %v1482, 1
    %v1484 = vadd.f32 %v1482, %v1483
    %v1485 = vrot.slane %v1397, 4
    %v1486 = vadd.f32 %v1397, %v1485
    %v1487 = vrot.slane %v1486, 2
    %v1488 = vadd.f32 %v1486, %v1487
    %v1489 = vrot.slane %v1488, 1
    %v1490 = vadd.f32 %v1488, %v1489
    %v1491 = vrot.slane %v1400, 4
    %v1492 = vadd.f32 %v1400, %v1491
    %v1493 = vrot.slane %v1492, 2
    %v1494 = vadd.f32 %v1492, %v1493
    %v1495 = vrot.slane %v1494, 1
    %v1496 = vadd.f32 %v1494, %v1495
    %v1497 = vrot.slane %v1403, 4
    %v1498 = vadd.f32 %v1403, %v1497
    %v1499 = vrot.slane %v1498, 2
    %v1500 = vadd.f32 %v1498, %v1499
    %v1501 = vrot.slane %v1500, 1
    %v1502 = vadd.f32 %v1500, %v1501
    %v1503 = vrot.slane %v1406, 4
    %v1504 = vadd.f32 %v1406, %v1503
    %v1505 = vrot.slane %v1504, 2
    %v1506 = vadd.f32 %v1504, %v1505
    %v1507 = vrot.slane %v1506, 1
    %v1508 = vadd.f32 %v1506, %v1507
    %v1509 = vrot.slane %v1409, 4
    %v1510 = vadd.f32 %v1409, %v1509
    %v1511 = vrot.slane %v1510, 2
    %v1512 = vadd.f32 %v1510, %v1511
    %v1513 = vrot.slane %v1512, 1
    %v1514 = vadd.f32 %v1512, %v1513
    %v1515 = vrot.slane %v1412, 4
    %v1516 = vadd.f32 %v1412, %v1515
    %v1517 = vrot.slane %v1516, 2
    %v1518 = vadd.f32 %v1516, %v1517
    %v1519 = vrot.slane %v1518, 1
    %v1520 = vadd.f32 %v1518, %v1519
    %v1521 = vrot.slane %v1415, 4
    %v1522 = vadd.f32 %v1415, %v1521
    %v1523 = vrot.slane %v1522, 2
    %v1524 = vadd.f32 %v1522, %v1523
    %v1525 = vrot.slane %v1524, 1
    %v1526 = vadd.f32 %v1524, %v1525
    %v1527 = vrot.slane %v1418, 4
    %v1528 = vadd.f32 %v1418, %v1527
    %v1529 = vrot.slane %v1528, 2
    %v1530 = vadd.f32 %v1528, %v1529
    %v1531 = vrot.slane %v1530, 1
    %v1532 = vadd.f32 %v1530, %v1531
    %v1533 = vrot.slane %v1421, 4
    %v1534 = vadd.f32 %v1421, %v1533
    %v1535 = vrot.slane %v1534, 2
    %v1536 = vadd.f32 %v1534, %v1535
    %v1537 = vrot.slane %v1536, 1
    %v1538 = vadd.f32 %v1536, %v1537
    %v1539 = vrot.slane %v1424, 4
    %v1540 = vadd.f32 %v1424, %v1539
    %v1541 = vrot.slane %v1540, 2
    %v1542 = vadd.f32 %v1540, %v1541
    %v1543 = vrot.slane %v1542, 1
    %v1544 = vadd.f32 %v1542, %v1543
    %v1545 = vrot.slane %v1427, 4
    %v1546 = vadd.f32 %v1427, %v1545
    %v1547 = vrot.slane %v1546, 2
    %v1548 = vadd.f32 %v1546, %v1547
    %v1549 = vrot.slane %v1548, 1
    %v1550 = vadd.f32 %v1548, %v1549
    %v1551 = vrot.slane %v1430, 4
    %v1552 = vadd.f32 %v1430, %v1551
    %v1553 = vrot.slane %v1552, 2
    %v1554 = vadd.f32 %v1552, %v1553
    %v1555 = vrot.slane %v1554, 1
    %v1556 = vadd.f32 %v1554, %v1555
    %v1557 = vrot.slane %v1433, 4
    %v1558 = vadd.f32 %v1433, %v1557
    %v1559 = vrot.slane %v1558, 2
    %v1560 = vadd.f32 %v1558, %v1559
    %v1561 = vrot.slane %v1560, 1
    %v1562 = vadd.f32 %v1560, %v1561
    %v1563 = vrot.slane %v1436, 4
    %v1564 = vadd.f32 %v1436, %v1563
    %v1565 = vrot.slane %v1564, 2
    %v1566 = vadd.f32 %v1564, %v1565
    %v1567 = vrot.slane %v1566, 1
    %v1568 = vadd.f32 %v1566, %v1567
    %v1569 = vrot.slane %v1439, 4
    %v1570 = vadd.f32 %v1439, %v1569
    %v1571 = vrot.slane %v1570, 2
    %v1572 = vadd.f32 %v1570, %v1571
    %v1573 = vrot.slane %v1572, 1
    %v1574 = vadd.f32 %v1572, %v1573
    %v1575 = vrot.slane %v1442, 4
    %v1576 = vadd.f32 %v1442, %v1575
    %v1577 = vrot.slane %v1576, 2
    %v1578 = vadd.f32 %v1576, %v1577
    %v1579 = vrot.slane %v1578, 1
    %v1580 = vadd.f32 %v1578, %v1579
    %v1581 = vrot.slane %v1445, 4
    %v1582 = vadd.f32 %v1445, %v1581
    %v1583 = vrot.slane %v1582, 2
    %v1584 = vadd.f32 %v1582, %v1583
    %v1585 = vrot.slane %v1584, 1
    %v1586 = vadd.f32 %v1584, %v1585
    %v1587 = vrot.slane %v1448, 4
    %v1588 = vadd.f32 %v1448, %v1587
    %v1589 = vrot.slane %v1588, 2
    %v1590 = vadd.f32 %v1588, %v1589
    %v1591 = vrot.slane %v1590, 1
    %v1592 = vadd.f32 %v1590, %v1591
    %v1593 = vrcp.pop %v1454
    %v1594 = vmul.f32 8.0, %v1593
    %v1595 = vrcp.pop %v1460
    %v1596 = vmul.f32 8.0, %v1595
    %v1597 = vrcp.pop %v1466
    %v1598 = vmul.f32 8.0, %v1597
    %v1599 = vrcp.pop %v1472
    %v1600 = vmul.f32 8.0, %v1599
    %v1601 = vrcp.pop %v1478
    %v1602 = vmul.f32 8.0, %v1601
    %v1603 = vrcp.pop %v1484
    %v1604 = vmul.f32 8.0, %v1603
    %v1605 = vrcp.pop %v1490
    %v1606 = vmul.f32 8.0, %v1605
    %v1607 = vrcp.pop %v1496
    %v1608 = vmul.f32 8.0, %v1607
    %v1609 = vrcp.pop %v1502
    %v1610 = vmul.f32 8.0, %v1609
    %v1611 = vrcp.pop %v1508
    %v1612 = vmul.f32 8.0, %v1611
    %v1613 = vrcp.pop %v1514
    %v1614 = vmul.f32 8.0, %v1613
    %v1615 = vrcp.pop %v1520
    %v1616 = vmul.f32 8.0, %v1615
    %v1617 = vrcp.pop %v1526
    %v1618 = vmul.f32 8.0, %v1617
    %v1619 = vrcp.pop %v1532
    %v1620 = vmul.f32 8.0, %v1619
    %v1621 = vrcp.pop %v1538
    %v1622 = vmul.f32 8.0, %v1621
    %v1623 = vrcp.pop %v1544
    %v1624 = vmul.f32 8.0, %v1623
    %v1625 = vrcp.pop %v1550
    %v1626 = vmul.f32 8.0, %v1625
    %v1627 = vrcp.pop %v1556
    %v1628 = vmul.f32 8.0, %v1627
    %v1629 = vrcp.pop %v1562
    %v1630 = vmul.f32 8.0, %v1629
    %v1631 = vrcp.pop %v1568
    %v1632 = vmul.f32 8.0, %v1631
    %v1633 = vrcp.pop %v1574
    %v1634 = vmul.f32 8.0, %v1633
    %v1635 = vrcp.pop %v1580
    %v1636 = vmul.f32 8.0, %v1635
    %v1637 = vrcp.pop %v1586
    %v1638 = vmul.f32 8.0, %v1637
    %v1639 = vrcp.pop %v1592
    %v1640 = vmul.f32 8.0, %v1639
    %v1641 = vmul.f32 %v1330, %v1594
    %v1642 = vmul.f32 %v1332, %v1596
    %v1643 = vmul.f32 %v1334, %v1598
    %v1644 = vmul.f32 %v1336, %v1600
    %v1645 = vmul.f32 %v1338, %v1602
    %v1646 = vmul.f32 %v1340, %v1604
    %v1647 = vmul.f32 %v1342, %v1606
    %v1648 = vmul.f32 %v1344, %v1608
    %v1649 = vmul.f32 %v1346, %v1610
    %v1650 = vmul.f32 %v1348, %v1612
    %v1651 = vmul.f32 %v1350, %v1614
    %v1652 = vmul.f32 %v1352, %v1616
    %v1653 = vmul.f32 %v1354, %v1618
    %v1654 = vmul.f32 %v1356, %v1620
    %v1655 = vmul.f32 %v1358, %v1622
    %v1656 = vmul.f32 %v1360, %v1624
    %v1657 = vmul.f32 %v1362, %v1626
    %v1658 = vmul.f32 %v1364, %v1628
    %v1659 = vmul.f32 %v1366, %v1630
    %v1660 = vmul.f32 %v1368, %v1632
    %v1661 = vmul.f32 %v1370, %v1634
    %v1662 = vmul.f32 %v1372, %v1636
    %v1663 = vmul.f32 %v1374, %v1638
    %v1664 = vmul.f32 %v1376, %v1640
    %v1665 = vadd.f32 %v1641, %v1649
    %v1666 = vadd.f32 %v1642, %v1650
    %v1667 = vadd.f32 %v1643, %v1651
    %v1668 = vadd.f32 %v1644, %v1652
    %v1669 = vadd.f32 %v1645, %v1653
    %v1670 = vadd.f32 %v1646, %v1654
    %v1671 = vadd.f32 %v1647, %v1655
    %v1672 = vadd.f32 %v1648, %v1656
    %v1673 = vadd.f32 %v1665, %v1657
    %v1674 = vadd.f32 %v1666, %v1658
    %v1675 = vadd.f32 %v1667, %v1659
    %v1676 = vadd.f32 %v1668, %v1660
    %v1677 = vadd.f32 %v1669, %v1661
    %v1678 = vadd.f32 %v1670, %v1662
    %v1679 = vadd.f32 %v1671, %v1663
    %v1680 = vadd.f32 %v1672, %v1664
    %v1681 = vmul.f32 %v1673, 0.33333334
    %v1682 = vmul.f32 %v1674, 0.33333334
    %v1683 = vmul.f32 %v1675, 0.33333334
    %v1684 = vmul.f32 %v1676, 0.33333334
    %v1685 = vmul.f32 %v1677, 0.33333334
    %v1686 = vmul.f32 %v1678, 0.33333334
    %v1687 = vmul.f32 %v1679, 0.33333334
    %v1688 = vmul.f32 %v1680, 0.33333334
    %1689 = vrot.lane.b32.xlu0 %v292, 96
    %v1690 = vpop.permute.xlu0 %1689
    %v1693 = vsel %vm360, %v1681, 0
    %1695 = vmatprep.subr.mxu0 0.0
    %1696 = vmatpush1.msra.mxu0 %v1690
    %1697 = vmatprep.subr.mxu0 0.0
    %1698 = vmatpush1.msra.mxu0 0.0
    %1699 = vmatprep.subr.mxu0 0.0
    %1700 = vmatpush1.msra.mxu0 0.0
    %1701 = vmatprep.subr.mxu0 0.0
    %1702 = vmatpush1.msra.mxu0 0.0
    %1703 = vmatprep.subr.mxu0 0.0
    %1704 = vmatpush1.msra.mxu0 0.0
    %1705 = vmatprep.subr.mxu0 0.0
    %1706 = vmatpush1.msra.mxu0 0.0
    %1707 = vmatprep.subr.mxu0 0.0
    %1708 = vmatpush1.msra.mxu0 0.0
    %1709 = vmatprep.subr.mxu0 0.0
    %1710 = vmatpush1.msra.mxu0 0.0
    %1711 = vmatprep.subr.mxu0 0.0
    %1712 = vmatpush1.msra.mxu0 0.0
    %1713 = vmatprep.subr.mxu0 0.0
    %1714 = vmatpush1.msra.mxu0 0.0
    %1715 = vmatprep.subr.mxu0 0.0
    %1716 = vmatpush1.msra.mxu0 0.0
    %1717 = vmatprep.subr.mxu0 0.0
    %1718 = vmatpush1.msra.mxu0 0.0
    %1719 = vmatprep.subr.mxu0 0.0
    %1720 = vmatpush1.msra.mxu0 0.0
    %1721 = vmatprep.subr.mxu0 0.0
    %1722 = vmatpush1.msra.mxu0 0.0
    %1723 = vmatprep.subr.mxu0 0.0
    %1724 = vmatpush1.msra.mxu0 0.0
    %1725 = vmatprep.subr.mxu0 0.0
    %1726 = vmatpush1.msra.mxu0 0.0
    %1727 = vmatprep.subr.mxu0 0.0
    %1728 = vmatpush1.msra.mxu0 0.0
    %1729 = vmatprep.subr.mxu0 0.0
    %1730 = vmatpush1.msra.mxu0 0.0
    %1731 = vmatprep.subr.mxu0 0.0
    %1732 = vmatpush1.msra.mxu0 0.0
    %1733 = vmatprep.subr.mxu0 0.0
    %1734 = vmatpush1.msra.mxu0 0.0
    %1735 = vmatprep.subr.mxu0 0.0
    %1736 = vmatpush1.msra.mxu0 0.0
    %1737 = vmatprep.subr.mxu0 0.0
    %1738 = vmatpush1.msra.mxu0 0.0
    %1739 = vmatprep.subr.mxu0 0.0
    %1740 = vmatpush1.msra.mxu0 0.0
    %1741 = vmatprep.subr.mxu0 0.0
    %1742 = vmatpush1.msra.mxu0 0.0
    %1743 = vmatprep.subr.mxu0 0.0
    %1744 = vmatpush1.msra.mxu0 0.0
    %1745 = vmatprep.subr.mxu0 0.0
    %1746 = vmatpush1.msra.mxu0 0.0
    %1747 = vmatprep.subr.mxu0 0.0
    %1748 = vmatpush1.msra.mxu0 0.0
    %1749 = vmatprep.subr.mxu0 0.0
    %1750 = vmatpush1.msra.mxu0 0.0
    %1751 = vmatprep.subr.mxu0 0.0
    %1752 = vmatpush1.msra.mxu0 0.0
    %1753 = vmatprep.subr.mxu0 0.0
    %1754 = vmatpush1.msra.mxu0 0.0
    %1755 = vmatprep.subr.mxu0 0.0
    %1756 = vmatpush1.msra.mxu0 0.0
    %1757 = vmatprep.subr.mxu0 0.0
    %1758 = vmatpush1.msra.mxu0 0.0
    %1759 = vmatprep.mubr.f32.mxu0 0.0
    %1760 = vmatmul.mubr.f32.gmra.mrb[0].mxu0 %v1693
    %v1761 = vpop.f32.mrb[0].mxu0
    %v1762 = vadd.f32 0.0, %v1761
    %v1763 = vpop.f32.mrb[0].mxu0
    %1764 = vdwg.mxu0
    %1765 = vrot.lane.b32.xlu0 %v348, 96
    %v1766 = vpop.permute.xlu0 %1765
    %v1769 = vsel %vm360, %v1682, 0
    %1771 = vmatprep.subr.mxu0 0.0
    %1772 = vmatpush1.msra.mxu0 %v1766
    %1773 = vmatprep.subr.mxu0 0.0
    %1774 = vmatpush1.msra.mxu0 0.0
    %1775 = vmatprep.subr.mxu0 0.0
    %1776 = vmatpush1.msra.mxu0 0.0
    %1777 = vmatprep.subr.mxu0 0.0
    %1778 = vmatpush1.msra.mxu0 0.0
    %1779 = vmatprep.subr.mxu0 0.0
    %1780 = vmatpush1.msra.mxu0 0.0
    %1781 = vmatprep.subr.mxu0 0.0
    %1782 = vmatpush1.msra.mxu0 0.0
    %1783 = vmatprep.subr.mxu0 0.0
    %1784 = vmatpush1.msra.mxu0 0.0
    %1785 = vmatprep.subr.mxu0 0.0
    %1786 = vmatpush1.msra.mxu0 0.0
    %1787 = vmatprep.subr.mxu0 0.0
    %1788 = vmatpush1.msra.mxu0 0.0
    %1789 = vmatprep.subr.mxu0 0.0
    %1790 = vmatpush1.msra.mxu0 0.0
    %1791 = vmatprep.subr.mxu0 0.0
    %1792 = vmatpush1.msra.mxu0 0.0
    %1793 = vmatprep.subr.mxu0 0.0
    %1794 = vmatpush1.msra.mxu0 0.0
    %1795 = vmatprep.subr.mxu0 0.0
    %1796 = vmatpush1.msra.mxu0 0.0
    %1797 = vmatprep.subr.mxu0 0.0
    %1798 = vmatpush1.msra.mxu0 0.0
    %1799 = vmatprep.subr.mxu0 0.0
    %1800 = vmatpush1.msra.mxu0 0.0
    %1801 = vmatprep.subr.mxu0 0.0
    %1802 = vmatpush1.msra.mxu0 0.0
    %1803 = vmatprep.subr.mxu0 0.0
    %1804 = vmatpush1.msra.mxu0 0.0
    %1805 = vmatprep.subr.mxu0 0.0
    %1806 = vmatpush1.msra.mxu0 0.0
    %1807 = vmatprep.subr.mxu0 0.0
    %1808 = vmatpush1.msra.mxu0 0.0
    %1809 = vmatprep.subr.mxu0 0.0
    %1810 = vmatpush1.msra.mxu0 0.0
    %1811 = vmatprep.subr.mxu0 0.0
    %1812 = vmatpush1.msra.mxu0 0.0
    %1813 = vmatprep.subr.mxu0 0.0
    %1814 = vmatpush1.msra.mxu0 0.0
    %1815 = vmatprep.subr.mxu0 0.0
    %1816 = vmatpush1.msra.mxu0 0.0
    %1817 = vmatprep.subr.mxu0 0.0
    %1818 = vmatpush1.msra.mxu0 0.0
    %1819 = vmatprep.subr.mxu0 0.0
    %1820 = vmatpush1.msra.mxu0 0.0
    %1821 = vmatprep.subr.mxu0 0.0
    %1822 = vmatpush1.msra.mxu0 0.0
    %1823 = vmatprep.subr.mxu0 0.0
    %1824 = vmatpush1.msra.mxu0 0.0
    %1825 = vmatprep.subr.mxu0 0.0
    %1826 = vmatpush1.msra.mxu0 0.0
    %1827 = vmatprep.subr.mxu0 0.0
    %1828 = vmatpush1.msra.mxu0 0.0
    %1829 = vmatprep.subr.mxu0 0.0
    %1830 = vmatpush1.msra.mxu0 0.0
    %1831 = vmatprep.subr.mxu0 0.0
    %1832 = vmatpush1.msra.mxu0 0.0
    %1833 = vmatprep.subr.mxu0 0.0
    %1834 = vmatpush1.msra.mxu0 0.0
    %1835 = vmatprep.mubr.f32.mxu0 0.0
    %1836 = vmatmul.mubr.f32.gmra.mrb[0].mxu0 %v1769
    %v1837 = vpop.f32.mrb[0].mxu0
    %v1838 = vadd.f32 0.0, %v1837
    %v1839 = vpop.f32.mrb[0].mxu0
    %1840 = vdwg.mxu0
    %1841 = vrot.lane.b32.xlu0 %v350, 96
    %v1842 = vpop.permute.xlu0 %1841
    %v1845 = vsel %vm360, %v1683, 0
    %1847 = vmatprep.subr.mxu0 0.0
    %1848 = vmatpush1.msra.mxu0 %v1842
    %1849 = vmatprep.subr.mxu0 0.0
    %1850 = vmatpush1.msra.mxu0 0.0
    %1851 = vmatprep.subr.mxu0 0.0
    %1852 = vmatpush1.msra.mxu0 0.0
    %1853 = vmatprep.subr.mxu0 0.0
    %1854 = vmatpush1.msra.mxu0 0.0
    %1855 = vmatprep.subr.mxu0 0.0
    %1856 = vmatpush1.msra.mxu0 0.0
    %1857 = vmatprep.subr.mxu0 0.0
    %1858 = vmatpush1.msra.mxu0 0.0
    %1859 = vmatprep.subr.mxu0 0.0
    %1860 = vmatpush1.msra.mxu0 0.0
    %1861 = vmatprep.subr.mxu0 0.0
    %1862 = vmatpush1.msra.mxu0 0.0
    %1863 = vmatprep.subr.mxu0 0.0
    %1864 = vmatpush1.msra.mxu0 0.0
    %1865 = vmatprep.subr.mxu0 0.0
    %1866 = vmatpush1.msra.mxu0 0.0
    %1867 = vmatprep.subr.mxu0 0.0
    %1868 = vmatpush1.msra.mxu0 0.0
    %1869 = vmatprep.subr.mxu0 0.0
    %1870 = vmatpush1.msra.mxu0 0.0
    %1871 = vmatprep.subr.mxu0 0.0
    %1872 = vmatpush1.msra.mxu0 0.0
    %1873 = vmatprep.subr.mxu0 0.0
    %1874 = vmatpush1.msra.mxu0 0.0
    %1875 = vmatprep.subr.mxu0 0.0
    %1876 = vmatpush1.msra.mxu0 0.0
    %1877 = vmatprep.subr.mxu0 0.0
    %1878 = vmatpush1.msra.mxu0 0.0
    %1879 = vmatprep.subr.mxu0 0.0
    %1880 = vmatpush1.msra.mxu0 0.0
    %1881 = vmatprep.subr.mxu0 0.0
    %1882 = vmatpush1.msra.mxu0 0.0
    %1883 = vmatprep.subr.mxu0 0.0
    %1884 = vmatpush1.msra.mxu0 0.0
    %1885 = vmatprep.subr.mxu0 0.0
    %1886 = vmatpush1.msra.mxu0 0.0
    %1887 = vmatprep.subr.mxu0 0.0
    %1888 = vmatpush1.msra.mxu0 0.0
    %1889 = vmatprep.subr.mxu0 0.0
    %1890 = vmatpush1.msra.mxu0 0.0
    %1891 = vmatprep.subr.mxu0 0.0
    %1892 = vmatpush1.msra.mxu0 0.0
    %1893 = vmatprep.subr.mxu0 0.0
    %1894 = vmatpush1.msra.mxu0 0.0
    %1895 = vmatprep.subr.mxu0 0.0
    %1896 = vmatpush1.msra.mxu0 0.0
    %1897 = vmatprep.subr.mxu0 0.0
    %1898 = vmatpush1.msra.mxu0 0.0
    %1899 = vmatprep.subr.mxu0 0.0
    %1900 = vmatpush1.msra.mxu0 0.0
    %1901 = vmatprep.subr.mxu0 0.0
    %1902 = vmatpush1.msra.mxu0 0.0
    %1903 = vmatprep.subr.mxu0 0.0
    %1904 = vmatpush1.msra.mxu0 0.0
    %1905 = vmatprep.subr.mxu0 0.0
    %1906 = vmatpush1.msra.mxu0 0.0
    %1907 = vmatprep.subr.mxu0 0.0
    %1908 = vmatpush1.msra.mxu0 0.0
    %1909 = vmatprep.subr.mxu0 0.0
    %1910 = vmatpush1.msra.mxu0 0.0
    %1911 = vmatprep.mubr.f32.mxu0 0.0
    %1912 = vmatmul.mubr.f32.gmra.mrb[0].mxu0 %v1845
    %v1913 = vpop.f32.mrb[0].mxu0
    %v1914 = vadd.f32 0.0, %v1913
    %v1915 = vpop.f32.mrb[0].mxu0
    %1916 = vdwg.mxu0
    %1917 = vrot.lane.b32.xlu0 %v352, 96
    %v1918 = vpop.permute.xlu0 %1917
    %v1921 = vsel %vm360, %v1684, 0
    %1923 = vmatprep.subr.mxu0 0.0
    %1924 = vmatpush1.msra.mxu0 %v1918
    %1925 = vmatprep.subr.mxu0 0.0
    %1926 = vmatpush1.msra.mxu0 0.0
    %1927 = vmatprep.subr.mxu0 0.0
    %1928 = vmatpush1.msra.mxu0 0.0
    %1929 = vmatprep.subr.mxu0 0.0
    %1930 = vmatpush1.msra.mxu0 0.0
    %1931 = vmatprep.subr.mxu0 0.0
    %1932 = vmatpush1.msra.mxu0 0.0
    %1933 = vmatprep.subr.mxu0 0.0
    %1934 = vmatpush1.msra.mxu0 0.0
    %1935 = vmatprep.subr.mxu0 0.0
    %1936 = vmatpush1.msra.mxu0 0.0
    %1937 = vmatprep.subr.mxu0 0.0
    %1938 = vmatpush1.msra.mxu0 0.0
    %1939 = vmatprep.subr.mxu0 0.0
    %1940 = vmatpush1.msra.mxu0 0.0
    %1941 = vmatprep.subr.mxu0 0.0
    %1942 = vmatpush1.msra.mxu0 0.0
    %1943 = vmatprep.subr.mxu0 0.0
    %1944 = vmatpush1.msra.mxu0 0.0
    %1945 = vmatprep.subr.mxu0 0.0
    %1946 = vmatpush1.msra.mxu0 0.0
    %1947 = vmatprep.subr.mxu0 0.0
    %1948 = vmatpush1.msra.mxu0 0.0
    %1949 = vmatprep.subr.mxu0 0.0
    %1950 = vmatpush1.msra.mxu0 0.0
    %1951 = vmatprep.subr.mxu0 0.0
    %1952 = vmatpush1.msra.mxu0 0.0
    %1953 = vmatprep.subr.mxu0 0.0
    %1954 = vmatpush1.msra.mxu0 0.0
    %1955 = vmatprep.subr.mxu0 0.0
    %1956 = vmatpush1.msra.mxu0 0.0
    %1957 = vmatprep.subr.mxu0 0.0
    %1958 = vmatpush1.msra.mxu0 0.0
    %1959 = vmatprep.subr.mxu0 0.0
    %1960 = vmatpush1.msra.mxu0 0.0
    %1961 = vmatprep.subr.mxu0 0.0
    %1962 = vmatpush1.msra.mxu0 0.0
    %1963 = vmatprep.subr.mxu0 0.0
    %1964 = vmatpush1.msra.mxu0 0.0
    %1965 = vmatprep.subr.mxu0 0.0
    %1966 = vmatpush1.msra.mxu0 0.0
    %1967 = vmatprep.subr.mxu0 0.0
    %1968 = vmatpush1.msra.mxu0 0.0
    %1969 = vmatprep.subr.mxu0 0.0
    %1970 = vmatpush1.msra.mxu0 0.0
    %1971 = vmatprep.subr.mxu0 0.0
    %1972 = vmatpush1.msra.mxu0 0.0
    %1973 = vmatprep.subr.mxu0 0.0
    %1974 = vmatpush1.msra.mxu0 0.0
    %1975 = vmatprep.subr.mxu0 0.0
    %1976 = vmatpush1.msra.mxu0 0.0
    %1977 = vmatprep.subr.mxu0 0.0
    %1978 = vmatpush1.msra.mxu0 0.0
    %1979 = vmatprep.subr.mxu0 0.0
    %1980 = vmatpush1.msra.mxu0 0.0
    %1981 = vmatprep.subr.mxu0 0.0
    %1982 = vmatpush1.msra.mxu0 0.0
    %1983 = vmatprep.subr.mxu0 0.0
    %1984 = vmatpush1.msra.mxu0 0.0
    %1985 = vmatprep.subr.mxu0 0.0
    %1986 = vmatpush1.msra.mxu0 0.0
    %1987 = vmatprep.mubr.f32.mxu0 0.0
    %1988 = vmatmul.mubr.f32.gmra.mrb[0].mxu0 %v1921
    %v1989 = vpop.f32.mrb[0].mxu0
    %v1990 = vadd.f32 0.0, %v1989
    %v1991 = vpop.f32.mrb[0].mxu0
    %1992 = vdwg.mxu0
    %1993 = vrot.lane.b32.xlu0 %v297, 96
    %v1994 = vpop.permute.xlu0 %1993
    %v1997 = vsel %vm360, %v1685, 0
    %1999 = vmatprep.subr.mxu0 0.0
    %2000 = vmatpush1.msra.mxu0 %v1994
    %2001 = vmatprep.subr.mxu0 0.0
    %2002 = vmatpush1.msra.mxu0 0.0
    %2003 = vmatprep.subr.mxu0 0.0
    %2004 = vmatpush1.msra.mxu0 0.0
    %2005 = vmatprep.subr.mxu0 0.0
    %2006 = vmatpush1.msra.mxu0 0.0
    %2007 = vmatprep.subr.mxu0 0.0
    %2008 = vmatpush1.msra.mxu0 0.0
    %2009 = vmatprep.subr.mxu0 0.0
    %2010 = vmatpush1.msra.mxu0 0.0
    %2011 = vmatprep.subr.mxu0 0.0
    %2012 = vmatpush1.msra.mxu0 0.0
    %2013 = vmatprep.subr.mxu0 0.0
    %2014 = vmatpush1.msra.mxu0 0.0
    %2015 = vmatprep.subr.mxu0 0.0
    %2016 = vmatpush1.msra.mxu0 0.0
    %2017 = vmatprep.subr.mxu0 0.0
    %2018 = vmatpush1.msra.mxu0 0.0
    %2019 = vmatprep.subr.mxu0 0.0
    %2020 = vmatpush1.msra.mxu0 0.0
    %2021 = vmatprep.subr.mxu0 0.0
    %2022 = vmatpush1.msra.mxu0 0.0
    %2023 = vmatprep.subr.mxu0 0.0
    %2024 = vmatpush1.msra.mxu0 0.0
    %2025 = vmatprep.subr.mxu0 0.0
    %2026 = vmatpush1.msra.mxu0 0.0
    %2027 = vmatprep.subr.mxu0 0.0
    %2028 = vmatpush1.msra.mxu0 0.0
    %2029 = vmatprep.subr.mxu0 0.0
    %2030 = vmatpush1.msra.mxu0 0.0
    %2031 = vmatprep.subr.mxu0 0.0
    %2032 = vmatpush1.msra.mxu0 0.0
    %2033 = vmatprep.subr.mxu0 0.0
    %2034 = vmatpush1.msra.mxu0 0.0
    %2035 = vmatprep.subr.mxu0 0.0
    %2036 = vmatpush1.msra.mxu0 0.0
    %2037 = vmatprep.subr.mxu0 0.0
    %2038 = vmatpush1.msra.mxu0 0.0
    %2039 = vmatprep.subr.mxu0 0.0
    %2040 = vmatpush1.msra.mxu0 0.0
    %2041 = vmatprep.subr.mxu0 0.0
    %2042 = vmatpush1.msra.mxu0 0.0
    %2043 = vmatprep.subr.mxu0 0.0
    %2044 = vmatpush1.msra.mxu0 0.0
    %2045 = vmatprep.subr.mxu0 0.0
    %2046 = vmatpush1.msra.mxu0 0.0
    %2047 = vmatprep.subr.mxu0 0.0
    %2048 = vmatpush1.msra.mxu0 0.0
    %2049 = vmatprep.subr.mxu0 0.0
    %2050 = vmatpush1.msra.mxu0 0.0
    %2051 = vmatprep.subr.mxu0 0.0
    %2052 = vmatpush1.msra.mxu0 0.0
    %2053 = vmatprep.subr.mxu0 0.0
    %2054 = vmatpush1.msra.mxu0 0.0
    %2055 = vmatprep.subr.mxu0 0.0
    %2056 = vmatpush1.msra.mxu0 0.0
    %2057 = vmatprep.subr.mxu0 0.0
    %2058 = vmatpush1.msra.mxu0 0.0
    %2059 = vmatprep.subr.mxu0 0.0
    %2060 = vmatpush1.msra.mxu0 0.0
    %2061 = vmatprep.subr.mxu0 0.0
    %2062 = vmatpush1.msra.mxu0 0.0
    %2063 = vmatprep.mubr.f32.mxu0 0.0
    %2064 = vmatmul.mubr.f32.gmra.mrb[0].mxu0 %v1997
    %v2065 = vpop.f32.mrb[0].mxu0
    %v2066 = vadd.f32 0.0, %v2065
    %v2067 = vpop.f32.mrb[0].mxu0
    %2068 = vdwg.mxu0
    %2069 = vrot.lane.b32.xlu0 %v355, 96
    %v2070 = vpop.permute.xlu0 %2069
    %v2073 = vsel %vm360, %v1686, 0
    %2075 = vmatprep.subr.mxu0 0.0
    %2076 = vmatpush1.msra.mxu0 %v2070
    %2077 = vmatprep.subr.mxu0 0.0
    %2078 = vmatpush1.msra.mxu0 0.0
    %2079 = vmatprep.subr.mxu0 0.0
    %2080 = vmatpush1.msra.mxu0 0.0
    %2081 = vmatprep.subr.mxu0 0.0
    %2082 = vmatpush1.msra.mxu0 0.0
    %2083 = vmatprep.subr.mxu0 0.0
    %2084 = vmatpush1.msra.mxu0 0.0
    %2085 = vmatprep.subr.mxu0 0.0
    %2086 = vmatpush1.msra.mxu0 0.0
    %2087 = vmatprep.subr.mxu0 0.0
    %2088 = vmatpush1.msra.mxu0 0.0
    %2089 = vmatprep.subr.mxu0 0.0
    %2090 = vmatpush1.msra.mxu0 0.0
    %2091 = vmatprep.subr.mxu0 0.0
    %2092 = vmatpush1.msra.mxu0 0.0
    %2093 = vmatprep.subr.mxu0 0.0
    %2094 = vmatpush1.msra.mxu0 0.0
    %2095 = vmatprep.subr.mxu0 0.0
    %2096 = vmatpush1.msra.mxu0 0.0
    %2097 = vmatprep.subr.mxu0 0.0
    %2098 = vmatpush1.msra.mxu0 0.0
    %2099 = vmatprep.subr.mxu0 0.0
    %2100 = vmatpush1.msra.mxu0 0.0
    %2101 = vmatprep.subr.mxu0 0.0
    %2102 = vmatpush1.msra.mxu0 0.0
    %2103 = vmatprep.subr.mxu0 0.0
    %2104 = vmatpush1.msra.mxu0 0.0
    %2105 = vmatprep.subr.mxu0 0.0
    %2106 = vmatpush1.msra.mxu0 0.0
    %2107 = vmatprep.subr.mxu0 0.0
    %2108 = vmatpush1.msra.mxu0 0.0
    %2109 = vmatprep.subr.mxu0 0.0
    %2110 = vmatpush1.msra.mxu0 0.0
    %2111 = vmatprep.subr.mxu0 0.0
    %2112 = vmatpush1.msra.mxu0 0.0
    %2113 = vmatprep.subr.mxu0 0.0
    %2114 = vmatpush1.msra.mxu0 0.0
    %2115 = vmatprep.subr.mxu0 0.0
    %2116 = vmatpush1.msra.mxu0 0.0
    %2117 = vmatprep.subr.mxu0 0.0
    %2118 = vmatpush1.msra.mxu0 0.0
    %2119 = vmatprep.subr.mxu0 0.0
    %2120 = vmatpush1.msra.mxu0 0.0
    %2121 = vmatprep.subr.mxu0 0.0
    %2122 = vmatpush1.msra.mxu0 0.0
    %2123 = vmatprep.subr.mxu0 0.0
    %2124 = vmatpush1.msra.mxu0 0.0
    %2125 = vmatprep.subr.mxu0 0.0
    %2126 = vmatpush1.msra.mxu0 0.0
    %2127 = vmatprep.subr.mxu0 0.0
    %2128 = vmatpush1.msra.mxu0 0.0
    %2129 = vmatprep.subr.mxu0 0.0
    %2130 = vmatpush1.msra.mxu0 0.0
    %2131 = vmatprep.subr.mxu0 0.0
    %2132 = vmatpush1.msra.mxu0 0.0
    %2133 = vmatprep.subr.mxu0 0.0
    %2134 = vmatpush1.msra.mxu0 0.0
    %2135 = vmatprep.subr.mxu0 0.0
    %2136 = vmatpush1.msra.mxu0 0.0
    %2137 = vmatprep.subr.mxu0 0.0
    %2138 = vmatpush1.msra.mxu0 0.0
    %2139 = vmatprep.mubr.f32.mxu0 0.0
    %2140 = vmatmul.mubr.f32.gmra.mrb[0].mxu0 %v2073
    %v2141 = vpop.f32.mrb[0].mxu0
    %v2142 = vadd.f32 0.0, %v2141
    %v2143 = vpop.f32.mrb[0].mxu0
    %2144 = vdwg.mxu0
    %2145 = vrot.lane.b32.xlu0 %v357, 96
    %v2146 = vpop.permute.xlu0 %2145
    %v2149 = vsel %vm360, %v1687, 0
    %2151 = vmatprep.subr.mxu0 0.0
    %2152 = vmatpush1.msra.mxu0 %v2146
    %2153 = vmatprep.subr.mxu0 0.0
    %2154 = vmatpush1.msra.mxu0 0.0
    %2155 = vmatprep.subr.mxu0 0.0
    %2156 = vmatpush1.msra.mxu0 0.0
    %2157 = vmatprep.subr.mxu0 0.0
    %2158 = vmatpush1.msra.mxu0 0.0
    %2159 = vmatprep.subr.mxu0 0.0
    %2160 = vmatpush1.msra.mxu0 0.0
    %2161 = vmatprep.subr.mxu0 0.0
    %2162 = vmatpush1.msra.mxu0 0.0
    %2163 = vmatprep.subr.mxu0 0.0
    %2164 = vmatpush1.msra.mxu0 0.0
    %2165 = vmatprep.subr.mxu0 0.0
    %2166 = vmatpush1.msra.mxu0 0.0
    %2167 = vmatprep.subr.mxu0 0.0
    %2168 = vmatpush1.msra.mxu0 0.0
    %2169 = vmatprep.subr.mxu0 0.0
    %2170 = vmatpush1.msra.mxu0 0.0
    %2171 = vmatprep.subr.mxu0 0.0
    %2172 = vmatpush1.msra.mxu0 0.0
    %2173 = vmatprep.subr.mxu0 0.0
    %2174 = vmatpush1.msra.mxu0 0.0
    %2175 = vmatprep.subr.mxu0 0.0
    %2176 = vmatpush1.msra.mxu0 0.0
    %2177 = vmatprep.subr.mxu0 0.0
    %2178 = vmatpush1.msra.mxu0 0.0
    %2179 = vmatprep.subr.mxu0 0.0
    %2180 = vmatpush1.msra.mxu0 0.0
    %2181 = vmatprep.subr.mxu0 0.0
    %2182 = vmatpush1.msra.mxu0 0.0
    %2183 = vmatprep.subr.mxu0 0.0
    %2184 = vmatpush1.msra.mxu0 0.0
    %2185 = vmatprep.subr.mxu0 0.0
    %2186 = vmatpush1.msra.mxu0 0.0
    %2187 = vmatprep.subr.mxu0 0.0
    %2188 = vmatpush1.msra.mxu0 0.0
    %2189 = vmatprep.subr.mxu0 0.0
    %2190 = vmatpush1.msra.mxu0 0.0
    %2191 = vmatprep.subr.mxu0 0.0
    %2192 = vmatpush1.msra.mxu0 0.0
    %2193 = vmatprep.subr.mxu0 0.0
    %2194 = vmatpush1.msra.mxu0 0.0
    %2195 = vmatprep.subr.mxu0 0.0
    %2196 = vmatpush1.msra.mxu0 0.0
    %2197 = vmatprep.subr.mxu0 0.0
    %2198 = vmatpush1.msra.mxu0 0.0
    %2199 = vmatprep.subr.mxu0 0.0
    %2200 = vmatpush1.msra.mxu0 0.0
    %2201 = vmatprep.subr.mxu0 0.0
    %2202 = vmatpush1.msra.mxu0 0.0
    %2203 = vmatprep.subr.mxu0 0.0
    %2204 = vmatpush1.msra.mxu0 0.0
    %2205 = vmatprep.subr.mxu0 0.0
    %2206 = vmatpush1.msra.mxu0 0.0
    %2207 = vmatprep.subr.mxu0 0.0
    %2208 = vmatpush1.msra.mxu0 0.0
    %2209 = vmatprep.subr.mxu0 0.0
    %2210 = vmatpush1.msra.mxu0 0.0
    %2211 = vmatprep.subr.mxu0 0.0
    %2212 = vmatpush1.msra.mxu0 0.0
    %2213 = vmatprep.subr.mxu0 0.0
    %2214 = vmatpush1.msra.mxu0 0.0
    %2215 = vmatprep.mubr.f32.mxu0 0.0
    %2216 = vmatmul.mubr.f32.gmra.mrb[0].mxu0 %v2149
    %v2217 = vpop.f32.mrb[0].mxu0
    %v2218 = vadd.f32 0.0, %v2217
    %v2219 = vpop.f32.mrb[0].mxu0
    %2220 = vdwg.mxu0
    %2221 = vrot.lane.b32.xlu0 %v359, 96
    %v2222 = vpop.permute.xlu0 %2221
    %v2225 = vsel %vm360, %v1688, 0
    %2227 = vmatprep.subr.mxu0 0.0
    %2228 = vmatpush1.msra.mxu0 %v2222
    %2229 = vmatprep.subr.mxu0 0.0
    %2230 = vmatpush1.msra.mxu0 0.0
    %2231 = vmatprep.subr.mxu0 0.0
    %2232 = vmatpush1.msra.mxu0 0.0
    %2233 = vmatprep.subr.mxu0 0.0
    %2234 = vmatpush1.msra.mxu0 0.0
    %2235 = vmatprep.subr.mxu0 0.0
    %2236 = vmatpush1.msra.mxu0 0.0
    %2237 = vmatprep.subr.mxu0 0.0
    %2238 = vmatpush1.msra.mxu0 0.0
    %2239 = vmatprep.subr.mxu0 0.0
    %2240 = vmatpush1.msra.mxu0 0.0
    %2241 = vmatprep.subr.mxu0 0.0
    %2242 = vmatpush1.msra.mxu0 0.0
    %2243 = vmatprep.subr.mxu0 0.0
    %2244 = vmatpush1.msra.mxu0 0.0
    %2245 = vmatprep.subr.mxu0 0.0
    %2246 = vmatpush1.msra.mxu0 0.0
    %2247 = vmatprep.subr.mxu0 0.0
    %2248 = vmatpush1.msra.mxu0 0.0
    %2249 = vmatprep.subr.mxu0 0.0
    %2250 = vmatpush1.msra.mxu0 0.0
    %2251 = vmatprep.subr.mxu0 0.0
    %2252 = vmatpush1.msra.mxu0 0.0
    %2253 = vmatprep.subr.mxu0 0.0
    %2254 = vmatpush1.msra.mxu0 0.0
    %2255 = vmatprep.subr.mxu0 0.0
    %2256 = vmatpush1.msra.mxu0 0.0
    %2257 = vmatprep.subr.mxu0 0.0
    %2258 = vmatpush1.msra.mxu0 0.0
    %2259 = vmatprep.subr.mxu0 0.0
    %2260 = vmatpush1.msra.mxu0 0.0
    %2261 = vmatprep.subr.mxu0 0.0
    %2262 = vmatpush1.msra.mxu0 0.0
    %2263 = vmatprep.subr.mxu0 0.0
    %2264 = vmatpush1.msra.mxu0 0.0
    %2265 = vmatprep.subr.mxu0 0.0
    %2266 = vmatpush1.msra.mxu0 0.0
    %2267 = vmatprep.subr.mxu0 0.0
    %2268 = vmatpush1.msra.mxu0 0.0
    %2269 = vmatprep.subr.mxu0 0.0
    %2270 = vmatpush1.msra.mxu0 0.0
    %2271 = vmatprep.subr.mxu0 0.0
    %2272 = vmatpush1.msra.mxu0 0.0
    %2273 = vmatprep.subr.mxu0 0.0
    %2274 = vmatpush1.msra.mxu0 0.0
    %2275 = vmatprep.subr.mxu0 0.0
    %2276 = vmatpush1.msra.mxu0 0.0
    %2277 = vmatprep.subr.mxu0 0.0
    %2278 = vmatpush1.msra.mxu0 0.0
    %2279 = vmatprep.subr.mxu0 0.0
    %2280 = vmatpush1.msra.mxu0 0.0
    %2281 = vmatprep.subr.mxu0 0.0
    %2282 = vmatpush1.msra.mxu0 0.0
    %2283 = vmatprep.subr.mxu0 0.0
    %2284 = vmatpush1.msra.mxu0 0.0
    %2285 = vmatprep.subr.mxu0 0.0
    %2286 = vmatpush1.msra.mxu0 0.0
    %2287 = vmatprep.subr.mxu0 0.0
    %2288 = vmatpush1.msra.mxu0 0.0
    %2289 = vmatprep.subr.mxu0 0.0
    %2290 = vmatpush1.msra.mxu0 0.0
    %2291 = vmatprep.mubr.f32.mxu0 0.0
    %2292 = vmatmul.mubr.f32.gmra.mrb[0].mxu0 %v2225
    %v2293 = vpop.f32.mrb[0].mxu0
    %v2294 = vadd.f32 0.0, %v2293
    %v2295 = vpop.f32.mrb[0].mxu0
    %2296 = vdwg.mxu0
    %2298 = vrot.lane.b32.xlu0 %v1838, 8
    %v2299 = vpop.permute.xlu0 %2298
    %2302 = vrot.lane.b32.xlu0 %v1914, 16
    %v2303 = vpop.permute.xlu0 %2302
    %2306 = vrot.lane.b32.xlu0 %v1990, 24
    %v2307 = vpop.permute.xlu0 %2306
    %v2309 = vsel %vm360, %v1762, %v2299
    %vm2310 = vcmask 130048
    %v2311 = vsel %vm2310, %v2309, %v2303
    %vm2312 = vcmask 195584
    %v2313 = vsel %vm2312, %v2311, %v2307
    %2315 = vrot.lane.b32.xlu0 %v1642, 8
    %v2316 = vpop.permute.xlu0 %2315
    %2319 = vrot.lane.b32.xlu0 %v1643, 16
    %v2320 = vpop.permute.xlu0 %2319
    %2323 = vrot.lane.b32.xlu0 %v1644, 24
    %v2324 = vpop.permute.xlu0 %2323
    %v2326 = vsel %vm360, %v1641, %v2316
    %v2327 = vsel %vm2310, %v2326, %v2320
    %v2328 = vsel %vm2312, %v2327, %v2324
    %2330 = vrot.lane.b32.xlu0 %v2142, 8
    %v2331 = vpop.permute.xlu0 %2330
    %2334 = vrot.lane.b32.xlu0 %v2218, 16
    %v2335 = vpop.permute.xlu0 %2334
    %2338 = vrot.lane.b32.xlu0 %v2294, 24
    %v2339 = vpop.permute.xlu0 %2338
    %v2341 = vsel %vm360, %v2066, %v2331
    %v2342 = vsel %vm2310, %v2341, %v2335
    %v2343 = vsel %vm2312, %v2342, %v2339
    %2345 = vrot.lane.b32.xlu0 %v1646, 8
    %v2346 = vpop.permute.xlu0 %2345
    %2349 = vrot.lane.b32.xlu0 %v1647, 16
    %v2350 = vpop.permute.xlu0 %2349
    %2353 = vrot.lane.b32.xlu0 %v1648, 24
    %v2354 = vpop.permute.xlu0 %2353
    %v2356 = vsel %vm360, %v1645, %v2346
    %v2357 = vsel %vm2310, %v2356, %v2350
    %v2358 = vsel %vm2312, %v2357, %v2354
    %v2359 = vld [vmem:[#allocation10] sm:$0xff]
    %v2360 = vld [vmem:[#allocation10 + $0x8] sm:$0xff]
    %v2361 = vld [vmem:[#allocation10 + $0x10] sm:$0xff]
    %v2362 = vld [vmem:[#allocation10 + $0x18] sm:$0xff]
    %v2363 = vld [vmem:[%s7] sm:$0x1]
    %v2365 = vlaneseq
    %v2366 = vshrl.u32 %v2365, 7
    %v2367 = vsub.s32 0, %v2366
    %v2368 = vrot.slane %v2363, %v2367
    %vm2370 = vcmask 261120
    %v2372 = vsel %vm2370, %v2313, 0
    %v2375 = vsel %vm2370, %v2343, 0
    %2377 = vmatprep.subr.mxu0 0.0
    %2378 = vmatpush1.msra.mxu0 %v2359
    %2379 = vmatprep.subr.mxu0 0.0
    %2380 = vmatpush1.msra.mxu0 %v2360
    %2381 = vmatprep.subr.mxu0 0.0
    %2382 = vmatpush1.msra.mxu0 %v2361
    %2383 = vmatprep.subr.mxu0 0.0
    %2384 = vmatpush1.msra.mxu0 %v2362
    %2385 = vmatprep.subr.mxu0 0.0
    %2386 = vmatpush1.msra.mxu0 0.0
    %2387 = vmatprep.subr.mxu0 0.0
    %2388 = vmatpush1.msra.mxu0 0.0
    %2389 = vmatprep.subr.mxu0 0.0
    %2390 = vmatpush1.msra.mxu0 0.0
    %2391 = vmatprep.subr.mxu0 0.0
    %2392 = vmatpush1.msra.mxu0 0.0
    %2393 = vmatprep.subr.mxu0 0.0
    %2394 = vmatpush1.msra.mxu0 0.0
    %2395 = vmatprep.subr.mxu0 0.0
    %2396 = vmatpush1.msra.mxu0 0.0
    %2397 = vmatprep.subr.mxu0 0.0
    %2398 = vmatpush1.msra.mxu0 0.0
    %2399 = vmatprep.subr.mxu0 0.0
    %2400 = vmatpush1.msra.mxu0 0.0
    %2401 = vmatprep.subr.mxu0 0.0
    %2402 = vmatpush1.msra.mxu0 0.0
    %2403 = vmatprep.subr.mxu0 0.0
    %2404 = vmatpush1.msra.mxu0 0.0
    %2405 = vmatprep.subr.mxu0 0.0
    %2406 = vmatpush1.msra.mxu0 0.0
    %2407 = vmatprep.subr.mxu0 0.0
    %2408 = vmatpush1.msra.mxu0 0.0
    %2409 = vmatprep.subr.mxu0 0.0
    %2410 = vmatpush1.msra.mxu0 0.0
    %2411 = vmatprep.subr.mxu0 0.0
    %2412 = vmatpush1.msra.mxu0 0.0
    %2413 = vmatprep.subr.mxu0 0.0
    %2414 = vmatpush1.msra.mxu0 0.0
    %2415 = vmatprep.subr.mxu0 0.0
    %2416 = vmatpush1.msra.mxu0 0.0
    %2417 = vmatprep.subr.mxu0 0.0
    %2418 = vmatpush1.msra.mxu0 0.0
    %2419 = vmatprep.subr.mxu0 0.0
    %2420 = vmatpush1.msra.mxu0 0.0
    %2421 = vmatprep.subr.mxu0 0.0
    %2422 = vmatpush1.msra.mxu0 0.0
    %2423 = vmatprep.subr.mxu0 0.0
    %2424 = vmatpush1.msra.mxu0 0.0
    %2425 = vmatprep.subr.mxu0 0.0
    %2426 = vmatpush1.msra.mxu0 0.0
    %2427 = vmatprep.subr.mxu0 0.0
    %2428 = vmatpush1.msra.mxu0 0.0
    %2429 = vmatprep.subr.mxu0 0.0
    %2430 = vmatpush1.msra.mxu0 0.0
    %2431 = vmatprep.subr.mxu0 0.0
    %2432 = vmatpush1.msra.mxu0 0.0
    %2433 = vmatprep.subr.mxu0 0.0
    %2434 = vmatpush1.msra.mxu0 0.0
    %2435 = vmatprep.subr.mxu0 0.0
    %2436 = vmatpush1.msra.mxu0 0.0
    %2437 = vmatprep.subr.mxu0 0.0
    %2438 = vmatpush1.msra.mxu0 0.0
    %2439 = vmatprep.subr.mxu0 0.0
    %2440 = vmatpush1.msra.mxu0 0.0
    %2441 = vmatprep.mubr.f32.mxu0 0.0
    %2442 = vmatmul.mubr.f32.gmra.mrb[0].mxu0 %v2372
    %v2443 = vpop.f32.mrb[0].mxu0
    %v2444 = vadd.f32 %v2368, %v2443
    %v2445 = vpop.f32.mrb[0].mxu0
    %2446 = vmatprep.mubr.f32.mxu0 0.0
    %2447 = vmatmul.mubr.f32.gmra.mrb[0].mxu0 %v2375
    %v2448 = vpop.f32.mrb[0].mxu0
    %v2449 = vadd.f32 %v2368, %v2448
    %v2450 = vpop.f32.mrb[0].mxu0
    %2451 = vdwg.mxu0
    %2454 = vrot.lane.b32.xlu0 %v2328, 32
    %v2455 = vpop.permute.xlu0 %2454
    %2456 = vrot.lane.b32.xlu0 %v2358, 32
    %v2457 = vpop.permute.xlu0 %2456
    %v2460 = vsel %vm2370, %v2444, %v2455
    %v2461 = vsel %vm2370, %v2449, %v2457
    %2462 = vst.msk [vmem:[#allocation11] sm:$0xff] %vm218, %v2460
    %2463 = vst.msk [vmem:[#allocation11 + $0x8] sm:$0xff] %vm218, %v2461
    // Predicated region
    $region54: #{tpu_custom_call.1} parent=1 // pred_check
      _
    $region55: #{tpu_custom_call.1} parent=1 // pred_check_branch
      %2465 = sbr.rel (0) target = $region57
    $region56: #{tpu_custom_call.1} parent=1 // pred_region
      %s2467 = ssub.s32 256, 256
      %2468 = vsyncadd [#allocation4], %s2467
      %s2469 = sshll.u32 [#allocation11], 4
      %s2470 = int_to_ptr.vmem [resolvable:$true] %s2469
      %2475 = dma.vmem_to_hbm [thread:$0]  %s2470, 256, %s8, [#allocation4], 128, 128, 8
    $region57: #{tpu_custom_call.1} parent=1 // pred_fallthru
      _
    // Predicated region
    $region58: #{tpu_custom_call.1} parent=1 // pred_check
      _
    $region59: #{tpu_custom_call.1} parent=1 // pred_check_branch
      %2477 = sbr.rel (0) target = $region61
    $region60: #{tpu_custom_call.1} parent=1 // pred_region
      %2478 = dma.done [#allocation4], 256
    $region61: #{tpu_custom_call.1} parent=1 // pred_fallthru
      _
    %2479 = vsyncpa [#allocation3], 1
    %2480 = vsyncpa [#allocation6], 1
    %2481 = vsyncpa [#allocation9], 1
    %2482 = vsyncpa [#allocation4], 1

// kernel: tpu_custom_call.1
$region0: #{tpu_custom_call.1}
  #allocation0 [shape = 'u32[]', space=smem, size = 0x4, offset = 0x4, fixed_abs, tag = 'smem constant byte address 0x4 - core index']
  #allocation1 [shape = 'u32[144,128]{1,0:T(1,128)}', space=vmem, size = 0x12000, scoped, tag = 'internal scratch']
  %s0 = inlined_call_operand.hbm [shape: f32[16,96], index: 0, kind: input, shape index: {}]
  %s1 = inlined_call_operand.hbm [shape: f32[16,64], index: 1, kind: input, shape index: {}]
  %s2 = inlined_call_operand.hbm [shape: f32[96,96], index: 2, kind: input, shape index: {}]
  %s3 = inlined_call_operand.vmem [shape: f32[1,96], index: 3, kind: input, shape index: {}]
  %s4 = inlined_call_operand.hbm [shape: f32[64,64], index: 4, kind: input, shape index: {}]
  %s5 = inlined_call_operand.vmem [shape: f32[1,64], index: 5, kind: input, shape index: {}]
  %s6 = inlined_call_operand.hbm [shape: f32[32,32], index: 6, kind: input, shape index: {}]
  %s7 = inlined_call_operand.vmem [shape: f32[1,32], index: 7, kind: input, shape index: {}]
  %s8 = inlined_call_operand.hbm [shape: f32[16,64], index: 8, kind: output, shape index: {}]
  %s9 = sld [smem:[#allocation0]]
  $region62: #{tpu_custom_call.1} parent=0
    _
  %s11 = ssub.s32 1, %s9
  %s12 = scalar_select 0, %s11, %s9
  $region1: #{tpu_custom_call.1} parent=0
    #allocation2 [shape = 'u8[8192]{0}', space=vmem, size = 0x2000, scoped, tag = 'input window, operand 0, single buffered']
    #allocation3 [shape = 's32[1]{0}', space=sflag, size = 0x4, scoped, tag = 'scoped memory for tpu_custom_call.1']
    #allocation4 [shape = 's32[1]{0}', space=sflag, size = 0x4, scoped, tag = 'scoped memory for tpu_custom_call.1']
    #allocation5 [shape = 'u8[8192]{0}', space=vmem, size = 0x2000, scoped, tag = 'input window, operand 1, single buffered']
    #allocation6 [shape = 's32[1]{0}', space=sflag, size = 0x4, scoped, tag = 'scoped memory for tpu_custom_call.1']
    #allocation7 [shape = 'u8[49152]{0}', space=vmem, size = 0xc000, scoped, tag = 'input window, operand 2, single buffered']
    #allocation8 [shape = 'u8[32768]{0}', space=vmem, size = 0x8000, scoped, tag = 'input window, operand 4, single buffered']
    #allocation9 [shape = 's32[1]{0}', space=sflag, size = 0x4, scoped, tag = 'scoped memory for tpu_custom_call.1']
    #allocation10 [shape = 'u8[16384]{0}', space=vmem, size = 0x4000, scoped, tag = 'input window, operand 6, single buffered']
    #allocation11 [shape = 'u8[8192]{0}', space=vmem, size = 0x2000, scoped, tag = 'output window, operand 0, single buffered']
    %13 = vsyncpa [#allocation3], 0
    %14 = vsyncpa [#allocation6], 0
    %15 = vsyncpa [#allocation9], 0
    %16 = vsyncpa [#allocation4], 0
    // Predicated region
    $region2: #{tpu_custom_call.1} parent=1 // pred_check
      _
    $region3: #{tpu_custom_call.1} parent=1 // pred_check_branch
      %18 = sbr.rel (0) target = $region5
    $region4: #{tpu_custom_call.1} parent=1 // pred_region
      %s20 = ssub.s32 256, 256
      %21 = vsyncadd [#allocation3], %s20
      %s22 = sshll.u32 [#allocation2], 4
      %s23 = int_to_ptr.vmem [resolvable:$true] %s22
      %28 = dma.hbm_to_vmem [thread:$0]  %s0, 256, %s23, [#allocation3], 128, 128, 8
    $region5: #{tpu_custom_call.1} parent=1 // pred_fallthru
      _
    // Predicated region
    $region6: #{tpu_custom_call.1} parent=1 // pred_check
      _
    $region7: #{tpu_custom_call.1} parent=1 // pred_check_branch
      %30 = sbr.rel (0) target = $region9
    $region8: #{tpu_custom_call.1} parent=1 // pred_region
      %s32 = ssub.s32 256, 256
      %33 = vsyncadd [#allocation6], %s32
      %s34 = sshll.u32 [#allocation5], 4
      %s35 = int_to_ptr.vmem [resolvable:$true] %s34
      %40 = dma.hbm_to_vmem [thread:$0]  %s1, 256, %s35, [#allocation6], 128, 128, 8
    $region9: #{tpu_custom_call.1} parent=1 // pred_fallthru
      _
    // Predicated region
    $region10: #{tpu_custom_call.1} parent=1 // pred_check
      _
    $region11: #{tpu_custom_call.1} parent=1 // pred_check_branch
      %42 = sbr.rel (0) target = $region13
    $region12: #{tpu_custom_call.1} parent=1 // pred_region
      %s44 = ssub.s32 1536, 1536
      %45 = vsyncadd [#allocation6], %s44
      %s46 = sshll.u32 [#allocation7], 4
      %s47 = int_to_ptr.vmem [resolvable:$true] %s46
      %52 = dma.hbm_to_vmem [thread:$0]  %s2, 1536, %s47, [#allocation6], 128, 128, 8
    $region13: #{tpu_custom_call.1} parent=1 // pred_fallthru
      _
    // Predicated region
    $region14: #{tpu_custom_call.1} parent=1 // pred_check
      _
    $region15: #{tpu_custom_call.1} parent=1 // pred_check_branch
      %54 = sbr.rel (0) target = $region17
    $region16: #{tpu_custom_call.1} parent=1 // pred_region
      _
    $region17: #{tpu_custom_call.1} parent=1 // pred_fallthru
      _
    // Predicated region
    $region18: #{tpu_custom_call.1} parent=1 // pred_check
      _
    $region19: #{tpu_custom_call.1} parent=1 // pred_check_branch
      %56 = sbr.rel (0) target = $region21
    $region20: #{tpu_custom_call.1} parent=1 // pred_region
      %s58 = ssub.s32 1024, 1024
      %59 = vsyncadd [#allocation9], %s58
      %s60 = sshll.u32 [#allocation8], 4
      %s61 = int_to_ptr.vmem [resolvable:$true] %s60
      %66 = dma.hbm_to_vmem [thread:$0]  %s4, 1024, %s61, [#allocation9], 128, 128, 8
    $region21: #{tpu_custom_call.1} parent=1 // pred_fallthru
      _
    // Predicated region
    $region22: #{tpu_custom_call.1} parent=1 // pred_check
      _
    $region23: #{tpu_custom_call.1} parent=1 // pred_check_branch
      %68 = sbr.rel (0) target = $region25
    $region24: #{tpu_custom_call.1} parent=1 // pred_region
      _
    $region25: #{tpu_custom_call.1} parent=1 // pred_fallthru
      _
    // Predicated region
    $region26: #{tpu_custom_call.1} parent=1 // pred_check
      _
    $region27: #{tpu_custom_call.1} parent=1 // pred_check_branch
      %70 = sbr.rel (0) target = $region29
    $region28: #{tpu_custom_call.1} parent=1 // pred_region
      %s72 = ssub.s32 512, 512
      %73 = vsyncadd [#allocation9], %s72
      %s74 = sshll.u32 [#allocation10], 4
      %s75 = int_to_ptr.vmem [resolvable:$true] %s74
      %80 = dma.hbm_to_vmem [thread:$0]  %s6, 512, %s75, [#allocation9], 128, 128, 8
    $region29: #{tpu_custom_call.1} parent=1 // pred_fallthru
      _
    // Predicated region
    $region30: #{tpu_custom_call.1} parent=1 // pred_check
      _
    $region31: #{tpu_custom_call.1} parent=1 // pred_check_branch
      %82 = sbr.rel (0) target = $region33
    $region32: #{tpu_custom_call.1} parent=1 // pred_region
      _
    $region33: #{tpu_custom_call.1} parent=1 // pred_fallthru
      _
    // Predicated region
    $region34: #{tpu_custom_call.1} parent=1 // pred_check
      _
    $region35: #{tpu_custom_call.1} parent=1 // pred_check_branch
      %84 = sbr.rel (0) target = $region37
    $region36: #{tpu_custom_call.1} parent=1 // pred_region
      %85 = dma.done [#allocation3], 256
    $region37: #{tpu_custom_call.1} parent=1 // pred_fallthru
      _
    // Predicated region
    $region38: #{tpu_custom_call.1} parent=1 // pred_check
      _
    $region39: #{tpu_custom_call.1} parent=1 // pred_check_branch
      %87 = sbr.rel (0) target = $region41
    $region40: #{tpu_custom_call.1} parent=1 // pred_region
      %88 = dma.done [#allocation6], 256
    $region41: #{tpu_custom_call.1} parent=1 // pred_fallthru
      _
    // Predicated region
    $region42: #{tpu_custom_call.1} parent=1 // pred_check
      _
    $region43: #{tpu_custom_call.1} parent=1 // pred_check_branch
      %90 = sbr.rel (0) target = $region45
    $region44: #{tpu_custom_call.1} parent=1 // pred_region
      %91 = dma.done [#allocation6], 1536
    $region45: #{tpu_custom_call.1} parent=1 // pred_fallthru
      _
    // Predicated region
    $region46: #{tpu_custom_call.1} parent=1 // pred_check
      _
    $region47: #{tpu_custom_call.1} parent=1 // pred_check_branch
      %93 = sbr.rel (0) target = $region49
    $region48: #{tpu_custom_call.1} parent=1 // pred_region
      %94 = dma.done [#allocation9], 1024
    $region49: #{tpu_custom_call.1} parent=1 // pred_fallthru
      _
    // Predicated region
    $region50: #{tpu_custom_call.1} parent=1 // pred_check
      _
    $region51: #{tpu_custom_call.1} parent=1 // pred_check_branch
      %96 = sbr.rel (0) target = $region53
    $region52: #{tpu_custom_call.1} parent=1 // pred_region
      %97 = dma.done [#allocation9], 512
    $region53: #{tpu_custom_call.1} parent=1 // pred_fallthru
      _
    %v98 = vld [vmem:[#allocation2] sm:$0xff]
    %v99 = vld [vmem:[#allocation2 + $0x8] sm:$0xff]
    %v100 = vld [vmem:[#allocation7] sm:$0xff]
    %v101 = vld [vmem:[#allocation7 + $0x8] sm:$0xff]
    %v102 = vld [vmem:[#allocation7 + $0x10] sm:$0xff]
    %v103 = vld [vmem:[#allocation7 + $0x18] sm:$0xff]
    %v104 = vld [vmem:[#allocation7 + $0x20] sm:$0xff]
    %v105 = vld [vmem:[#allocation7 + $0x28] sm:$0xff]
    %v106 = vld [vmem:[#allocation7 + $0x30] sm:$0xff]
    %v107 = vld [vmem:[#allocation7 + $0x38] sm:$0xff]
    %v108 = vld [vmem:[#allocation7 + $0x40] sm:$0xff]
    %v109 = vld [vmem:[#allocation7 + $0x48] sm:$0xff]
    %v110 = vld [vmem:[#allocation7 + $0x50] sm:$0xff]
    %v111 = vld [vmem:[#allocation7 + $0x58] sm:$0xff]
    %v112 = vld [vmem:[%s3] sm:$0x1]
    %v114 = vlaneseq
    %v115 = vshrl.u32 %v114, 7
    %v116 = vsub.s32 0, %v115
    %v117 = vrot.slane %v112, %v116
    %vm119 = vcmask 785408
    %v121 = vsel %vm119, %v98, 0
    %v124 = vsel %vm119, %v99, 0
    %126 = vmatprep.subr.mxu0 0.0
    %127 = vmatpush1.msra.mxu0 %v100
    %128 = vmatprep.subr.mxu0 0.0
    %129 = vmatpush1.msra.mxu0 %v101
    %130 = vmatprep.subr.mxu0 0.0
    %131 = vmatpush1.msra.mxu0 %v102
    %132 = vmatprep.subr.mxu0 0.0
    %133 = vmatpush1.msra.mxu0 %v103
    %134 = vmatprep.subr.mxu0 0.0
    %135 = vmatpush1.msra.mxu0 %v104
    %136 = vmatprep.subr.mxu0 0.0
    %137 = vmatpush1.msra.mxu0 %v105
    %138 = vmatprep.subr.mxu0 0.0
    %139 = vmatpush1.msra.mxu0 %v106
    %140 = vmatprep.subr.mxu0 0.0
    %141 = vmatpush1.msra.mxu0 %v107
    %142 = vmatprep.subr.mxu0 0.0
    %143 = vmatpush1.msra.mxu0 %v108
    %144 = vmatprep.subr.mxu0 0.0
    %145 = vmatpush1.msra.mxu0 %v109
    %146 = vmatprep.subr.mxu0 0.0
    %147 = vmatpush1.msra.mxu0 %v110
    %148 = vmatprep.subr.mxu0 0.0
    %149 = vmatpush1.msra.mxu0 %v111
    %150 = vmatprep.subr.mxu0 0.0
    %151 = vmatpush1.msra.mxu0 0.0
    %152 = vmatprep.subr.mxu0 0.0
    %153 = vmatpush1.msra.mxu0 0.0
    %154 = vmatprep.subr.mxu0 0.0
    %155 = vmatpush1.msra.mxu0 0.0
    %156 = vmatprep.subr.mxu0 0.0
    %157 = vmatpush1.msra.mxu0 0.0
    %158 = vmatprep.subr.mxu0 0.0
    %159 = vmatpush1.msra.mxu0 0.0
    %160 = vmatprep.subr.mxu0 0.0
    %161 = vmatpush1.msra.mxu0 0.0
    %162 = vmatprep.subr.mxu0 0.0
    %163 = vmatpush1.msra.mxu0 0.0
    %164 = vmatprep.subr.mxu0 0.0
    %165 = vmatpush1.msra.mxu0 0.0
    %166 = vmatprep.subr.mxu0 0.0
    %167 = vmatpush1.msra.mxu0 0.0
    %168 = vmatprep.subr.mxu0 0.0
    %169 = vmatpush1.msra.mxu0 0.0
    %170 = vmatprep.subr.mxu0 0.0
    %171 = vmatpush1.msra.mxu0 0.0
    %172 = vmatprep.subr.mxu0 0.0
    %173 = vmatpush1.msra.mxu0 0.0
    %174 = vmatprep.subr.mxu0 0.0
    %175 = vmatpush1.msra.mxu0 0.0
    %176 = vmatprep.subr.mxu0 0.0
    %177 = vmatpush1.msra.mxu0 0.0
    %178 = vmatprep.subr.mxu0 0.0
    %179 = vmatpush1.msra.mxu0 0.0
    %180 = vmatprep.subr.mxu0 0.0
    %181 = vmatpush1.msra.mxu0 0.0
    %182 = vmatprep.subr.mxu0 0.0
    %183 = vmatpush1.msra.mxu0 0.0
    %184 = vmatprep.subr.mxu0 0.0
    %185 = vmatpush1.msra.mxu0 0.0
    %186 = vmatprep.subr.mxu0 0.0
    %187 = vmatpush1.msra.mxu0 0.0
    %188 = vmatprep.subr.mxu0 0.0
    %189 = vmatpush1.msra.mxu0 0.0
    %190 = vmatprep.mubr.f32.mxu0 0.0
    %191 = vmatmul.mubr.f32.gmra.mrb[0].mxu0 %v121
    %v192 = vpop.f32.mrb[0].mxu0
    %v193 = vadd.f32 %v117, %v192
    %v194 = vpop.f32.mrb[0].mxu0
    %195 = vmatprep.mubr.f32.mxu0 0.0
    %196 = vmatmul.mubr.f32.gmra.mrb[0].mxu0 %v124
    %v197 = vpop.f32.mrb[0].mxu0
    %v198 = vadd.f32 %v117, %v197
    %v199 = vpop.f32.mrb[0].mxu0
    %200 = vdwg.mxu0
    %v201 = vld [vmem:[#allocation5] sm:$0xff]
    %v202 = vld [vmem:[#allocation5 + $0x8] sm:$0xff]
    %v203 = vld [vmem:[#allocation8] sm:$0xff]
    %v204 = vld [vmem:[#allocation8 + $0x8] sm:$0xff]
    %v205 = vld [vmem:[#allocation8 + $0x10] sm:$0xff]
    %v206 = vld [vmem:[#allocation8 + $0x18] sm:$0xff]
    %v207 = vld [vmem:[#allocation8 + $0x20] sm:$0xff]
    %v208 = vld [vmem:[#allocation8 + $0x28] sm:$0xff]
    %v209 = vld [vmem:[#allocation8 + $0x30] sm:$0xff]
    %v210 = vld [vmem:[#allocation8 + $0x38] sm:$0xff]
    %v211 = vld [vmem:[%s5] sm:$0x1]
    %v213 = vlaneseq
    %v214 = vshrl.u32 %v213, 7
    %v215 = vsub.s32 0, %v214
    %v216 = vrot.slane %v211, %v215
    %vm218 = vcmask 523264
    %v220 = vsel %vm218, %v201, 0
    %v223 = vsel %vm218, %v202, 0
    %225 = vmatprep.subr.mxu0 0.0
    %226 = vmatpush1.msra.mxu0 %v203
    %227 = vmatprep.subr.mxu0 0.0
    %228 = vmatpush1.msra.mxu0 %v204
    %229 = vmatprep.subr.mxu0 0.0
    %230 = vmatpush1.msra.mxu0 %v205
    %231 = vmatprep.subr.mxu0 0.0
    %232 = vmatpush1.msra.mxu0 %v206
    %233 = vmatprep.subr.mxu0 0.0
    %234 = vmatpush1.msra.mxu0 %v207
    %235 = vmatprep.subr.mxu0 0.0
    %236 = vmatpush1.msra.mxu0 %v208
    %237 = vmatprep.subr.mxu0 0.0
    %238 = vmatpush1.msra.mxu0 %v209
    %239 = vmatprep.subr.mxu0 0.0
    %240 = vmatpush1.msra.mxu0 %v210
    %241 = vmatprep.subr.mxu0 0.0
    %242 = vmatpush1.msra.mxu0 0.0
    %243 = vmatprep.subr.mxu0 0.0
    %244 = vmatpush1.msra.mxu0 0.0
    %245 = vmatprep.subr.mxu0 0.0
    %246 = vmatpush1.msra.mxu0 0.0
    %247 = vmatprep.subr.mxu0 0.0
    %248 = vmatpush1.msra.mxu0 0.0
    %249 = vmatprep.subr.mxu0 0.0
    %250 = vmatpush1.msra.mxu0 0.0
    %251 = vmatprep.subr.mxu0 0.0
    %252 = vmatpush1.msra.mxu0 0.0
    %253 = vmatprep.subr.mxu0 0.0
    %254 = vmatpush1.msra.mxu0 0.0
    %255 = vmatprep.subr.mxu0 0.0
    %256 = vmatpush1.msra.mxu0 0.0
    %257 = vmatprep.subr.mxu0 0.0
    %258 = vmatpush1.msra.mxu0 0.0
    %259 = vmatprep.subr.mxu0 0.0
    %260 = vmatpush1.msra.mxu0 0.0
    %261 = vmatprep.subr.mxu0 0.0
    %262 = vmatpush1.msra.mxu0 0.0
    %263 = vmatprep.subr.mxu0 0.0
    %264 = vmatpush1.msra.mxu0 0.0
    %265 = vmatprep.subr.mxu0 0.0
    %266 = vmatpush1.msra.mxu0 0.0
    %267 = vmatprep.subr.mxu0 0.0
    %268 = vmatpush1.msra.mxu0 0.0
    %269 = vmatprep.subr.mxu0 0.0
    %270 = vmatpush1.msra.mxu0 0.0
    %271 = vmatprep.subr.mxu0 0.0
    %272 = vmatpush1.msra.mxu0 0.0
    %273 = vmatprep.subr.mxu0 0.0
    %274 = vmatpush1.msra.mxu0 0.0
    %275 = vmatprep.subr.mxu0 0.0
    %276 = vmatpush1.msra.mxu0 0.0
    %277 = vmatprep.subr.mxu0 0.0
    %278 = vmatpush1.msra.mxu0 0.0
    %279 = vmatprep.subr.mxu0 0.0
    %280 = vmatpush1.msra.mxu0 0.0
    %281 = vmatprep.subr.mxu0 0.0
    %282 = vmatpush1.msra.mxu0 0.0
    %283 = vmatprep.subr.mxu0 0.0
    %284 = vmatpush1.msra.mxu0 0.0
    %285 = vmatprep.subr.mxu0 0.0
    %286 = vmatpush1.msra.mxu0 0.0
    %287 = vmatprep.subr.mxu0 0.0
    %288 = vmatpush1.msra.mxu0 0.0
    %289 = vmatprep.mubr.f32.mxu0 0.0
    %290 = vmatmul.mubr.f32.gmra.mrb[0].mxu0 %v220
    %v291 = vpop.f32.mrb[0].mxu0
    %v292 = vadd.f32 %v216, %v291
    %v293 = vpop.f32.mrb[0].mxu0
    %294 = vmatprep.mubr.f32.mxu0 0.0
    %295 = vmatmul.mubr.f32.gmra.mrb[0].mxu0 %v223
    %v296 = vpop.f32.mrb[0].mxu0
    %v297 = vadd.f32 %v216, %v296
    %v298 = vpop.f32.mrb[0].mxu0
    %299 = vdwg.mxu0
    %301 = vrot.lane.b32.xlu0 %v193, 96
    %v302 = vpop.permute.xlu0 %301
    %303 = vrot.lane.b32.xlu0 %v193, 64
    %v304 = vpop.permute.xlu0 %303
    %306 = vrot.lane.b32.xlu0 %v198, 96
    %v307 = vpop.permute.xlu0 %306
    %308 = vrot.lane.b32.xlu0 %v198, 64
    %v309 = vpop.permute.xlu0 %308
    %310 = vrot.lane.b32.xlu0 %v193, 120
    %v311 = vpop.permute.xlu0 %310
    %312 = vrot.lane.b32.xlu0 %v302, 120
    %v313 = vpop.permute.xlu0 %312
    %314 = vrot.lane.b32.xlu0 %v304, 120
    %v315 = vpop.permute.xlu0 %314
    %316 = vrot.lane.b32.xlu0 %v193, 112
    %v317 = vpop.permute.xlu0 %316
    %318 = vrot.lane.b32.xlu0 %v302, 112
    %v319 = vpop.permute.xlu0 %318
    %320 = vrot.lane.b32.xlu0 %v304, 112
    %v321 = vpop.permute.xlu0 %320
    %322 = vrot.lane.b32.xlu0 %v193, 104
    %v323 = vpop.permute.xlu0 %322
    %324 = vrot.lane.b32.xlu0 %v302, 104
    %v325 = vpop.permute.xlu0 %324
    %326 = vrot.lane.b32.xlu0 %v304, 104
    %v327 = vpop.permute.xlu0 %326
    %328 = vrot.lane.b32.xlu0 %v198, 120
    %v329 = vpop.permute.xlu0 %328
    %330 = vrot.lane.b32.xlu0 %v307, 120
    %v331 = vpop.permute.xlu0 %330
    %332 = vrot.lane.b32.xlu0 %v309, 120
    %v333 = vpop.permute.xlu0 %332
    %334 = vrot.lane.b32.xlu0 %v198, 112
    %v335 = vpop.permute.xlu0 %334
    %336 = vrot.lane.b32.xlu0 %v307, 112
    %v337 = vpop.permute.xlu0 %336
    %338 = vrot.lane.b32.xlu0 %v309, 112
    %v339 = vpop.permute.xlu0 %338
    %340 = vrot.lane.b32.xlu0 %v198, 104
    %v341 = vpop.permute.xlu0 %340
    %342 = vrot.lane.b32.xlu0 %v307, 104
    %v343 = vpop.permute.xlu0 %342
    %344 = vrot.lane.b32.xlu0 %v309, 104
    %v345 = vpop.permute.xlu0 %344
    %347 = vrot.lane.b32.xlu0 %v292, 120
    %v348 = vpop.permute.xlu0 %347
    %349 = vrot.lane.b32.xlu0 %v292, 112
    %v350 = vpop.permute.xlu0 %349
    %351 = vrot.lane.b32.xlu0 %v292, 104
    %v352 = vpop.permute.xlu0 %351
    %354 = vrot.lane.b32.xlu0 %v297, 120
    %v355 = vpop.permute.xlu0 %354
    %356 = vrot.lane.b32.xlu0 %v297, 112
    %v357 = vpop.permute.xlu0 %356
    %358 = vrot.lane.b32.xlu0 %v297, 104
    %v359 = vpop.permute.xlu0 %358
    %vm360 = vcmask 64512
    %v361 = vsel %vm360, %v193, 0
    %v363 = vsel %vm360, %v302, 0
    %v365 = vsel %vm360, %v304, 0
    %v367 = vsel %vm360, %v292, 0
    %369 = vmatprep.subr.mxu0 0.0
    %370 = vmatpush1.xpose.msra.mxu0 %v367
    %371 = vmatprep.subr.mxu0 0.0
    %372 = vmatpush1.xpose.msra.mxu0 0.0
    %373 = vmatprep.subr.mxu0 0.0
    %374 = vmatpush1.xpose.msra.mxu0 0.0
    %375 = vmatprep.subr.mxu0 0.0
    %376 = vmatpush1.xpose.msra.mxu0 0.0
    %377 = vmatprep.subr.mxu0 0.0
    %378 = vmatpush1.xpose.msra.mxu0 0.0
    %379 = vmatprep.subr.mxu0 0.0
    %380 = vmatpush1.xpose.msra.mxu0 0.0
    %381 = vmatprep.subr.mxu0 0.0
    %382 = vmatpush1.xpose.msra.mxu0 0.0
    %383 = vmatprep.subr.mxu0 0.0
    %384 = vmatpush1.xpose.msra.mxu0 0.0
    %385 = vmatprep.subr.mxu0 0.0
    %386 = vmatpush1.xpose.msra.mxu0 0.0
    %387 = vmatprep.subr.mxu0 0.0
    %388 = vmatpush1.xpose.msra.mxu0 0.0
    %389 = vmatprep.subr.mxu0 0.0
    %390 = vmatpush1.xpose.msra.mxu0 0.0
    %391 = vmatprep.subr.mxu0 0.0
    %392 = vmatpush1.xpose.msra.mxu0 0.0
    %393 = vmatprep.subr.mxu0 0.0
    %394 = vmatpush1.xpose.msra.mxu0 0.0
    %395 = vmatprep.subr.mxu0 0.0
    %396 = vmatpush1.xpose.msra.mxu0 0.0
    %397 = vmatprep.subr.mxu0 0.0
    %398 = vmatpush1.xpose.msra.mxu0 0.0
    %399 = vmatprep.subr.mxu0 0.0
    %400 = vmatpush1.xpose.msra.mxu0 0.0
    %401 = vmatprep.subr.mxu0 0.0
    %402 = vmatpush1.xpose.msra.mxu0 0.0
    %403 = vmatprep.subr.mxu0 0.0
    %404 = vmatpush1.xpose.msra.mxu0 0.0
    %405 = vmatprep.subr.mxu0 0.0
    %406 = vmatpush1.xpose.msra.mxu0 0.0
    %407 = vmatprep.subr.mxu0 0.0
    %408 = vmatpush1.xpose.msra.mxu0 0.0
    %409 = vmatprep.subr.mxu0 0.0
    %410 = vmatpush1.xpose.msra.mxu0 0.0
    %411 = vmatprep.subr.mxu0 0.0
    %412 = vmatpush1.xpose.msra.mxu0 0.0
    %413 = vmatprep.subr.mxu0 0.0
    %414 = vmatpush1.xpose.msra.mxu0 0.0
    %415 = vmatprep.subr.mxu0 0.0
    %416 = vmatpush1.xpose.msra.mxu0 0.0
    %417 = vmatprep.subr.mxu0 0.0
    %418 = vmatpush1.xpose.msra.mxu0 0.0
    %419 = vmatprep.subr.mxu0 0.0
    %420 = vmatpush1.xpose.msra.mxu0 0.0
    %421 = vmatprep.subr.mxu0 0.0
    %422 = vmatpush1.xpose.msra.mxu0 0.0
    %423 = vmatprep.subr.mxu0 0.0
    %424 = vmatpush1.xpose.msra.mxu0 0.0
    %425 = vmatprep.subr.mxu0 0.0
    %426 = vmatpush1.xpose.msra.mxu0 0.0
    %427 = vmatprep.subr.mxu0 0.0
    %428 = vmatpush1.xpose.msra.mxu0 0.0
    %429 = vmatprep.subr.mxu0 0.0
    %430 = vmatpush1.xpose.msra.mxu0 0.0
    %431 = vmatprep.subr.mxu0 0.0
    %432 = vmatpush1.xpose.msra.mxu0 0.0
    %433 = vmatprep.mubr.f32.mxu0 0.0
    %434 = vmatmul.mubr.f32.gmra.mrb[0].mxu0 %v361
    %v435 = vpop.f32.mrb[0].mxu0
    %v436 = vadd.f32 0.0, %v435
    %v437 = vpop.f32.mrb[0].mxu0
    %438 = vmatprep.mubr.f32.mxu0 0.0
    %439 = vmatmul.mubr.f32.gmra.mrb[0].mxu0 %v363
    %v440 = vpop.f32.mrb[0].mxu0
    %v441 = vadd.f32 0.0, %v440
    %v442 = vpop.f32.mrb[0].mxu0
    %443 = vmatprep.mubr.f32.mxu0 0.0
    %444 = vmatmul.mubr.f32.gmra.mrb[0].mxu0 %v365
    %v445 = vpop.f32.mrb[0].mxu0
    %v446 = vadd.f32 0.0, %v445
    %v447 = vpop.f32.mrb[0].mxu0
    %448 = vdwg.mxu0
    %v449 = vsel %vm360, %v311, 0
    %v451 = vsel %vm360, %v313, 0
    %v453 = vsel %vm360, %v315, 0
    %v455 = vsel %vm360, %v348, 0
    %457 = vmatprep.subr.mxu0 0.0
    %458 = vmatpush1.xpose.msra.mxu0 %v455
    %459 = vmatprep.subr.mxu0 0.0
    %460 = vmatpush1.xpose.msra.mxu0 0.0
    %461 = vmatprep.subr.mxu0 0.0
    %462 = vmatpush1.xpose.msra.mxu0 0.0
    %463 = vmatprep.subr.mxu0 0.0
    %464 = vmatpush1.xpose.msra.mxu0 0.0
    %465 = vmatprep.subr.mxu0 0.0
    %466 = vmatpush1.xpose.msra.mxu0 0.0
    %467 = vmatprep.subr.mxu0 0.0
    %468 = vmatpush1.xpose.msra.mxu0 0.0
    %469 = vmatprep.subr.mxu0 0.0
    %470 = vmatpush1.xpose.msra.mxu0 0.0
    %471 = vmatprep.subr.mxu0 0.0
    %472 = vmatpush1.xpose.msra.mxu0 0.0
    %473 = vmatprep.subr.mxu0 0.0
    %474 = vmatpush1.xpose.msra.mxu0 0.0
    %475 = vmatprep.subr.mxu0 0.0
    %476 = vmatpush1.xpose.msra.mxu0 0.0
    %477 = vmatprep.subr.mxu0 0.0
    %478 = vmatpush1.xpose.msra.mxu0 0.0
    %479 = vmatprep.subr.mxu0 0.0
    %480 = vmatpush1.xpose.msra.mxu0 0.0
    %481 = vmatprep.subr.mxu0 0.0
    %482 = vmatpush1.xpose.msra.mxu0 0.0
    %483 = vmatprep.subr.mxu0 0.0
    %484 = vmatpush1.xpose.msra.mxu0 0.0
    %485 = vmatprep.subr.mxu0 0.0
    %486 = vmatpush1.xpose.msra.mxu0 0.0
    %487 = vmatprep.subr.mxu0 0.0
    %488 = vmatpush1.xpose.msra.mxu0 0.0
    %489 = vmatprep.subr.mxu0 0.0
    %490 = vmatpush1.xpose.msra.mxu0 0.0
    %491 = vmatprep.subr.mxu0 0.0
    %492 = vmatpush1.xpose.msra.mxu0 0.0
    %493 = vmatprep.subr.mxu0 0.0
    %494 = vmatpush1.xpose.msra.mxu0 0.0
    %495 = vmatprep.subr.mxu0 0.0
    %496 = vmatpush1.xpose.msra.mxu0 0.0
    %497 = vmatprep.subr.mxu0 0.0
    %498 = vmatpush1.xpose.msra.mxu0 0.0
    %499 = vmatprep.subr.mxu0 0.0
    %500 = vmatpush1.xpose.msra.mxu0 0.0
    %501 = vmatprep.subr.mxu0 0.0
    %502 = vmatpush1.xpose.msra.mxu0 0.0
    %503 = vmatprep.subr.mxu0 0.0
    %504 = vmatpush1.xpose.msra.mxu0 0.0
    %505 = vmatprep.subr.mxu0 0.0
    %506 = vmatpush1.xpose.msra.mxu0 0.0
    %507 = vmatprep.subr.mxu0 0.0
    %508 = vmatpush1.xpose.msra.mxu0 0.0
    %509 = vmatprep.subr.mxu0 0.0
    %510 = vmatpush1.xpose.msra.mxu0 0.0
    %511 = vmatprep.subr.mxu0 0.0
    %512 = vmatpush1.xpose.msra.mxu0 0.0
    %513 = vmatprep.subr.mxu0 0.0
    %514 = vmatpush1.xpose.msra.mxu0 0.0
    %515 = vmatprep.subr.mxu0 0.0
    %516 = vmatpush1.xpose.msra.mxu0 0.0
    %517 = vmatprep.subr.mxu0 0.0
    %518 = vmatpush1.xpose.msra.mxu0 0.0
    %519 = vmatprep.subr.mxu0 0.0
    %520 = vmatpush1.xpose.msra.mxu0 0.0
    %521 = vmatprep.mubr.f32.mxu0 0.0
    %522 = vmatmul.mubr.f32.gmra.mrb[0].mxu0 %v449
    %v523 = vpop.f32.mrb[0].mxu0
    %v524 = vadd.f32 0.0, %v523
    %v525 = vpop.f32.mrb[0].mxu0
    %526 = vmatprep.mubr.f32.mxu0 0.0
    %527 = vmatmul.mubr.f32.gmra.mrb[0].mxu0 %v451
    %v528 = vpop.f32.mrb[0].mxu0
    %v529 = vadd.f32 0.0, %v528
    %v530 = vpop.f32.mrb[0].mxu0
    %531 = vmatprep.mubr.f32.mxu0 0.0
    %532 = vmatmul.mubr.f32.gmra.mrb[0].mxu0 %v453
    %v533 = vpop.f32.mrb[0].mxu0
    %v534 = vadd.f32 0.0, %v533
    %v535 = vpop.f32.mrb[0].mxu0
    %536 = vdwg.mxu0
    %v537 = vsel %vm360, %v317, 0
    %v539 = vsel %vm360, %v319, 0
    %v541 = vsel %vm360, %v321, 0
    %v543 = vsel %vm360, %v350, 0
    %545 = vmatprep.subr.mxu0 0.0
    %546 = vmatpush1.xpose.msra.mxu0 %v543
    %547 = vmatprep.subr.mxu0 0.0
    %548 = vmatpush1.xpose.msra.mxu0 0.0
    %549 = vmatprep.subr.mxu0 0.0
    %550 = vmatpush1.xpose.msra.mxu0 0.0
    %551 = vmatprep.subr.mxu0 0.0
    %552 = vmatpush1.xpose.msra.mxu0 0.0
    %553 = vmatprep.subr.mxu0 0.0
    %554 = vmatpush1.xpose.msra.mxu0 0.0
    %555 = vmatprep.subr.mxu0 0.0
    %556 = vmatpush1.xpose.msra.mxu0 0.0
    %557 = vmatprep.subr.mxu0 0.0
    %558 = vmatpush1.xpose.msra.mxu0 0.0
    %559 = vmatprep.subr.mxu0 0.0
    %560 = vmatpush1.xpose.msra.mxu0 0.0
    %561 = vmatprep.subr.mxu0 0.0
    %562 = vmatpush1.xpose.msra.mxu0 0.0
    %563 = vmatprep.subr.mxu0 0.0
    %564 = vmatpush1.xpose.msra.mxu0 0.0
    %565 = vmatprep.subr.mxu0 0.0
    %566 = vmatpush1.xpose.msra.mxu0 0.0
    %567 = vmatprep.subr.mxu0 0.0
    %568 = vmatpush1.xpose.msra.mxu0 0.0
    %569 = vmatprep.subr.mxu0 0.0
    %570 = vmatpush1.xpose.msra.mxu0 0.0
    %571 = vmatprep.subr.mxu0 0.0
    %572 = vmatpush1.xpose.msra.mxu0 0.0
    %573 = vmatprep.subr.mxu0 0.0
    %574 = vmatpush1.xpose.msra.mxu0 0.0
    %575 = vmatprep.subr.mxu0 0.0
    %576 = vmatpush1.xpose.msra.mxu0 0.0
    %577 = vmatprep.subr.mxu0 0.0
    %578 = vmatpush1.xpose.msra.mxu0 0.0
    %579 = vmatprep.subr.mxu0 0.0
    %580 = vmatpush1.xpose.msra.mxu0 0.0
    %581 = vmatprep.subr.mxu0 0.0
    %582 = vmatpush1.xpose.msra.mxu0 0.0
    %583 = vmatprep.subr.mxu0 0.0
    %584 = vmatpush1.xpose.msra.mxu0 0.0
    %585 = vmatprep.subr.mxu0 0.0
    %586 = vmatpush1.xpose.msra.mxu0 0.0
    %587 = vmatprep.subr.mxu0 0.0
    %588 = vmatpush1.xpose.msra.mxu0 0.0
    %589 = vmatprep.subr.mxu0 0.0
    %590 = vmatpush1.xpose.msra.mxu0 0.0
    %591 = vmatprep.subr.mxu0 0.0
    %592 = vmatpush1.xpose.msra.mxu0 0.0
    %593 = vmatprep.subr.mxu0 0.0
    %594 = vmatpush1.xpose.msra.mxu0 0.0
    %595 = vmatprep.subr.mxu0 0.0
    %596 = vmatpush1.xpose.msra.mxu0 0.0
    %597 = vmatprep.subr.mxu0 0.0
    %598 = vmatpush1.xpose.msra.mxu0 0.0
    %599 = vmatprep.subr.mxu0 0.0
    %600 = vmatpush1.xpose.msra.mxu0 0.0
    %601 = vmatprep.subr.mxu0 0.0
    %602 = vmatpush1.xpose.msra.mxu0 0.0
    %603 = vmatprep.subr.mxu0 0.0
    %604 = vmatpush1.xpose.msra.mxu0 0.0
    %605 = vmatprep.subr.mxu0 0.0
    %606 = vmatpush1.xpose.msra.mxu0 0.0
    %607 = vmatprep.subr.mxu0 0.0
    %608 = vmatpush1.xpose.msra.mxu0 0.0
    %609 = vmatprep.mubr.f32.mxu0 0.0
    %610 = vmatmul.mubr.f32.gmra.mrb[0].mxu0 %v537
    %v611 = vpop.f32.mrb[0].mxu0
    %v612 = vadd.f32 0.0, %v611
    %v613 = vpop.f32.mrb[0].mxu0
    %614 = vmatprep.mubr.f32.mxu0 0.0
    %615 = vmatmul.mubr.f32.gmra.mrb[0].mxu0 %v539
    %v616 = vpop.f32.mrb[0].mxu0
    %v617 = vadd.f32 0.0, %v616
    %v618 = vpop.f32.mrb[0].mxu0
    %619 = vmatprep.mubr.f32.mxu0 0.0
    %620 = vmatmul.mubr.f32.gmra.mrb[0].mxu0 %v541
    %v621 = vpop.f32.mrb[0].mxu0
    %v622 = vadd.f32 0.0, %v621
    %v623 = vpop.f32.mrb[0].mxu0
    %624 = vdwg.mxu0
    %v625 = vsel %vm360, %v323, 0
    %v627 = vsel %vm360, %v325, 0
    %v629 = vsel %vm360, %v327, 0
    %v631 = vsel %vm360, %v352, 0
    %633 = vmatprep.subr.mxu0 0.0
    %634 = vmatpush1.xpose.msra.mxu0 %v631
    %635 = vmatprep.subr.mxu0 0.0
    %636 = vmatpush1.xpose.msra.mxu0 0.0
    %637 = vmatprep.subr.mxu0 0.0
    %638 = vmatpush1.xpose.msra.mxu0 0.0
    %639 = vmatprep.subr.mxu0 0.0
    %640 = vmatpush1.xpose.msra.mxu0 0.0
    %641 = vmatprep.subr.mxu0 0.0
    %642 = vmatpush1.xpose.msra.mxu0 0.0
    %643 = vmatprep.subr.mxu0 0.0
    %644 = vmatpush1.xpose.msra.mxu0 0.0
    %645 = vmatprep.subr.mxu0 0.0
    %646 = vmatpush1.xpose.msra.mxu0 0.0
    %647 = vmatprep.subr.mxu0 0.0
    %648 = vmatpush1.xpose.msra.mxu0 0.0
    %649 = vmatprep.subr.mxu0 0.0
    %650 = vmatpush1.xpose.msra.mxu0 0.0
    %651 = vmatprep.subr.mxu0 0.0
    %652 = vmatpush1.xpose.msra.mxu0 0.0
    %653 = vmatprep.subr.mxu0 0.0
    %654 = vmatpush1.xpose.msra.mxu0 0.0
    %655 = vmatprep.subr.mxu0 0.0
    %656 = vmatpush1.xpose.msra.mxu0 0.0
    %657 = vmatprep.subr.mxu0 0.0
    %658 = vmatpush1.xpose.msra.mxu0 0.0
    %659 = vmatprep.subr.mxu0 0.0
    %660 = vmatpush1.xpose.msra.mxu0 0.0
    %661 = vmatprep.subr.mxu0 0.0
    %662 = vmatpush1.xpose.msra.mxu0 0.0
    %663 = vmatprep.subr.mxu0 0.0
    %664 = vmatpush1.xpose.msra.mxu0 0.0
    %665 = vmatprep.subr.mxu0 0.0
    %666 = vmatpush1.xpose.msra.mxu0 0.0
    %667 = vmatprep.subr.mxu0 0.0
    %668 = vmatpush1.xpose.msra.mxu0 0.0
    %669 = vmatprep.subr.mxu0 0.0
    %670 = vmatpush1.xpose.msra.mxu0 0.0
    %671 = vmatprep.subr.mxu0 0.0
    %672 = vmatpush1.xpose.msra.mxu0 0.0
    %673 = vmatprep.subr.mxu0 0.0
    %674 = vmatpush1.xpose.msra.mxu0 0.0
    %675 = vmatprep.subr.mxu0 0.0
    %676 = vmatpush1.xpose.msra.mxu0 0.0
    %677 = vmatprep.subr.mxu0 0.0
    %678 = vmatpush1.xpose.msra.mxu0 0.0
    %679 = vmatprep.subr.mxu0 0.0
    %680 = vmatpush1.xpose.msra.mxu0 0.0
    %681 = vmatprep.subr.mxu0 0.0
    %682 = vmatpush1.xpose.msra.mxu0 0.0
    %683 = vmatprep.subr.mxu0 0.0
    %684 = vmatpush1.xpose.msra.mxu0 0.0
    %685 = vmatprep.subr.mxu0 0.0
    %686 = vmatpush1.xpose.msra.mxu0 0.0
    %687 = vmatprep.subr.mxu0 0.0
    %688 = vmatpush1.xpose.msra.mxu0 0.0
    %689 = vmatprep.subr.mxu0 0.0
    %690 = vmatpush1.xpose.msra.mxu0 0.0
    %691 = vmatprep.subr.mxu0 0.0
    %692 = vmatpush1.xpose.msra.mxu0 0.0
    %693 = vmatprep.subr.mxu0 0.0
    %694 = vmatpush1.xpose.msra.mxu0 0.0
    %695 = vmatprep.subr.mxu0 0.0
    %696 = vmatpush1.xpose.msra.mxu0 0.0
    %697 = vmatprep.mubr.f32.mxu0 0.0
    %698 = vmatmul.mubr.f32.gmra.mrb[0].mxu0 %v625
    %v699 = vpop.f32.mrb[0].mxu0
    %v700 = vadd.f32 0.0, %v699
    %v701 = vpop.f32.mrb[0].mxu0
    %702 = vmatprep.mubr.f32.mxu0 0.0
    %703 = vmatmul.mubr.f32.gmra.mrb[0].mxu0 %v627
    %v704 = vpop.f32.mrb[0].mxu0
    %v705 = vadd.f32 0.0, %v704
    %v706 = vpop.f32.mrb[0].mxu0
    %707 = vmatprep.mubr.f32.mxu0 0.0
    %708 = vmatmul.mubr.f32.gmra.mrb[0].mxu0 %v629
    %v709 = vpop.f32.mrb[0].mxu0
    %v710 = vadd.f32 0.0, %v709
    %v711 = vpop.f32.mrb[0].mxu0
    %712 = vdwg.mxu0
    %v713 = vsel %vm360, %v198, 0
    %v715 = vsel %vm360, %v307, 0
    %v717 = vsel %vm360, %v309, 0
    %v719 = vsel %vm360, %v297, 0
    %721 = vmatprep.subr.mxu0 0.0
    %722 = vmatpush1.xpose.msra.mxu0 %v719
    %723 = vmatprep.subr.mxu0 0.0
    %724 = vmatpush1.xpose.msra.mxu0 0.0
    %725 = vmatprep.subr.mxu0 0.0
    %726 = vmatpush1.xpose.msra.mxu0 0.0
    %727 = vmatprep.subr.mxu0 0.0
    %728 = vmatpush1.xpose.msra.mxu0 0.0
    %729 = vmatprep.subr.mxu0 0.0
    %730 = vmatpush1.xpose.msra.mxu0 0.0
    %731 = vmatprep.subr.mxu0 0.0
    %732 = vmatpush1.xpose.msra.mxu0 0.0
    %733 = vmatprep.subr.mxu0 0.0
    %734 = vmatpush1.xpose.msra.mxu0 0.0
    %735 = vmatprep.subr.mxu0 0.0
    %736 = vmatpush1.xpose.msra.mxu0 0.0
    %737 = vmatprep.subr.mxu0 0.0
    %738 = vmatpush1.xpose.msra.mxu0 0.0
    %739 = vmatprep.subr.mxu0 0.0
    %740 = vmatpush1.xpose.msra.mxu0 0.0
    %741 = vmatprep.subr.mxu0 0.0
    %742 = vmatpush1.xpose.msra.mxu0 0.0
    %743 = vmatprep.subr.mxu0 0.0
    %744 = vmatpush1.xpose.msra.mxu0 0.0
    %745 = vmatprep.subr.mxu0 0.0
    %746 = vmatpush1.xpose.msra.mxu0 0.0
    %747 = vmatprep.subr.mxu0 0.0
    %748 = vmatpush1.xpose.msra.mxu0 0.0
    %749 = vmatprep.subr.mxu0 0.0
    %750 = vmatpush1.xpose.msra.mxu0 0.0
    %751 = vmatprep.subr.mxu0 0.0
    %752 = vmatpush1.xpose.msra.mxu0 0.0
    %753 = vmatprep.subr.mxu0 0.0
    %754 = vmatpush1.xpose.msra.mxu0 0.0
    %755 = vmatprep.subr.mxu0 0.0
    %756 = vmatpush1.xpose.msra.mxu0 0.0
    %757 = vmatprep.subr.mxu0 0.0
    %758 = vmatpush1.xpose.msra.mxu0 0.0
    %759 = vmatprep.subr.mxu0 0.0
    %760 = vmatpush1.xpose.msra.mxu0 0.0
    %761 = vmatprep.subr.mxu0 0.0
    %762 = vmatpush1.xpose.msra.mxu0 0.0
    %763 = vmatprep.subr.mxu0 0.0
    %764 = vmatpush1.xpose.msra.mxu0 0.0
    %765 = vmatprep.subr.mxu0 0.0
    %766 = vmatpush1.xpose.msra.mxu0 0.0
    %767 = vmatprep.subr.mxu0 0.0
    %768 = vmatpush1.xpose.msra.mxu0 0.0
    %769 = vmatprep.subr.mxu0 0.0
    %770 = vmatpush1.xpose.msra.mxu0 0.0
    %771 = vmatprep.subr.mxu0 0.0
    %772 = vmatpush1.xpose.msra.mxu0 0.0
    %773 = vmatprep.subr.mxu0 0.0
    %774 = vmatpush1.xpose.msra.mxu0 0.0
    %775 = vmatprep.subr.mxu0 0.0
    %776 = vmatpush1.xpose.msra.mxu0 0.0
    %777 = vmatprep.subr.mxu0 0.0
    %778 = vmatpush1.xpose.msra.mxu0 0.0
    %779 = vmatprep.subr.mxu0 0.0
    %780 = vmatpush1.xpose.msra.mxu0 0.0
    %781 = vmatprep.subr.mxu0 0.0
    %782 = vmatpush1.xpose.msra.mxu0 0.0
    %783 = vmatprep.subr.mxu0 0.0
    %784 = vmatpush1.xpose.msra.mxu0 0.0
    %785 = vmatprep.mubr.f32.mxu0 0.0
    %786 = vmatmul.mubr.f32.gmra.mrb[0].mxu0 %v713
    %v787 = vpop.f32.mrb[0].mxu0
    %v788 = vadd.f32 0.0, %v787
    %v789 = vpop.f32.mrb[0].mxu0
    %790 = vmatprep.mubr.f32.mxu0 0.0
    %791 = vmatmul.mubr.f32.gmra.mrb[0].mxu0 %v715
    %v792 = vpop.f32.mrb[0].mxu0
    %v793 = vadd.f32 0.0, %v792
    %v794 = vpop.f32.mrb[0].mxu0
    %795 = vmatprep.mubr.f32.mxu0 0.0
    %796 = vmatmul.mubr.f32.gmra.mrb[0].mxu0 %v717
    %v797 = vpop.f32.mrb[0].mxu0
    %v798 = vadd.f32 0.0, %v797
    %v799 = vpop.f32.mrb[0].mxu0
    %800 = vdwg.mxu0
    %v801 = vsel %vm360, %v329, 0
    %v803 = vsel %vm360, %v331, 0
    %v805 = vsel %vm360, %v333, 0
    %v807 = vsel %vm360, %v355, 0
    %809 = vmatprep.subr.mxu0 0.0
    %810 = vmatpush1.xpose.msra.mxu0 %v807
    %811 = vmatprep.subr.mxu0 0.0
    %812 = vmatpush1.xpose.msra.mxu0 0.0
    %813 = vmatprep.subr.mxu0 0.0
    %814 = vmatpush1.xpose.msra.mxu0 0.0
    %815 = vmatprep.subr.mxu0 0.0
    %816 = vmatpush1.xpose.msra.mxu0 0.0
    %817 = vmatprep.subr.mxu0 0.0
    %818 = vmatpush1.xpose.msra.mxu0 0.0
    %819 = vmatprep.subr.mxu0 0.0
    %820 = vmatpush1.xpose.msra.mxu0 0.0
    %821 = vmatprep.subr.mxu0 0.0
    %822 = vmatpush1.xpose.msra.mxu0 0.0
    %823 = vmatprep.subr.mxu0 0.0
    %824 = vmatpush1.xpose.msra.mxu0 0.0
    %825 = vmatprep.subr.mxu0 0.0
    %826 = vmatpush1.xpose.msra.mxu0 0.0
    %827 = vmatprep.subr.mxu0 0.0
    %828 = vmatpush1.xpose.msra.mxu0 0.0
    %829 = vmatprep.subr.mxu0 0.0
    %830 = vmatpush1.xpose.msra.mxu0 0.0
    %831 = vmatprep.subr.mxu0 0.0
    %832 = vmatpush1.xpose.msra.mxu0 0.0
    %833 = vmatprep.subr.mxu0 0.0
    %834 = vmatpush1.xpose.msra.mxu0 0.0
    %835 = vmatprep.subr.mxu0 0.0
    %836 = vmatpush1.xpose.msra.mxu0 0.0
    %837 = vmatprep.subr.mxu0 0.0
    %838 = vmatpush1.xpose.msra.mxu0 0.0
    %839 = vmatprep.subr.mxu0 0.0
    %840 = vmatpush1.xpose.msra.mxu0 0.0
    %841 = vmatprep.subr.mxu0 0.0
    %842 = vmatpush1.xpose.msra.mxu0 0.0
    %843 = vmatprep.subr.mxu0 0.0
    %844 = vmatpush1.xpose.msra.mxu0 0.0
    %845 = vmatprep.subr.mxu0 0.0
    %846 = vmatpush1.xpose.msra.mxu0 0.0
    %847 = vmatprep.subr.mxu0 0.0
    %848 = vmatpush1.xpose.msra.mxu0 0.0
    %849 = vmatprep.subr.mxu0 0.0
    %850 = vmatpush1.xpose.msra.mxu0 0.0
    %851 = vmatprep.subr.mxu0 0.0
    %852 = vmatpush1.xpose.msra.mxu0 0.0
    %853 = vmatprep.subr.mxu0 0.0
    %854 = vmatpush1.xpose.msra.mxu0 0.0
    %855 = vmatprep.subr.mxu0 0.0
    %856 = vmatpush1.xpose.msra.mxu0 0.0
    %857 = vmatprep.subr.mxu0 0.0
    %858 = vmatpush1.xpose.msra.mxu0 0.0
    %859 = vmatprep.subr.mxu0 0.0
    %860 = vmatpush1.xpose.msra.mxu0 0.0
    %861 = vmatprep.subr.mxu0 0.0
    %862 = vmatpush1.xpose.msra.mxu0 0.0
    %863 = vmatprep.subr.mxu0 0.0
    %864 = vmatpush1.xpose.msra.mxu0 0.0
    %865 = vmatprep.subr.mxu0 0.0
    %866 = vmatpush1.xpose.msra.mxu0 0.0
    %867 = vmatprep.subr.mxu0 0.0
    %868 = vmatpush1.xpose.msra.mxu0 0.0
    %869 = vmatprep.subr.mxu0 0.0
    %870 = vmatpush1.xpose.msra.mxu0 0.0
    %871 = vmatprep.subr.mxu0 0.0
    %872 = vmatpush1.xpose.msra.mxu0 0.0
    %873 = vmatprep.mubr.f32.mxu0 0.0
    %874 = vmatmul.mubr.f32.gmra.mrb[0].mxu0 %v801
    %v875 = vpop.f32.mrb[0].mxu0
    %v876 = vadd.f32 0.0, %v875
    %v877 = vpop.f32.mrb[0].mxu0
    %878 = vmatprep.mubr.f32.mxu0 0.0
    %879 = vmatmul.mubr.f32.gmra.mrb[0].mxu0 %v803
    %v880 = vpop.f32.mrb[0].mxu0
    %v881 = vadd.f32 0.0, %v880
    %v882 = vpop.f32.mrb[0].mxu0
    %883 = vmatprep.mubr.f32.mxu0 0.0
    %884 = vmatmul.mubr.f32.gmra.mrb[0].mxu0 %v805
    %v885 = vpop.f32.mrb[0].mxu0
    %v886 = vadd.f32 0.0, %v885
    %v887 = vpop.f32.mrb[0].mxu0
    %888 = vdwg.mxu0
    %v889 = vsel %vm360, %v335, 0
    %v891 = vsel %vm360, %v337, 0
    %v893 = vsel %vm360, %v339, 0
    %v895 = vsel %vm360, %v357, 0
    %897 = vmatprep.subr.mxu0 0.0
    %898 = vmatpush1.xpose.msra.mxu0 %v895
    %899 = vmatprep.subr.mxu0 0.0
    %900 = vmatpush1.xpose.msra.mxu0 0.0
    %901 = vmatprep.subr.mxu0 0.0
    %902 = vmatpush1.xpose.msra.mxu0 0.0
    %903 = vmatprep.subr.mxu0 0.0
    %904 = vmatpush1.xpose.msra.mxu0 0.0
    %905 = vmatprep.subr.mxu0 0.0
    %906 = vmatpush1.xpose.msra.mxu0 0.0
    %907 = vmatprep.subr.mxu0 0.0
    %908 = vmatpush1.xpose.msra.mxu0 0.0
    %909 = vmatprep.subr.mxu0 0.0
    %910 = vmatpush1.xpose.msra.mxu0 0.0
    %911 = vmatprep.subr.mxu0 0.0
    %912 = vmatpush1.xpose.msra.mxu0 0.0
    %913 = vmatprep.subr.mxu0 0.0
    %914 = vmatpush1.xpose.msra.mxu0 0.0
    %915 = vmatprep.subr.mxu0 0.0
    %916 = vmatpush1.xpose.msra.mxu0 0.0
    %917 = vmatprep.subr.mxu0 0.0
    %918 = vmatpush1.xpose.msra.mxu0 0.0
    %919 = vmatprep.subr.mxu0 0.0
    %920 = vmatpush1.xpose.msra.mxu0 0.0
    %921 = vmatprep.subr.mxu0 0.0
    %922 = vmatpush1.xpose.msra.mxu0 0.0
    %923 = vmatprep.subr.mxu0 0.0
    %924 = vmatpush1.xpose.msra.mxu0 0.0
    %925 = vmatprep.subr.mxu0 0.0
    %926 = vmatpush1.xpose.msra.mxu0 0.0
    %927 = vmatprep.subr.mxu0 0.0
    %928 = vmatpush1.xpose.msra.mxu0 0.0
    %929 = vmatprep.subr.mxu0 0.0
    %930 = vmatpush1.xpose.msra.mxu0 0.0
    %931 = vmatprep.subr.mxu0 0.0
    %932 = vmatpush1.xpose.msra.mxu0 0.0
    %933 = vmatprep.subr.mxu0 0.0
    %934 = vmatpush1.xpose.msra.mxu0 0.0
    %935 = vmatprep.subr.mxu0 0.0
    %936 = vmatpush1.xpose.msra.mxu0 0.0
    %937 = vmatprep.subr.mxu0 0.0
    %938 = vmatpush1.xpose.msra.mxu0 0.0
    %939 = vmatprep.subr.mxu0 0.0
    %940 = vmatpush1.xpose.msra.mxu0 0.0
    %941 = vmatprep.subr.mxu0 0.0
    %942 = vmatpush1.xpose.msra.mxu0 0.0
    %943 = vmatprep.subr.mxu0 0.0
    %944 = vmatpush1.xpose.msra.mxu0 0.0
    %945 = vmatprep.subr.mxu0 0.0
    %946 = vmatpush1.xpose.msra.mxu0 0.0
    %947 = vmatprep.subr.mxu0 0.0
    %948 = vmatpush1.xpose.msra.mxu0 0.0
    %949 = vmatprep.subr.mxu0 0.0
    %950 = vmatpush1.xpose.msra.mxu0 0.0
    %951 = vmatprep.subr.mxu0 0.0
    %952 = vmatpush1.xpose.msra.mxu0 0.0
    %953 = vmatprep.subr.mxu0 0.0
    %954 = vmatpush1.xpose.msra.mxu0 0.0
    %955 = vmatprep.subr.mxu0 0.0
    %956 = vmatpush1.xpose.msra.mxu0 0.0
    %957 = vmatprep.subr.mxu0 0.0
    %958 = vmatpush1.xpose.msra.mxu0 0.0
    %959 = vmatprep.subr.mxu0 0.0
    %960 = vmatpush1.xpose.msra.mxu0 0.0
    %961 = vmatprep.mubr.f32.mxu0 0.0
    %962 = vmatmul.mubr.f32.gmra.mrb[0].mxu0 %v889
    %v963 = vpop.f32.mrb[0].mxu0
    %v964 = vadd.f32 0.0, %v963
    %v965 = vpop.f32.mrb[0].mxu0
    %966 = vmatprep.mubr.f32.mxu0 0.0
    %967 = vmatmul.mubr.f32.gmra.mrb[0].mxu0 %v891
    %v968 = vpop.f32.mrb[0].mxu0
    %v969 = vadd.f32 0.0, %v968
    %v970 = vpop.f32.mrb[0].mxu0
    %971 = vmatprep.mubr.f32.mxu0 0.0
    %972 = vmatmul.mubr.f32.gmra.mrb[0].mxu0 %v893
    %v973 = vpop.f32.mrb[0].mxu0
    %v974 = vadd.f32 0.0, %v973
    %v975 = vpop.f32.mrb[0].mxu0
    %976 = vdwg.mxu0
    %v977 = vsel %vm360, %v341, 0
    %v979 = vsel %vm360, %v343, 0
    %v981 = vsel %vm360, %v345, 0
    %v983 = vsel %vm360, %v359, 0
    %985 = vmatprep.subr.mxu0 0.0
    %986 = vmatpush1.xpose.msra.mxu0 %v983
    %987 = vmatprep.subr.mxu0 0.0
    %988 = vmatpush1.xpose.msra.mxu0 0.0
    %989 = vmatprep.subr.mxu0 0.0
    %990 = vmatpush1.xpose.msra.mxu0 0.0
    %991 = vmatprep.subr.mxu0 0.0
    %992 = vmatpush1.xpose.msra.mxu0 0.0
    %993 = vmatprep.subr.mxu0 0.0
    %994 = vmatpush1.xpose.msra.mxu0 0.0
    %995 = vmatprep.subr.mxu0 0.0
    %996 = vmatpush1.xpose.msra.mxu0 0.0
    %997 = vmatprep.subr.mxu0 0.0
    %998 = vmatpush1.xpose.msra.mxu0 0.0
    %999 = vmatprep.subr.mxu0 0.0
    %1000 = vmatpush1.xpose.msra.mxu0 0.0
    %1001 = vmatprep.subr.mxu0 0.0
    %1002 = vmatpush1.xpose.msra.mxu0 0.0
    %1003 = vmatprep.subr.mxu0 0.0
    %1004 = vmatpush1.xpose.msra.mxu0 0.0
    %1005 = vmatprep.subr.mxu0 0.0
    %1006 = vmatpush1.xpose.msra.mxu0 0.0
    %1007 = vmatprep.subr.mxu0 0.0
    %1008 = vmatpush1.xpose.msra.mxu0 0.0
    %1009 = vmatprep.subr.mxu0 0.0
    %1010 = vmatpush1.xpose.msra.mxu0 0.0
    %1011 = vmatprep.subr.mxu0 0.0
    %1012 = vmatpush1.xpose.msra.mxu0 0.0
    %1013 = vmatprep.subr.mxu0 0.0
    %1014 = vmatpush1.xpose.msra.mxu0 0.0
    %1015 = vmatprep.subr.mxu0 0.0
    %1016 = vmatpush1.xpose.msra.mxu0 0.0
    %1017 = vmatprep.subr.mxu0 0.0
    %1018 = vmatpush1.xpose.msra.mxu0 0.0
    %1019 = vmatprep.subr.mxu0 0.0
    %1020 = vmatpush1.xpose.msra.mxu0 0.0
    %1021 = vmatprep.subr.mxu0 0.0
    %1022 = vmatpush1.xpose.msra.mxu0 0.0
    %1023 = vmatprep.subr.mxu0 0.0
    %1024 = vmatpush1.xpose.msra.mxu0 0.0
    %1025 = vmatprep.subr.mxu0 0.0
    %1026 = vmatpush1.xpose.msra.mxu0 0.0
    %1027 = vmatprep.subr.mxu0 0.0
    %1028 = vmatpush1.xpose.msra.mxu0 0.0
    %1029 = vmatprep.subr.mxu0 0.0
    %1030 = vmatpush1.xpose.msra.mxu0 0.0
    %1031 = vmatprep.subr.mxu0 0.0
    %1032 = vmatpush1.xpose.msra.mxu0 0.0
    %1033 = vmatprep.subr.mxu0 0.0
    %1034 = vmatpush1.xpose.msra.mxu0 0.0
    %1035 = vmatprep.subr.mxu0 0.0
    %1036 = vmatpush1.xpose.msra.mxu0 0.0
    %1037 = vmatprep.subr.mxu0 0.0
    %1038 = vmatpush1.xpose.msra.mxu0 0.0
    %1039 = vmatprep.subr.mxu0 0.0
    %1040 = vmatpush1.xpose.msra.mxu0 0.0
    %1041 = vmatprep.subr.mxu0 0.0
    %1042 = vmatpush1.xpose.msra.mxu0 0.0
    %1043 = vmatprep.subr.mxu0 0.0
    %1044 = vmatpush1.xpose.msra.mxu0 0.0
    %1045 = vmatprep.subr.mxu0 0.0
    %1046 = vmatpush1.xpose.msra.mxu0 0.0
    %1047 = vmatprep.subr.mxu0 0.0
    %1048 = vmatpush1.xpose.msra.mxu0 0.0
    %1049 = vmatprep.mubr.f32.mxu0 0.0
    %1050 = vmatmul.mubr.f32.gmra.mrb[0].mxu0 %v977
    %v1051 = vpop.f32.mrb[0].mxu0
    %v1052 = vadd.f32 0.0, %v1051
    %v1053 = vpop.f32.mrb[0].mxu0
    %1054 = vmatprep.mubr.f32.mxu0 0.0
    %1055 = vmatmul.mubr.f32.gmra.mrb[0].mxu0 %v979
    %v1056 = vpop.f32.mrb[0].mxu0
    %v1057 = vadd.f32 0.0, %v1056
    %v1058 = vpop.f32.mrb[0].mxu0
    %1059 = vmatprep.mubr.f32.mxu0 0.0
    %1060 = vmatmul.mubr.f32.gmra.mrb[0].mxu0 %v981
    %v1061 = vpop.f32.mrb[0].mxu0
    %v1062 = vadd.f32 0.0, %v1061
    %v1063 = vpop.f32.mrb[0].mxu0
    %1064 = vdwg.mxu0
    %v1065 = vmul.f32 %v436, 0.17677669
    %v1066 = vmul.f32 %v441, 0.17677669
    %v1067 = vmul.f32 %v446, 0.17677669
    %v1068 = vmul.f32 %v524, 0.17677669
    %v1069 = vmul.f32 %v529, 0.17677669
    %v1070 = vmul.f32 %v534, 0.17677669
    %v1071 = vmul.f32 %v612, 0.17677669
    %v1072 = vmul.f32 %v617, 0.17677669
    %v1073 = vmul.f32 %v622, 0.17677669
    %v1074 = vmul.f32 %v700, 0.17677669
    %v1075 = vmul.f32 %v705, 0.17677669
    %v1076 = vmul.f32 %v710, 0.17677669
    %v1077 = vmul.f32 %v788, 0.17677669
    %v1078 = vmul.f32 %v793, 0.17677669
    %v1079 = vmul.f32 %v798, 0.17677669
    %v1080 = vmul.f32 %v876, 0.17677669
    %v1081 = vmul.f32 %v881, 0.17677669
    %v1082 = vmul.f32 %v886, 0.17677669
    %v1083 = vmul.f32 %v964, 0.17677669
    %v1084 = vmul.f32 %v969, 0.17677669
    %v1085 = vmul.f32 %v974, 0.17677669
    %v1086 = vmul.f32 %v1052, 0.17677669
    %v1087 = vmul.f32 %v1057, 0.17677669
    %v1088 = vmul.f32 %v1062, 0.17677669
    %v1089 = vsel %vm360, %v1065, -inf
    %1090 = vmax.xlane.f32.xlu0 %v1089
    %v1091 = vpop.xlane.xlu0 %1090
    %v1092 = vsel %vm360, %v1068, -inf
    %1093 = vmax.xlane.f32.xlu0 %v1092
    %v1094 = vpop.xlane.xlu0 %1093
    %v1095 = vsel %vm360, %v1071, -inf
    %1096 = vmax.xlane.f32.xlu0 %v1095
    %v1097 = vpop.xlane.xlu0 %1096
    %v1098 = vsel %vm360, %v1074, -inf
    %1099 = vmax.xlane.f32.xlu0 %v1098
    %v1100 = vpop.xlane.xlu0 %1099
    %v1101 = vsel %vm360, %v1077, -inf
    %1102 = vmax.xlane.f32.xlu0 %v1101
    %v1103 = vpop.xlane.xlu0 %1102
    %v1104 = vsel %vm360, %v1080, -inf
    %1105 = vmax.xlane.f32.xlu0 %v1104
    %v1106 = vpop.xlane.xlu0 %1105
    %v1107 = vsel %vm360, %v1083, -inf
    %1108 = vmax.xlane.f32.xlu0 %v1107
    %v1109 = vpop.xlane.xlu0 %1108
    %v1110 = vsel %vm360, %v1086, -inf
    %1111 = vmax.xlane.f32.xlu0 %v1110
    %v1112 = vpop.xlane.xlu0 %1111
    %v1113 = vsel %vm360, %v1066, -inf
    %1114 = vmax.xlane.f32.xlu0 %v1113
    %v1115 = vpop.xlane.xlu0 %1114
    %v1116 = vsel %vm360, %v1069, -inf
    %1117 = vmax.xlane.f32.xlu0 %v1116
    %v1118 = vpop.xlane.xlu0 %1117
    %v1119 = vsel %vm360, %v1072, -inf
    %1120 = vmax.xlane.f32.xlu0 %v1119
    %v1121 = vpop.xlane.xlu0 %1120
    %v1122 = vsel %vm360, %v1075, -inf
    %1123 = vmax.xlane.f32.xlu0 %v1122
    %v1124 = vpop.xlane.xlu0 %1123
    %v1125 = vsel %vm360, %v1078, -inf
    %1126 = vmax.xlane.f32.xlu0 %v1125
    %v1127 = vpop.xlane.xlu0 %1126
    %v1128 = vsel %vm360, %v1081, -inf
    %1129 = vmax.xlane.f32.xlu0 %v1128
    %v1130 = vpop.xlane.xlu0 %1129
    %v1131 = vsel %vm360, %v1084, -inf
    %1132 = vmax.xlane.f32.xlu0 %v1131
    %v1133 = vpop.xlane.xlu0 %1132
    %v1134 = vsel %vm360, %v1087, -inf
    %1135 = vmax.xlane.f32.xlu0 %v1134
    %v1136 = vpop.xlane.xlu0 %1135
    %v1137 = vsel %vm360, %v1067, -inf
    %1138 = vmax.xlane.f32.xlu0 %v1137
    %v1139 = vpop.xlane.xlu0 %1138
    %v1140 = vsel %vm360, %v1070, -inf
    %1141 = vmax.xlane.f32.xlu0 %v1140
    %v1142 = vpop.xlane.xlu0 %1141
    %v1143 = vsel %vm360, %v1073, -inf
    %1144 = vmax.xlane.f32.xlu0 %v1143
    %v1145 = vpop.xlane.xlu0 %1144
    %v1146 = vsel %vm360, %v1076, -inf
    %1147 = vmax.xlane.f32.xlu0 %v1146
    %v1148 = vpop.xlane.xlu0 %1147
    %v1149 = vsel %vm360, %v1079, -inf
    %1150 = vmax.xlane.f32.xlu0 %v1149
    %v1151 = vpop.xlane.xlu0 %1150
    %v1152 = vsel %vm360, %v1082, -inf
    %1153 = vmax.xlane.f32.xlu0 %v1152
    %v1154 = vpop.xlane.xlu0 %1153
    %v1155 = vsel %vm360, %v1085, -inf
    %1156 = vmax.xlane.f32.xlu0 %v1155
    %v1157 = vpop.xlane.xlu0 %1156
    %v1158 = vsel %vm360, %v1088, -inf
    %1159 = vmax.xlane.f32.xlu0 %v1158
    %v1160 = vpop.xlane.xlu0 %1159
    %v1161 = vrot.slane %v1091, 4
    %v1162 = vmax.f32 %v1091, %v1161
    %v1163 = vrot.slane %v1162, 2
    %v1164 = vmax.f32 %v1162, %v1163
    %v1165 = vrot.slane %v1164, 1
    %v1166 = vmax.f32 %v1164, %v1165
    %v1167 = vrot.slane %v1094, 4
    %v1168 = vmax.f32 %v1094, %v1167
    %v1169 = vrot.slane %v1168, 2
    %v1170 = vmax.f32 %v1168, %v1169
    %v1171 = vrot.slane %v1170, 1
    %v1172 = vmax.f32 %v1170, %v1171
    %v1173 = vrot.slane %v1097, 4
    %v1174 = vmax.f32 %v1097, %v1173
    %v1175 = vrot.slane %v1174, 2
    %v1176 = vmax.f32 %v1174, %v1175
    %v1177 = vrot.slane %v1176, 1
    %v1178 = vmax.f32 %v1176, %v1177
    %v1179 = vrot.slane %v1100, 4
    %v1180 = vmax.f32 %v1100, %v1179
    %v1181 = vrot.slane %v1180, 2
    %v1182 = vmax.f32 %v1180, %v1181
    %v1183 = vrot.slane %v1182, 1
    %v1184 = vmax.f32 %v1182, %v1183
    %v1185 = vrot.slane %v1103, 4
    %v1186 = vmax.f32 %v1103, %v1185
    %v1187 = vrot.slane %v1186, 2
    %v1188 = vmax.f32 %v1186, %v1187
    %v1189 = vrot.slane %v1188, 1
    %v1190 = vmax.f32 %v1188, %v1189
    %v1191 = vrot.slane %v1106, 4
    %v1192 = vmax.f32 %v1106, %v1191
    %v1193 = vrot.slane %v1192, 2
    %v1194 = vmax.f32 %v1192, %v1193
    %v1195 = vrot.slane %v1194, 1
    %v1196 = vmax.f32 %v1194, %v1195
    %v1197 = vrot.slane %v1109, 4
    %v1198 = vmax.f32 %v1109, %v1197
    %v1199 = vrot.slane %v1198, 2
    %v1200 = vmax.f32 %v1198, %v1199
    %v1201 = vrot.slane %v1200, 1
    %v1202 = vmax.f32 %v1200, %v1201
    %v1203 = vrot.slane %v1112, 4
    %v1204 = vmax.f32 %v1112, %v1203
    %v1205 = vrot.slane %v1204, 2
    %v1206 = vmax.f32 %v1204, %v1205
    %v1207 = vrot.slane %v1206, 1
    %v1208 = vmax.f32 %v1206, %v1207
    %v1209 = vrot.slane %v1115, 4
    %v1210 = vmax.f32 %v1115, %v1209
    %v1211 = vrot.slane %v1210, 2
    %v1212 = vmax.f32 %v1210, %v1211
    %v1213 = vrot.slane %v1212, 1
    %v1214 = vmax.f32 %v1212, %v1213
    %v1215 = vrot.slane %v1118, 4
    %v1216 = vmax.f32 %v1118, %v1215
    %v1217 = vrot.slane %v1216, 2
    %v1218 = vmax.f32 %v1216, %v1217
    %v1219 = vrot.slane %v1218, 1
    %v1220 = vmax.f32 %v1218, %v1219
    %v1221 = vrot.slane %v1121, 4
    %v1222 = vmax.f32 %v1121, %v1221
    %v1223 = vrot.slane %v1222, 2
    %v1224 = vmax.f32 %v1222, %v1223
    %v1225 = vrot.slane %v1224, 1
    %v1226 = vmax.f32 %v1224, %v1225
    %v1227 = vrot.slane %v1124, 4
    %v1228 = vmax.f32 %v1124, %v1227
    %v1229 = vrot.slane %v1228, 2
    %v1230 = vmax.f32 %v1228, %v1229
    %v1231 = vrot.slane %v1230, 1
    %v1232 = vmax.f32 %v1230, %v1231
    %v1233 = vrot.slane %v1127, 4
    %v1234 = vmax.f32 %v1127, %v1233
    %v1235 = vrot.slane %v1234, 2
    %v1236 = vmax.f32 %v1234, %v1235
    %v1237 = vrot.slane %v1236, 1
    %v1238 = vmax.f32 %v1236, %v1237
    %v1239 = vrot.slane %v1130, 4
    %v1240 = vmax.f32 %v1130, %v1239
    %v1241 = vrot.slane %v1240, 2
    %v1242 = vmax.f32 %v1240, %v1241
    %v1243 = vrot.slane %v1242, 1
    %v1244 = vmax.f32 %v1242, %v1243
    %v1245 = vrot.slane %v1133, 4
    %v1246 = vmax.f32 %v1133, %v1245
    %v1247 = vrot.slane %v1246, 2
    %v1248 = vmax.f32 %v1246, %v1247
    %v1249 = vrot.slane %v1248, 1
    %v1250 = vmax.f32 %v1248, %v1249
    %v1251 = vrot.slane %v1136, 4
    %v1252 = vmax.f32 %v1136, %v1251
    %v1253 = vrot.slane %v1252, 2
    %v1254 = vmax.f32 %v1252, %v1253
    %v1255 = vrot.slane %v1254, 1
    %v1256 = vmax.f32 %v1254, %v1255
    %v1257 = vrot.slane %v1139, 4
    %v1258 = vmax.f32 %v1139, %v1257
    %v1259 = vrot.slane %v1258, 2
    %v1260 = vmax.f32 %v1258, %v1259
    %v1261 = vrot.slane %v1260, 1
    %v1262 = vmax.f32 %v1260, %v1261
    %v1263 = vrot.slane %v1142, 4
    %v1264 = vmax.f32 %v1142, %v1263
    %v1265 = vrot.slane %v1264, 2
    %v1266 = vmax.f32 %v1264, %v1265
    %v1267 = vrot.slane %v1266, 1
    %v1268 = vmax.f32 %v1266, %v1267
    %v1269 = vrot.slane %v1145, 4
    %v1270 = vmax.f32 %v1145, %v1269
    %v1271 = vrot.slane %v1270, 2
    %v1272 = vmax.f32 %v1270, %v1271
    %v1273 = vrot.slane %v1272, 1
    %v1274 = vmax.f32 %v1272, %v1273
    %v1275 = vrot.slane %v1148, 4
    %v1276 = vmax.f32 %v1148, %v1275
    %v1277 = vrot.slane %v1276, 2
    %v1278 = vmax.f32 %v1276, %v1277
    %v1279 = vrot.slane %v1278, 1
    %v1280 = vmax.f32 %v1278, %v1279
    %v1281 = vrot.slane %v1151, 4
    %v1282 = vmax.f32 %v1151, %v1281
    %v1283 = vrot.slane %v1282, 2
    %v1284 = vmax.f32 %v1282, %v1283
    %v1285 = vrot.slane %v1284, 1
    %v1286 = vmax.f32 %v1284, %v1285
    %v1287 = vrot.slane %v1154, 4
    %v1288 = vmax.f32 %v1154, %v1287
    %v1289 = vrot.slane %v1288, 2
    %v1290 = vmax.f32 %v1288, %v1289
    %v1291 = vrot.slane %v1290, 1
    %v1292 = vmax.f32 %v1290, %v1291
    %v1293 = vrot.slane %v1157, 4
    %v1294 = vmax.f32 %v1157, %v1293
    %v1295 = vrot.slane %v1294, 2
    %v1296 = vmax.f32 %v1294, %v1295
    %v1297 = vrot.slane %v1296, 1
    %v1298 = vmax.f32 %v1296, %v1297
    %v1299 = vrot.slane %v1160, 4
    %v1300 = vmax.f32 %v1160, %v1299
    %v1301 = vrot.slane %v1300, 2
    %v1302 = vmax.f32 %v1300, %v1301
    %v1303 = vrot.slane %v1302, 1
    %v1304 = vmax.f32 %v1302, %v1303
    %v1305 = vsub.f32 %v1065, %v1166
    %v1306 = vsub.f32 %v1068, %v1172
    %v1307 = vsub.f32 %v1071, %v1178
    %v1308 = vsub.f32 %v1074, %v1184
    %v1309 = vsub.f32 %v1077, %v1190
    %v1310 = vsub.f32 %v1080, %v1196
    %v1311 = vsub.f32 %v1083, %v1202
    %v1312 = vsub.f32 %v1086, %v1208
    %v1313 = vsub.f32 %v1066, %v1214
    %v1314 = vsub.f32 %v1069, %v1220
    %v1315 = vsub.f32 %v1072, %v1226
    %v1316 = vsub.f32 %v1075, %v1232
    %v1317 = vsub.f32 %v1078, %v1238
    %v1318 = vsub.f32 %v1081, %v1244
    %v1319 = vsub.f32 %v1084, %v1250
    %v1320 = vsub.f32 %v1087, %v1256
    %v1321 = vsub.f32 %v1067, %v1262
    %v1322 = vsub.f32 %v1070, %v1268
    %v1323 = vsub.f32 %v1073, %v1274
    %v1324 = vsub.f32 %v1076, %v1280
    %v1325 = vsub.f32 %v1079, %v1286
    %v1326 = vsub.f32 %v1082, %v1292
    %v1327 = vsub.f32 %v1085, %v1298
    %v1328 = vsub.f32 %v1088, %v1304
    %v1329 = vmul.f32 %v1305, 1.442695
    %v1330 = vpow.pop %v1329
    %v1331 = vmul.f32 %v1306, 1.442695
    %v1332 = vpow.pop %v1331
    %v1333 = vmul.f32 %v1307, 1.442695
    %v1334 = vpow.pop %v1333
    %v1335 = vmul.f32 %v1308, 1.442695
    %v1336 = vpow.pop %v1335
    %v1337 = vmul.f32 %v1309, 1.442695
    %v1338 = vpow.pop %v1337
    %v1339 = vmul.f32 %v1310, 1.442695
    %v1340 = vpow.pop %v1339
    %v1341 = vmul.f32 %v1311, 1.442695
    %v1342 = vpow.pop %v1341
    %v1343 = vmul.f32 %v1312, 1.442695
    %v1344 = vpow.pop %v1343
    %v1345 = vmul.f32 %v1313, 1.442695
    %v1346 = vpow.pop %v1345
    %v1347 = vmul.f32 %v1314, 1.442695
    %v1348 = vpow.pop %v1347
    %v1349 = vmul.f32 %v1315, 1.442695
    %v1350 = vpow.pop %v1349
    %v1351 = vmul.f32 %v1316, 1.442695
    %v1352 = vpow.pop %v1351
    %v1353 = vmul.f32 %v1317, 1.442695
    %v1354 = vpow.pop %v1353
    %v1355 = vmul.f32 %v1318, 1.442695
    %v1356 = vpow.pop %v1355
    %v1357 = vmul.f32 %v1319, 1.442695
    %v1358 = vpow.pop %v1357
    %v1359 = vmul.f32 %v1320, 1.442695
    %v1360 = vpow.pop %v1359
    %v1361 = vmul.f32 %v1321, 1.442695
    %v1362 = vpow.pop %v1361
    %v1363 = vmul.f32 %v1322, 1.442695
    %v1364 = vpow.pop %v1363
    %v1365 = vmul.f32 %v1323, 1.442695
    %v1366 = vpow.pop %v1365
    %v1367 = vmul.f32 %v1324, 1.442695
    %v1368 = vpow.pop %v1367
    %v1369 = vmul.f32 %v1325, 1.442695
    %v1370 = vpow.pop %v1369
    %v1371 = vmul.f32 %v1326, 1.442695
    %v1372 = vpow.pop %v1371
    %v1373 = vmul.f32 %v1327, 1.442695
    %v1374 = vpow.pop %v1373
    %v1375 = vmul.f32 %v1328, 1.442695
    %v1376 = vpow.pop %v1375
    %v1377 = vsel %vm360, %v1330, 0.0
    %1378 = vadd.xlane.f32.xlu0 %v1377
    %v1379 = vpop.xlane.xlu0 %1378
    %v1380 = vsel %vm360, %v1332, 0.0
    %1381 = vadd.xlane.f32.xlu0 %v1380
    %v1382 = vpop.xlane.xlu0 %1381
    %v1383 = vsel %vm360, %v1334, 0.0
    %1384 = vadd.xlane.f32.xlu0 %v1383
    %v1385 = vpop.xlane.xlu0 %1384
    %v1386 = vsel %vm360, %v1336, 0.0
    %1387 = vadd.xlane.f32.xlu0 %v1386
    %v1388 = vpop.xlane.xlu0 %1387
    %v1389 = vsel %vm360, %v1338, 0.0
    %1390 = vadd.xlane.f32.xlu0 %v1389
    %v1391 = vpop.xlane.xlu0 %1390
    %v1392 = vsel %vm360, %v1340, 0.0
    %1393 = vadd.xlane.f32.xlu0 %v1392
    %v1394 = vpop.xlane.xlu0 %1393
    %v1395 = vsel %vm360, %v1342, 0.0
    %1396 = vadd.xlane.f32.xlu0 %v1395
    %v1397 = vpop.xlane.xlu0 %1396
    %v1398 = vsel %vm360, %v1344, 0.0
    %1399 = vadd.xlane.f32.xlu0 %v1398
    %v1400 = vpop.xlane.xlu0 %1399
    %v1401 = vsel %vm360, %v1346, 0.0
    %1402 = vadd.xlane.f32.xlu0 %v1401
    %v1403 = vpop.xlane.xlu0 %1402
    %v1404 = vsel %vm360, %v1348, 0.0
    %1405 = vadd.xlane.f32.xlu0 %v1404
    %v1406 = vpop.xlane.xlu0 %1405
    %v1407 = vsel %vm360, %v1350, 0.0
    %1408 = vadd.xlane.f32.xlu0 %v1407
    %v1409 = vpop.xlane.xlu0 %1408
    %v1410 = vsel %vm360, %v1352, 0.0
    %1411 = vadd.xlane.f32.xlu0 %v1410
    %v1412 = vpop.xlane.xlu0 %1411
    %v1413 = vsel %vm360, %v1354, 0.0
    %1414 = vadd.xlane.f32.xlu0 %v1413
    %v1415 = vpop.xlane.xlu0 %1414
    %v1416 = vsel %vm360, %v1356, 0.0
    %1417 = vadd.xlane.f32.xlu0 %v1416
    %v1418 = vpop.xlane.xlu0 %1417
    %v1419 = vsel %vm360, %v1358, 0.0
    %1420 = vadd.xlane.f32.xlu0 %v1419
    %v1421 = vpop.xlane.xlu0 %1420
    %v1422 = vsel %vm360, %v1360, 0.0
    %1423 = vadd.xlane.f32.xlu0 %v1422
    %v1424 = vpop.xlane.xlu0 %1423
    %v1425 = vsel %vm360, %v1362, 0.0
    %1426 = vadd.xlane.f32.xlu0 %v1425
    %v1427 = vpop.xlane.xlu0 %1426
    %v1428 = vsel %vm360, %v1364, 0.0
    %1429 = vadd.xlane.f32.xlu0 %v1428
    %v1430 = vpop.xlane.xlu0 %1429
    %v1431 = vsel %vm360, %v1366, 0.0
    %1432 = vadd.xlane.f32.xlu0 %v1431
    %v1433 = vpop.xlane.xlu0 %1432
    %v1434 = vsel %vm360, %v1368, 0.0
    %1435 = vadd.xlane.f32.xlu0 %v1434
    %v1436 = vpop.xlane.xlu0 %1435
    %v1437 = vsel %vm360, %v1370, 0.0
    %1438 = vadd.xlane.f32.xlu0 %v1437
    %v1439 = vpop.xlane.xlu0 %1438
    %v1440 = vsel %vm360, %v1372, 0.0
    %1441 = vadd.xlane.f32.xlu0 %v1440
    %v1442 = vpop.xlane.xlu0 %1441
    %v1443 = vsel %vm360, %v1374, 0.0
    %1444 = vadd.xlane.f32.xlu0 %v1443
    %v1445 = vpop.xlane.xlu0 %1444
    %v1446 = vsel %vm360, %v1376, 0.0
    %1447 = vadd.xlane.f32.xlu0 %v1446
    %v1448 = vpop.xlane.xlu0 %1447
    %v1449 = vrot.slane %v1379, 4
    %v1450 = vadd.f32 %v1379, %v1449
    %v1451 = vrot.slane %v1450, 2
    %v1452 = vadd.f32 %v1450, %v1451
    %v1453 = vrot.slane %v1452, 1
    %v1454 = vadd.f32 %v1452, %v1453
    %v1455 = vrot.slane %v1382, 4
    %v1456 = vadd.f32 %v1382, %v1455
    %v1457 = vrot.slane %v1456, 2
    %v1458 = vadd.f32 %v1456, %v1457
    %v1459 = vrot.slane %v1458, 1
    %v1460 = vadd.f32 %v1458, %v1459
    %v1461 = vrot.slane %v1385, 4
    %v1462 = vadd.f32 %v1385, %v1461
    %v1463 = vrot.slane %v1462, 2
    %v1464 = vadd.f32 %v1462, %v1463
    %v1465 = vrot.slane %v1464, 1
    %v1466 = vadd.f32 %v1464, %v1465
    %v1467 = vrot.slane %v1388, 4
    %v1468 = vadd.f32 %v1388, %v1467
    %v1469 = vrot.slane %v1468, 2
    %v1470 = vadd.f32 %v1468, %v1469
    %v1471 = vrot.slane %v1470, 1
    %v1472 = vadd.f32 %v1470, %v1471
    %v1473 = vrot.slane %v1391, 4
    %v1474 = vadd.f32 %v1391, %v1473
    %v1475 = vrot.slane %v1474, 2
    %v1476 = vadd.f32 %v1474, %v1475
    %v1477 = vrot.slane %v1476, 1
    %v1478 = vadd.f32 %v1476, %v1477
    %v1479 = vrot.slane %v1394, 4
    %v1480 = vadd.f32 %v1394, %v1479
    %v1481 = vrot.slane %v1480, 2
    %v1482 = vadd.f32 %v1480, %v1481
    %v1483 = vrot.slane %v1482, 1
    %v1484 = vadd.f32 %v1482, %v1483
    %v1485 = vrot.slane %v1397, 4
    %v1486 = vadd.f32 %v1397, %v1485
    %v1487 = vrot.slane %v1486, 2
    %v1488 = vadd.f32 %v1486, %v1487
    %v1489 = vrot.slane %v1488, 1
    %v1490 = vadd.f32 %v1488, %v1489
    %v1491 = vrot.slane %v1400, 4
    %v1492 = vadd.f32 %v1400, %v1491
    %v1493 = vrot.slane %v1492, 2
    %v1494 = vadd.f32 %v1492, %v1493
    %v1495 = vrot.slane %v1494, 1
    %v1496 = vadd.f32 %v1494, %v1495
    %v1497 = vrot.slane %v1403, 4
    %v1498 = vadd.f32 %v1403, %v1497
    %v1499 = vrot.slane %v1498, 2
    %v1500 = vadd.f32 %v1498, %v1499
    %v1501 = vrot.slane %v1500, 1
    %v1502 = vadd.f32 %v1500, %v1501
    %v1503 = vrot.slane %v1406, 4
    %v1504 = vadd.f32 %v1406, %v1503
    %v1505 = vrot.slane %v1504, 2
    %v1506 = vadd.f32 %v1504, %v1505
    %v1507 = vrot.slane %v1506, 1
    %v1508 = vadd.f32 %v1506, %v1507
    %v1509 = vrot.slane %v1409, 4
    %v1510 = vadd.f32 %v1409, %v1509
    %v1511 = vrot.slane %v1510, 2
    %v1512 = vadd.f32 %v1510, %v1511
    %v1513 = vrot.slane %v1512, 1
    %v1514 = vadd.f32 %v1512, %v1513
    %v1515 = vrot.slane %v1412, 4
    %v1516 = vadd.f32 %v1412, %v1515
    %v1517 = vrot.slane %v1516, 2
    %v1518 = vadd.f32 %v1516, %v1517
    %v1519 = vrot.slane %v1518, 1
    %v1520 = vadd.f32 %v1518, %v1519
    %v1521 = vrot.slane %v1415, 4
    %v1522 = vadd.f32 %v1415, %v1521
    %v1523 = vrot.slane %v1522, 2
    %v1524 = vadd.f32 %v1522, %v1523
    %v1525 = vrot.slane %v1524, 1
    %v1526 = vadd.f32 %v1524, %v1525
    %v1527 = vrot.slane %v1418, 4
    %v1528 = vadd.f32 %v1418, %v1527
    %v1529 = vrot.slane %v1528, 2
    %v1530 = vadd.f32 %v1528, %v1529
    %v1531 = vrot.slane %v1530, 1
    %v1532 = vadd.f32 %v1530, %v1531
    %v1533 = vrot.slane %v1421, 4
    %v1534 = vadd.f32 %v1421, %v1533
    %v1535 = vrot.slane %v1534, 2
    %v1536 = vadd.f32 %v1534, %v1535
    %v1537 = vrot.slane %v1536, 1
    %v1538 = vadd.f32 %v1536, %v1537
    %v1539 = vrot.slane %v1424, 4
    %v1540 = vadd.f32 %v1424, %v1539
    %v1541 = vrot.slane %v1540, 2
    %v1542 = vadd.f32 %v1540, %v1541
    %v1543 = vrot.slane %v1542, 1
    %v1544 = vadd.f32 %v1542, %v1543
    %v1545 = vrot.slane %v1427, 4
    %v1546 = vadd.f32 %v1427, %v1545
    %v1547 = vrot.slane %v1546, 2
    %v1548 = vadd.f32 %v1546, %v1547
    %v1549 = vrot.slane %v1548, 1
    %v1550 = vadd.f32 %v1548, %v1549
    %v1551 = vrot.slane %v1430, 4
    %v1552 = vadd.f32 %v1430, %v1551
    %v1553 = vrot.slane %v1552, 2
    %v1554 = vadd.f32 %v1552, %v1553
    %v1555 = vrot.slane %v1554, 1
    %v1556 = vadd.f32 %v1554, %v1555
    %v1557 = vrot.slane %v1433, 4
    %v1558 = vadd.f32 %v1433, %v1557
    %v1559 = vrot.slane %v1558, 2
    %v1560 = vadd.f32 %v1558, %v1559
    %v1561 = vrot.slane %v1560, 1
    %v1562 = vadd.f32 %v1560, %v1561
    %v1563 = vrot.slane %v1436, 4
    %v1564 = vadd.f32 %v1436, %v1563
    %v1565 = vrot.slane %v1564, 2
    %v1566 = vadd.f32 %v1564, %v1565
    %v1567 = vrot.slane %v1566, 1
    %v1568 = vadd.f32 %v1566, %v1567
    %v1569 = vrot.slane %v1439, 4
    %v1570 = vadd.f32 %v1439, %v1569
    %v1571 = vrot.slane %v1570, 2
    %v1572 = vadd.f32 %v1570, %v1571
    %v1573 = vrot.slane %v1572, 1
    %v1574 = vadd.f32 %v1572, %v1573
    %v1575 = vrot.slane %v1442, 4
    %v1576 = vadd.f32 %v1442, %v1575
    %v1577 = vrot.slane %v1576, 2
    %v1578 = vadd.f32 %v1576, %v1577
    %v1579 = vrot.slane %v1578, 1
    %v1580 = vadd.f32 %v1578, %v1579
    %v1581 = vrot.slane %v1445, 4
    %v1582 = vadd.f32 %v1445, %v1581
    %v1583 = vrot.slane %v1582, 2
    %v1584 = vadd.f32 %v1582, %v1583
    %v1585 = vrot.slane %v1584, 1
    %v1586 = vadd.f32 %v1584, %v1585
    %v1587 = vrot.slane %v1448, 4
    %v1588 = vadd.f32 %v1448, %v1587
    %v1589 = vrot.slane %v1588, 2
    %v1590 = vadd.f32 %v1588, %v1589
    %v1591 = vrot.slane %v1590, 1
    %v1592 = vadd.f32 %v1590, %v1591
    %v1593 = vrcp.pop %v1454
    %v1594 = vmul.f32 8.0, %v1593
    %v1595 = vrcp.pop %v1460
    %v1596 = vmul.f32 8.0, %v1595
    %v1597 = vrcp.pop %v1466
    %v1598 = vmul.f32 8.0, %v1597
    %v1599 = vrcp.pop %v1472
    %v1600 = vmul.f32 8.0, %v1599
    %v1601 = vrcp.pop %v1478
    %v1602 = vmul.f32 8.0, %v1601
    %v1603 = vrcp.pop %v1484
    %v1604 = vmul.f32 8.0, %v1603
    %v1605 = vrcp.pop %v1490
    %v1606 = vmul.f32 8.0, %v1605
    %v1607 = vrcp.pop %v1496
    %v1608 = vmul.f32 8.0, %v1607
    %v1609 = vrcp.pop %v1502
    %v1610 = vmul.f32 8.0, %v1609
    %v1611 = vrcp.pop %v1508
    %v1612 = vmul.f32 8.0, %v1611
    %v1613 = vrcp.pop %v1514
    %v1614 = vmul.f32 8.0, %v1613
    %v1615 = vrcp.pop %v1520
    %v1616 = vmul.f32 8.0, %v1615
    %v1617 = vrcp.pop %v1526
    %v1618 = vmul.f32 8.0, %v1617
    %v1619 = vrcp.pop %v1532
    %v1620 = vmul.f32 8.0, %v1619
    %v1621 = vrcp.pop %v1538
    %v1622 = vmul.f32 8.0, %v1621
    %v1623 = vrcp.pop %v1544
    %v1624 = vmul.f32 8.0, %v1623
    %v1625 = vrcp.pop %v1550
    %v1626 = vmul.f32 8.0, %v1625
    %v1627 = vrcp.pop %v1556
    %v1628 = vmul.f32 8.0, %v1627
    %v1629 = vrcp.pop %v1562
    %v1630 = vmul.f32 8.0, %v1629
    %v1631 = vrcp.pop %v1568
    %v1632 = vmul.f32 8.0, %v1631
    %v1633 = vrcp.pop %v1574
    %v1634 = vmul.f32 8.0, %v1633
    %v1635 = vrcp.pop %v1580
    %v1636 = vmul.f32 8.0, %v1635
    %v1637 = vrcp.pop %v1586
    %v1638 = vmul.f32 8.0, %v1637
    %v1639 = vrcp.pop %v1592
    %v1640 = vmul.f32 8.0, %v1639
    %v1641 = vmul.f32 %v1330, %v1594
    %v1642 = vmul.f32 %v1332, %v1596
    %v1643 = vmul.f32 %v1334, %v1598
    %v1644 = vmul.f32 %v1336, %v1600
    %v1645 = vmul.f32 %v1338, %v1602
    %v1646 = vmul.f32 %v1340, %v1604
    %v1647 = vmul.f32 %v1342, %v1606
    %v1648 = vmul.f32 %v1344, %v1608
    %v1649 = vmul.f32 %v1346, %v1610
    %v1650 = vmul.f32 %v1348, %v1612
    %v1651 = vmul.f32 %v1350, %v1614
    %v1652 = vmul.f32 %v1352, %v1616
    %v1653 = vmul.f32 %v1354, %v1618
    %v1654 = vmul.f32 %v1356, %v1620
    %v1655 = vmul.f32 %v1358, %v1622
    %v1656 = vmul.f32 %v1360, %v1624
    %v1657 = vmul.f32 %v1362, %v1626
    %v1658 = vmul.f32 %v1364, %v1628
    %v1659 = vmul.f32 %v1366, %v1630
    %v1660 = vmul.f32 %v1368, %v1632
    %v1661 = vmul.f32 %v1370, %v1634
    %v1662 = vmul.f32 %v1372, %v1636
    %v1663 = vmul.f32 %v1374, %v1638
    %v1664 = vmul.f32 %v1376, %v1640
    %v1665 = vadd.f32 %v1641, %v1649
    %v1666 = vadd.f32 %v1642, %v1650
    %v1667 = vadd.f32 %v1643, %v1651
    %v1668 = vadd.f32 %v1644, %v1652
    %v1669 = vadd.f32 %v1645, %v1653
    %v1670 = vadd.f32 %v1646, %v1654
    %v1671 = vadd.f32 %v1647, %v1655
    %v1672 = vadd.f32 %v1648, %v1656
    %v1673 = vadd.f32 %v1665, %v1657
    %v1674 = vadd.f32 %v1666, %v1658
    %v1675 = vadd.f32 %v1667, %v1659
    %v1676 = vadd.f32 %v1668, %v1660
    %v1677 = vadd.f32 %v1669, %v1661
    %v1678 = vadd.f32 %v1670, %v1662
    %v1679 = vadd.f32 %v1671, %v1663
    %v1680 = vadd.f32 %v1672, %v1664
    %v1681 = vmul.f32 %v1673, 0.33333334
    %v1682 = vmul.f32 %v1674, 0.33333334
    %v1683 = vmul.f32 %v1675, 0.33333334
    %v1684 = vmul.f32 %v1676, 0.33333334
    %v1685 = vmul.f32 %v1677, 0.33333334
    %v1686 = vmul.f32 %v1678, 0.33333334
    %v1687 = vmul.f32 %v1679, 0.33333334
    %v1688 = vmul.f32 %v1680, 0.33333334
    %1689 = vrot.lane.b32.xlu0 %v292, 96
    %v1690 = vpop.permute.xlu0 %1689
    %v1693 = vsel %vm360, %v1681, 0
    %1695 = vmatprep.subr.mxu0 0.0
    %1696 = vmatpush1.msra.mxu0 %v1690
    %1697 = vmatprep.subr.mxu0 0.0
    %1698 = vmatpush1.msra.mxu0 0.0
    %1699 = vmatprep.subr.mxu0 0.0
    %1700 = vmatpush1.msra.mxu0 0.0
    %1701 = vmatprep.subr.mxu0 0.0
    %1702 = vmatpush1.msra.mxu0 0.0
    %1703 = vmatprep.subr.mxu0 0.0
    %1704 = vmatpush1.msra.mxu0 0.0
    %1705 = vmatprep.subr.mxu0 0.0
    %1706 = vmatpush1.msra.mxu0 0.0
    %1707 = vmatprep.subr.mxu0 0.0
    %1708 = vmatpush1.msra.mxu0 0.0
    %1709 = vmatprep.subr.mxu0 0.0
    %1710 = vmatpush1.msra.mxu0 0.0
    %1711 = vmatprep.subr.mxu0 0.0
    %1712 = vmatpush1.msra.mxu0 0.0
    %1713 = vmatprep.subr.mxu0 0.0
    %1714 = vmatpush1.msra.mxu0 0.0
    %1715 = vmatprep.subr.mxu0 0.0
    %1716 = vmatpush1.msra.mxu0 0.0
    %1717 = vmatprep.subr.mxu0 0.0
    %1718 = vmatpush1.msra.mxu0 0.0
    %1719 = vmatprep.subr.mxu0 0.0
    %1720 = vmatpush1.msra.mxu0 0.0
    %1721 = vmatprep.subr.mxu0 0.0
    %1722 = vmatpush1.msra.mxu0 0.0
    %1723 = vmatprep.subr.mxu0 0.0
    %1724 = vmatpush1.msra.mxu0 0.0
    %1725 = vmatprep.subr.mxu0 0.0
    %1726 = vmatpush1.msra.mxu0 0.0
    %1727 = vmatprep.subr.mxu0 0.0
    %1728 = vmatpush1.msra.mxu0 0.0
    %1729 = vmatprep.subr.mxu0 0.0
    %1730 = vmatpush1.msra.mxu0 0.0
    %1731 = vmatprep.subr.mxu0 0.0
    %1732 = vmatpush1.msra.mxu0 0.0
    %1733 = vmatprep.subr.mxu0 0.0
    %1734 = vmatpush1.msra.mxu0 0.0
    %1735 = vmatprep.subr.mxu0 0.0
    %1736 = vmatpush1.msra.mxu0 0.0
    %1737 = vmatprep.subr.mxu0 0.0
    %1738 = vmatpush1.msra.mxu0 0.0
    %1739 = vmatprep.subr.mxu0 0.0
    %1740 = vmatpush1.msra.mxu0 0.0
    %1741 = vmatprep.subr.mxu0 0.0
    %1742 = vmatpush1.msra.mxu0 0.0
    %1743 = vmatprep.subr.mxu0 0.0
    %1744 = vmatpush1.msra.mxu0 0.0
    %1745 = vmatprep.subr.mxu0 0.0
    %1746 = vmatpush1.msra.mxu0 0.0
    %1747 = vmatprep.subr.mxu0 0.0
    %1748 = vmatpush1.msra.mxu0 0.0
    %1749 = vmatprep.subr.mxu0 0.0
    %1750 = vmatpush1.msra.mxu0 0.0
    %1751 = vmatprep.subr.mxu0 0.0
    %1752 = vmatpush1.msra.mxu0 0.0
    %1753 = vmatprep.subr.mxu0 0.0
    %1754 = vmatpush1.msra.mxu0 0.0
    %1755 = vmatprep.subr.mxu0 0.0
    %1756 = vmatpush1.msra.mxu0 0.0
    %1757 = vmatprep.subr.mxu0 0.0
    %1758 = vmatpush1.msra.mxu0 0.0
    %1759 = vmatprep.mubr.f32.mxu0 0.0
    %1760 = vmatmul.mubr.f32.gmra.mrb[0].mxu0 %v1693
    %v1761 = vpop.f32.mrb[0].mxu0
    %v1762 = vadd.f32 0.0, %v1761
    %v1763 = vpop.f32.mrb[0].mxu0
    %1764 = vdwg.mxu0
    %1765 = vrot.lane.b32.xlu0 %v348, 96
    %v1766 = vpop.permute.xlu0 %1765
    %v1769 = vsel %vm360, %v1682, 0
    %1771 = vmatprep.subr.mxu0 0.0
    %1772 = vmatpush1.msra.mxu0 %v1766
    %1773 = vmatprep.subr.mxu0 0.0
    %1774 = vmatpush1.msra.mxu0 0.0
    %1775 = vmatprep.subr.mxu0 0.0
    %1776 = vmatpush1.msra.mxu0 0.0
    %1777 = vmatprep.subr.mxu0 0.0
    %1778 = vmatpush1.msra.mxu0 0.0
    %1779 = vmatprep.subr.mxu0 0.0
    %1780 = vmatpush1.msra.mxu0 0.0
    %1781 = vmatprep.subr.mxu0 0.0
    %1782 = vmatpush1.msra.mxu0 0.0
    %1783 = vmatprep.subr.mxu0 0.0
    %1784 = vmatpush1.msra.mxu0 0.0
    %1785 = vmatprep.subr.mxu0 0.0
    %1786 = vmatpush1.msra.mxu0 0.0
    %1787 = vmatprep.subr.mxu0 0.0
    %1788 = vmatpush1.msra.mxu0 0.0
    %1789 = vmatprep.subr.mxu0 0.0
    %1790 = vmatpush1.msra.mxu0 0.0
    %1791 = vmatprep.subr.mxu0 0.0
    %1792 = vmatpush1.msra.mxu0 0.0
    %1793 = vmatprep.subr.mxu0 0.0
    %1794 = vmatpush1.msra.mxu0 0.0
    %1795 = vmatprep.subr.mxu0 0.0
    %1796 = vmatpush1.msra.mxu0 0.0
    %1797 = vmatprep.subr.mxu0 0.0
    %1798 = vmatpush1.msra.mxu0 0.0
    %1799 = vmatprep.subr.mxu0 0.0
    %1800 = vmatpush1.msra.mxu0 0.0
    %1801 = vmatprep.subr.mxu0 0.0
    %1802 = vmatpush1.msra.mxu0 0.0
    %1803 = vmatprep.subr.mxu0 0.0
    %1804 = vmatpush1.msra.mxu0 0.0
    %1805 = vmatprep.subr.mxu0 0.0
    %1806 = vmatpush1.msra.mxu0 0.0
    %1807 = vmatprep.subr.mxu0 0.0
    %1808 = vmatpush1.msra.mxu0 0.0
    %1809 = vmatprep.subr.mxu0 0.0
    %1810 = vmatpush1.msra.mxu0 0.0
    %1811 = vmatprep.subr.mxu0 0.0
    %1812 = vmatpush1.msra.mxu0 0.0
    %1813 = vmatprep.subr.mxu0 0.0
    %1814 = vmatpush1.msra.mxu0 0.0
    %1815 = vmatprep.subr.mxu0 0.0
    %1816 = vmatpush1.msra.mxu0 0.0
    %1817 = vmatprep.subr.mxu0 0.0
    %1818 = vmatpush1.msra.mxu0 0.0
    %1819 = vmatprep.subr.mxu0 0.0
    %1820 = vmatpush1.msra.mxu0 0.0
    %1821 = vmatprep.subr.mxu0 0.0
    %1822 = vmatpush1.msra.mxu0 0.0
    %1823 = vmatprep.subr.mxu0 0.0
    %1824 = vmatpush1.msra.mxu0 0.0
    %1825 = vmatprep.subr.mxu0 0.0
    %1826 = vmatpush1.msra.mxu0 0.0
    %1827 = vmatprep.subr.mxu0 0.0
    %1828 = vmatpush1.msra.mxu0 0.0
    %1829 = vmatprep.subr.mxu0 0.0
    %1830 = vmatpush1.msra.mxu0 0.0
    %1831 = vmatprep.subr.mxu0 0.0
    %1832 = vmatpush1.msra.mxu0 0.0
    %1833 = vmatprep.subr.mxu0 0.0
    %1834 = vmatpush1.msra.mxu0 0.0
    %1835 = vmatprep.mubr.f32.mxu0 0.0
    %1836 = vmatmul.mubr.f32.gmra.mrb[0].mxu0 %v1769
    %v1837 = vpop.f32.mrb[0].mxu0
    %v1838 = vadd.f32 0.0, %v1837
    %v1839 = vpop.f32.mrb[0].mxu0
    %1840 = vdwg.mxu0
    %1841 = vrot.lane.b32.xlu0 %v350, 96
    %v1842 = vpop.permute.xlu0 %1841
    %v1845 = vsel %vm360, %v1683, 0
    %1847 = vmatprep.subr.mxu0 0.0
    %1848 = vmatpush1.msra.mxu0 %v1842
    %1849 = vmatprep.subr.mxu0 0.0
    %1850 = vmatpush1.msra.mxu0 0.0
    %1851 = vmatprep.subr.mxu0 0.0
    %1852 = vmatpush1.msra.mxu0 0.0
    %1853 = vmatprep.subr.mxu0 0.0
    %1854 = vmatpush1.msra.mxu0 0.0
    %1855 = vmatprep.subr.mxu0 0.0
    %1856 = vmatpush1.msra.mxu0 0.0
    %1857 = vmatprep.subr.mxu0 0.0
    %1858 = vmatpush1.msra.mxu0 0.0
    %1859 = vmatprep.subr.mxu0 0.0
    %1860 = vmatpush1.msra.mxu0 0.0
    %1861 = vmatprep.subr.mxu0 0.0
    %1862 = vmatpush1.msra.mxu0 0.0
    %1863 = vmatprep.subr.mxu0 0.0
    %1864 = vmatpush1.msra.mxu0 0.0
    %1865 = vmatprep.subr.mxu0 0.0
    %1866 = vmatpush1.msra.mxu0 0.0
    %1867 = vmatprep.subr.mxu0 0.0
    %1868 = vmatpush1.msra.mxu0 0.0
    %1869 = vmatprep.subr.mxu0 0.0
    %1870 = vmatpush1.msra.mxu0 0.0
    %1871 = vmatprep.subr.mxu0 0.0
    %1872 = vmatpush1.msra.mxu0 0.0
    %1873 = vmatprep.subr.mxu0 0.0
    %1874 = vmatpush1.msra.mxu0 0.0
    %1875 = vmatprep.subr.mxu0 0.0
    %1876 = vmatpush1.msra.mxu0 0.0
    %1877 = vmatprep.subr.mxu0 0.0
    %1878 = vmatpush1.msra.mxu0 0.0
    %1879 = vmatprep.subr.mxu0 0.0
    %1880 = vmatpush1.msra.mxu0 0.0
    %1881 = vmatprep.subr.mxu0 0.0
    %1882 = vmatpush1.msra.mxu0 0.0
    %1883 = vmatprep.subr.mxu0 0.0
    %1884 = vmatpush1.msra.mxu0 0.0
    %1885 = vmatprep.subr.mxu0 0.0
    %1886 = vmatpush1.msra.mxu0 0.0
    %1887 = vmatprep.subr.mxu0 0.0
    %1888 = vmatpush1.msra.mxu0 0.0
    %1889 = vmatprep.subr.mxu0 0.0
    %1890 = vmatpush1.msra.mxu0 0.0
    %1891 = vmatprep.subr.mxu0 0.0
    %1892 = vmatpush1.msra.mxu0 0.0
    %1893 = vmatprep.subr.mxu0 0.0
    %1894 = vmatpush1.msra.mxu0 0.0
    %1895 = vmatprep.subr.mxu0 0.0
    %1896 = vmatpush1.msra.mxu0 0.0
    %1897 = vmatprep.subr.mxu0 0.0
    %1898 = vmatpush1.msra.mxu0 0.0
    %1899 = vmatprep.subr.mxu0 0.0
    %1900 = vmatpush1.msra.mxu0 0.0
    %1901 = vmatprep.subr.mxu0 0.0
    %1902 = vmatpush1.msra.mxu0 0.0
    %1903 = vmatprep.subr.mxu0 0.0
    %1904 = vmatpush1.msra.mxu0 0.0
    %1905 = vmatprep.subr.mxu0 0.0
    %1906 = vmatpush1.msra.mxu0 0.0
    %1907 = vmatprep.subr.mxu0 0.0
    %1908 = vmatpush1.msra.mxu0 0.0
    %1909 = vmatprep.subr.mxu0 0.0
    %1910 = vmatpush1.msra.mxu0 0.0
    %1911 = vmatprep.mubr.f32.mxu0 0.0
    %1912 = vmatmul.mubr.f32.gmra.mrb[0].mxu0 %v1845
    %v1913 = vpop.f32.mrb[0].mxu0
    %v1914 = vadd.f32 0.0, %v1913
    %v1915 = vpop.f32.mrb[0].mxu0
    %1916 = vdwg.mxu0
    %1917 = vrot.lane.b32.xlu0 %v352, 96
    %v1918 = vpop.permute.xlu0 %1917
    %v1921 = vsel %vm360, %v1684, 0
    %1923 = vmatprep.subr.mxu0 0.0
    %1924 = vmatpush1.msra.mxu0 %v1918
    %1925 = vmatprep.subr.mxu0 0.0
    %1926 = vmatpush1.msra.mxu0 0.0
    %1927 = vmatprep.subr.mxu0 0.0
    %1928 = vmatpush1.msra.mxu0 0.0
    %1929 = vmatprep.subr.mxu0 0.0
    %1930 = vmatpush1.msra.mxu0 0.0
    %1931 = vmatprep.subr.mxu0 0.0
    %1932 = vmatpush1.msra.mxu0 0.0
    %1933 = vmatprep.subr.mxu0 0.0
    %1934 = vmatpush1.msra.mxu0 0.0
    %1935 = vmatprep.subr.mxu0 0.0
    %1936 = vmatpush1.msra.mxu0 0.0
    %1937 = vmatprep.subr.mxu0 0.0
    %1938 = vmatpush1.msra.mxu0 0.0
    %1939 = vmatprep.subr.mxu0 0.0
    %1940 = vmatpush1.msra.mxu0 0.0
    %1941 = vmatprep.subr.mxu0 0.0
    %1942 = vmatpush1.msra.mxu0 0.0
    %1943 = vmatprep.subr.mxu0 0.0
    %1944 = vmatpush1.msra.mxu0 0.0
    %1945 = vmatprep.subr.mxu0 0.0
    %1946 = vmatpush1.msra.mxu0 0.0
    %1947 = vmatprep.subr.mxu0 0.0
    %1948 = vmatpush1.msra.mxu0 0.0
    %1949 = vmatprep.subr.mxu0 0.0
    %1950 = vmatpush1.msra.mxu0 0.0
    %1951 = vmatprep.subr.mxu0 0.0
    %1952 = vmatpush1.msra.mxu0 0.0
    %1953 = vmatprep.subr.mxu0 0.0
    %1954 = vmatpush1.msra.mxu0 0.0
    %1955 = vmatprep.subr.mxu0 0.0
    %1956 = vmatpush1.msra.mxu0 0.0
    %1957 = vmatprep.subr.mxu0 0.0
    %1958 = vmatpush1.msra.mxu0 0.0
    %1959 = vmatprep.subr.mxu0 0.0
    %1960 = vmatpush1.msra.mxu0 0.0
    %1961 = vmatprep.subr.mxu0 0.0
    %1962 = vmatpush1.msra.mxu0 0.0
    %1963 = vmatprep.subr.mxu0 0.0
    %1964 = vmatpush1.msra.mxu0 0.0
    %1965 = vmatprep.subr.mxu0 0.0
    %1966 = vmatpush1.msra.mxu0 0.0
    %1967 = vmatprep.subr.mxu0 0.0
    %1968 = vmatpush1.msra.mxu0 0.0
    %1969 = vmatprep.subr.mxu0 0.0
    %1970 = vmatpush1.msra.mxu0 0.0
    %1971 = vmatprep.subr.mxu0 0.0
    %1972 = vmatpush1.msra.mxu0 0.0
    %1973 = vmatprep.subr.mxu0 0.0
    %1974 = vmatpush1.msra.mxu0 0.0
    %1975 = vmatprep.subr.mxu0 0.0
    %1976 = vmatpush1.msra.mxu0 0.0
    %1977 = vmatprep.subr.mxu0 0.0
    %1978 = vmatpush1.msra.mxu0 0.0
    %1979 = vmatprep.subr.mxu0 0.0
    %1980 = vmatpush1.msra.mxu0 0.0
    %1981 = vmatprep.subr.mxu0 0.0
    %1982 = vmatpush1.msra.mxu0 0.0
    %1983 = vmatprep.subr.mxu0 0.0
    %1984 = vmatpush1.msra.mxu0 0.0
    %1985 = vmatprep.subr.mxu0 0.0
    %1986 = vmatpush1.msra.mxu0 0.0
    %1987 = vmatprep.mubr.f32.mxu0 0.0
    %1988 = vmatmul.mubr.f32.gmra.mrb[0].mxu0 %v1921
    %v1989 = vpop.f32.mrb[0].mxu0
    %v1990 = vadd.f32 0.0, %v1989
    %v1991 = vpop.f32.mrb[0].mxu0
    %1992 = vdwg.mxu0
    %1993 = vrot.lane.b32.xlu0 %v297, 96
    %v1994 = vpop.permute.xlu0 %1993
    %v1997 = vsel %vm360, %v1685, 0
    %1999 = vmatprep.subr.mxu0 0.0
    %2000 = vmatpush1.msra.mxu0 %v1994
    %2001 = vmatprep.subr.mxu0 0.0
    %2002 = vmatpush1.msra.mxu0 0.0
    %2003 = vmatprep.subr.mxu0 0.0
    %2004 = vmatpush1.msra.mxu0 0.0
    %2005 = vmatprep.subr.mxu0 0.0
    %2006 = vmatpush1.msra.mxu0 0.0
    %2007 = vmatprep.subr.mxu0 0.0
    %2008 = vmatpush1.msra.mxu0 0.0
    %2009 = vmatprep.subr.mxu0 0.0
    %2010 = vmatpush1.msra.mxu0 0.0
    %2011 = vmatprep.subr.mxu0 0.0
    %2012 = vmatpush1.msra.mxu0 0.0
    %2013 = vmatprep.subr.mxu0 0.0
    %2014 = vmatpush1.msra.mxu0 0.0
    %2015 = vmatprep.subr.mxu0 0.0
    %2016 = vmatpush1.msra.mxu0 0.0
    %2017 = vmatprep.subr.mxu0 0.0
    %2018 = vmatpush1.msra.mxu0 0.0
    %2019 = vmatprep.subr.mxu0 0.0
    %2020 = vmatpush1.msra.mxu0 0.0
    %2021 = vmatprep.subr.mxu0 0.0
    %2022 = vmatpush1.msra.mxu0 0.0
    %2023 = vmatprep.subr.mxu0 0.0
    %2024 = vmatpush1.msra.mxu0 0.0
    %2025 = vmatprep.subr.mxu0 0.0
    %2026 = vmatpush1.msra.mxu0 0.0
    %2027 = vmatprep.subr.mxu0 0.0
    %2028 = vmatpush1.msra.mxu0 0.0
    %2029 = vmatprep.subr.mxu0 0.0
    %2030 = vmatpush1.msra.mxu0 0.0
    %2031 = vmatprep.subr.mxu0 0.0
    %2032 = vmatpush1.msra.mxu0 0.0
    %2033 = vmatprep.subr.mxu0 0.0
    %2034 = vmatpush1.msra.mxu0 0.0
    %2035 = vmatprep.subr.mxu0 0.0
    %2036 = vmatpush1.msra.mxu0 0.0
    %2037 = vmatprep.subr.mxu0 0.0
    %2038 = vmatpush1.msra.mxu0 0.0
    %2039 = vmatprep.subr.mxu0 0.0
    %2040 = vmatpush1.msra.mxu0 0.0
    %2041 = vmatprep.subr.mxu0 0.0
    %2042 = vmatpush1.msra.mxu0 0.0
    %2043 = vmatprep.subr.mxu0 0.0
    %2044 = vmatpush1.msra.mxu0 0.0
    %2045 = vmatprep.subr.mxu0 0.0
    %2046 = vmatpush1.msra.mxu0 0.0
    %2047 = vmatprep.subr.mxu0 0.0
    %2048 = vmatpush1.msra.mxu0 0.0
    %2049 = vmatprep.subr.mxu0 0.0
    %2050 = vmatpush1.msra.mxu0 0.0
    %2051 = vmatprep.subr.mxu0 0.0
    %2052 = vmatpush1.msra.mxu0 0.0
    %2053 = vmatprep.subr.mxu0 0.0
    %2054 = vmatpush1.msra.mxu0 0.0
    %2055 = vmatprep.subr.mxu0 0.0
    %2056 = vmatpush1.msra.mxu0 0.0
    %2057 = vmatprep.subr.mxu0 0.0
    %2058 = vmatpush1.msra.mxu0 0.0
    %2059 = vmatprep.subr.mxu0 0.0
    %2060 = vmatpush1.msra.mxu0 0.0
    %2061 = vmatprep.subr.mxu0 0.0
    %2062 = vmatpush1.msra.mxu0 0.0
    %2063 = vmatprep.mubr.f32.mxu0 0.0
    %2064 = vmatmul.mubr.f32.gmra.mrb[0].mxu0 %v1997
    %v2065 = vpop.f32.mrb[0].mxu0
    %v2066 = vadd.f32 0.0, %v2065
    %v2067 = vpop.f32.mrb[0].mxu0
    %2068 = vdwg.mxu0
    %2069 = vrot.lane.b32.xlu0 %v355, 96
    %v2070 = vpop.permute.xlu0 %2069
    %v2073 = vsel %vm360, %v1686, 0
    %2075 = vmatprep.subr.mxu0 0.0
    %2076 = vmatpush1.msra.mxu0 %v2070
    %2077 = vmatprep.subr.mxu0 0.0
    %2078 = vmatpush1.msra.mxu0 0.0
    %2079 = vmatprep.subr.mxu0 0.0
    %2080 = vmatpush1.msra.mxu0 0.0
    %2081 = vmatprep.subr.mxu0 0.0
    %2082 = vmatpush1.msra.mxu0 0.0
    %2083 = vmatprep.subr.mxu0 0.0
    %2084 = vmatpush1.msra.mxu0 0.0
    %2085 = vmatprep.subr.mxu0 0.0
    %2086 = vmatpush1.msra.mxu0 0.0
    %2087 = vmatprep.subr.mxu0 0.0
    %2088 = vmatpush1.msra.mxu0 0.0
    %2089 = vmatprep.subr.mxu0 0.0
    %2090 = vmatpush1.msra.mxu0 0.0
    %2091 = vmatprep.subr.mxu0 0.0
    %2092 = vmatpush1.msra.mxu0 0.0
    %2093 = vmatprep.subr.mxu0 0.0
    %2094 = vmatpush1.msra.mxu0 0.0
    %2095 = vmatprep.subr.mxu0 0.0
    %2096 = vmatpush1.msra.mxu0 0.0
    %2097 = vmatprep.subr.mxu0 0.0
    %2098 = vmatpush1.msra.mxu0 0.0
    %2099 = vmatprep.subr.mxu0 0.0
    %2100 = vmatpush1.msra.mxu0 0.0
    %2101 = vmatprep.subr.mxu0 0.0
    %2102 = vmatpush1.msra.mxu0 0.0
    %2103 = vmatprep.subr.mxu0 0.0
    %2104 = vmatpush1.msra.mxu0 0.0
    %2105 = vmatprep.subr.mxu0 0.0
    %2106 = vmatpush1.msra.mxu0 0.0
    %2107 = vmatprep.subr.mxu0 0.0
    %2108 = vmatpush1.msra.mxu0 0.0
    %2109 = vmatprep.subr.mxu0 0.0
    %2110 = vmatpush1.msra.mxu0 0.0
    %2111 = vmatprep.subr.mxu0 0.0
    %2112 = vmatpush1.msra.mxu0 0.0
    %2113 = vmatprep.subr.mxu0 0.0
    %2114 = vmatpush1.msra.mxu0 0.0
    %2115 = vmatprep.subr.mxu0 0.0
    %2116 = vmatpush1.msra.mxu0 0.0
    %2117 = vmatprep.subr.mxu0 0.0
    %2118 = vmatpush1.msra.mxu0 0.0
    %2119 = vmatprep.subr.mxu0 0.0
    %2120 = vmatpush1.msra.mxu0 0.0
    %2121 = vmatprep.subr.mxu0 0.0
    %2122 = vmatpush1.msra.mxu0 0.0
    %2123 = vmatprep.subr.mxu0 0.0
    %2124 = vmatpush1.msra.mxu0 0.0
    %2125 = vmatprep.subr.mxu0 0.0
    %2126 = vmatpush1.msra.mxu0 0.0
    %2127 = vmatprep.subr.mxu0 0.0
    %2128 = vmatpush1.msra.mxu0 0.0
    %2129 = vmatprep.subr.mxu0 0.0
    %2130 = vmatpush1.msra.mxu0 0.0
    %2131 = vmatprep.subr.mxu0 0.0
    %2132 = vmatpush1.msra.mxu0 0.0
    %2133 = vmatprep.subr.mxu0 0.0
    %2134 = vmatpush1.msra.mxu0 0.0
    %2135 = vmatprep.subr.mxu0 0.0
    %2136 = vmatpush1.msra.mxu0 0.0
    %2137 = vmatprep.subr.mxu0 0.0
    %2138 = vmatpush1.msra.mxu0 0.0
    %2139 = vmatprep.mubr.f32.mxu0 0.0
    %2140 = vmatmul.mubr.f32.gmra.mrb[0].mxu0 %v2073
    %v2141 = vpop.f32.mrb[0].mxu0
    %v2142 = vadd.f32 0.0, %v2141
    %v2143 = vpop.f32.mrb[0].mxu0
    %2144 = vdwg.mxu0
    %2145 = vrot.lane.b32.xlu0 %v357, 96
    %v2146 = vpop.permute.xlu0 %2145
    %v2149 = vsel %vm360, %v1687, 0
    %2151 = vmatprep.subr.mxu0 0.0
    %2152 = vmatpush1.msra.mxu0 %v2146
    %2153 = vmatprep.subr.mxu0 0.0
    %2154 = vmatpush1.msra.mxu0 0.0
    %2155 = vmatprep.subr.mxu0 0.0
    %2156 = vmatpush1.msra.mxu0 0.0
    %2157 = vmatprep.subr.mxu0 0.0
    %2158 = vmatpush1.msra.mxu0 0.0
    %2159 = vmatprep.subr.mxu0 0.0
    %2160 = vmatpush1.msra.mxu0 0.0
    %2161 = vmatprep.subr.mxu0 0.0
    %2162 = vmatpush1.msra.mxu0 0.0
    %2163 = vmatprep.subr.mxu0 0.0
    %2164 = vmatpush1.msra.mxu0 0.0
    %2165 = vmatprep.subr.mxu0 0.0
    %2166 = vmatpush1.msra.mxu0 0.0
    %2167 = vmatprep.subr.mxu0 0.0
    %2168 = vmatpush1.msra.mxu0 0.0
    %2169 = vmatprep.subr.mxu0 0.0
    %2170 = vmatpush1.msra.mxu0 0.0
    %2171 = vmatprep.subr.mxu0 0.0
    %2172 = vmatpush1.msra.mxu0 0.0
    %2173 = vmatprep.subr.mxu0 0.0
    %2174 = vmatpush1.msra.mxu0 0.0
    %2175 = vmatprep.subr.mxu0 0.0
    %2176 = vmatpush1.msra.mxu0 0.0
    %2177 = vmatprep.subr.mxu0 0.0
    %2178 = vmatpush1.msra.mxu0 0.0
    %2179 = vmatprep.subr.mxu0 0.0
    %2180 = vmatpush1.msra.mxu0 0.0
    %2181 = vmatprep.subr.mxu0 0.0
    %2182 = vmatpush1.msra.mxu0 0.0
    %2183 = vmatprep.subr.mxu0 0.0
    %2184 = vmatpush1.msra.mxu0 0.0
    %2185 = vmatprep.subr.mxu0 0.0
    %2186 = vmatpush1.msra.mxu0 0.0
    %2187 = vmatprep.subr.mxu0 0.0
    %2188 = vmatpush1.msra.mxu0 0.0
    %2189 = vmatprep.subr.mxu0 0.0
    %2190 = vmatpush1.msra.mxu0 0.0
    %2191 = vmatprep.subr.mxu0 0.0
    %2192 = vmatpush1.msra.mxu0 0.0
    %2193 = vmatprep.subr.mxu0 0.0
    %2194 = vmatpush1.msra.mxu0 0.0
    %2195 = vmatprep.subr.mxu0 0.0
    %2196 = vmatpush1.msra.mxu0 0.0
    %2197 = vmatprep.subr.mxu0 0.0
    %2198 = vmatpush1.msra.mxu0 0.0
    %2199 = vmatprep.subr.mxu0 0.0
    %2200 = vmatpush1.msra.mxu0 0.0
    %2201 = vmatprep.subr.mxu0 0.0
    %2202 = vmatpush1.msra.mxu0 0.0
    %2203 = vmatprep.subr.mxu0 0.0
    %2204 = vmatpush1.msra.mxu0 0.0
    %2205 = vmatprep.subr.mxu0 0.0
    %2206 = vmatpush1.msra.mxu0 0.0
    %2207 = vmatprep.subr.mxu0 0.0
    %2208 = vmatpush1.msra.mxu0 0.0
    %2209 = vmatprep.subr.mxu0 0.0
    %2210 = vmatpush1.msra.mxu0 0.0
    %2211 = vmatprep.subr.mxu0 0.0
    %2212 = vmatpush1.msra.mxu0 0.0
    %2213 = vmatprep.subr.mxu0 0.0
    %2214 = vmatpush1.msra.mxu0 0.0
    %2215 = vmatprep.mubr.f32.mxu0 0.0
    %2216 = vmatmul.mubr.f32.gmra.mrb[0].mxu0 %v2149
    %v2217 = vpop.f32.mrb[0].mxu0
    %v2218 = vadd.f32 0.0, %v2217
    %v2219 = vpop.f32.mrb[0].mxu0
    %2220 = vdwg.mxu0
    %2221 = vrot.lane.b32.xlu0 %v359, 96
    %v2222 = vpop.permute.xlu0 %2221
    %v2225 = vsel %vm360, %v1688, 0
    %2227 = vmatprep.subr.mxu0 0.0
    %2228 = vmatpush1.msra.mxu0 %v2222
    %2229 = vmatprep.subr.mxu0 0.0
    %2230 = vmatpush1.msra.mxu0 0.0
    %2231 = vmatprep.subr.mxu0 0.0
    %2232 = vmatpush1.msra.mxu0 0.0
    %2233 = vmatprep.subr.mxu0 0.0
    %2234 = vmatpush1.msra.mxu0 0.0
    %2235 = vmatprep.subr.mxu0 0.0
    %2236 = vmatpush1.msra.mxu0 0.0
    %2237 = vmatprep.subr.mxu0 0.0
    %2238 = vmatpush1.msra.mxu0 0.0
    %2239 = vmatprep.subr.mxu0 0.0
    %2240 = vmatpush1.msra.mxu0 0.0
    %2241 = vmatprep.subr.mxu0 0.0
    %2242 = vmatpush1.msra.mxu0 0.0
    %2243 = vmatprep.subr.mxu0 0.0
    %2244 = vmatpush1.msra.mxu0 0.0
    %2245 = vmatprep.subr.mxu0 0.0
    %2246 = vmatpush1.msra.mxu0 0.0
    %2247 = vmatprep.subr.mxu0 0.0
    %2248 = vmatpush1.msra.mxu0 0.0
    %2249 = vmatprep.subr.mxu0 0.0
    %2250 = vmatpush1.msra.mxu0 0.0
    %2251 = vmatprep.subr.mxu0 0.0
    %2252 = vmatpush1.msra.mxu0 0.0
    %2253 = vmatprep.subr.mxu0 0.0
    %2254 = vmatpush1.msra.mxu0 0.0
    %2255 = vmatprep.subr.mxu0 0.0
    %2256 = vmatpush1.msra.mxu0 0.0
    %2257 = vmatprep.subr.mxu0 0.0
    %2258 = vmatpush1.msra.mxu0 0.0
    %2259 = vmatprep.subr.mxu0 0.0
    %2260 = vmatpush1.msra.mxu0 0.0
    %2261 = vmatprep.subr.mxu0 0.0
    %2262 = vmatpush1.msra.mxu0 0.0
    %2263 = vmatprep.subr.mxu0 0.0
    %2264 = vmatpush1.msra.mxu0 0.0
    %2265 = vmatprep.subr.mxu0 0.0
    %2266 = vmatpush1.msra.mxu0 0.0
    %2267 = vmatprep.subr.mxu0 0.0
    %2268 = vmatpush1.msra.mxu0 0.0
    %2269 = vmatprep.subr.mxu0 0.0
    %2270 = vmatpush1.msra.mxu0 0.0
    %2271 = vmatprep.subr.mxu0 0.0
    %2272 = vmatpush1.msra.mxu0 0.0
    %2273 = vmatprep.subr.mxu0 0.0
    %2274 = vmatpush1.msra.mxu0 0.0
    %2275 = vmatprep.subr.mxu0 0.0
    %2276 = vmatpush1.msra.mxu0 0.0
    %2277 = vmatprep.subr.mxu0 0.0
    %2278 = vmatpush1.msra.mxu0 0.0
    %2279 = vmatprep.subr.mxu0 0.0
    %2280 = vmatpush1.msra.mxu0 0.0
    %2281 = vmatprep.subr.mxu0 0.0
    %2282 = vmatpush1.msra.mxu0 0.0
    %2283 = vmatprep.subr.mxu0 0.0
    %2284 = vmatpush1.msra.mxu0 0.0
    %2285 = vmatprep.subr.mxu0 0.0
    %2286 = vmatpush1.msra.mxu0 0.0
    %2287 = vmatprep.subr.mxu0 0.0
    %2288 = vmatpush1.msra.mxu0 0.0
    %2289 = vmatprep.subr.mxu0 0.0
    %2290 = vmatpush1.msra.mxu0 0.0
    %2291 = vmatprep.mubr.f32.mxu0 0.0
    %2292 = vmatmul.mubr.f32.gmra.mrb[0].mxu0 %v2225
    %v2293 = vpop.f32.mrb[0].mxu0
    %v2294 = vadd.f32 0.0, %v2293
    %v2295 = vpop.f32.mrb[0].mxu0
    %2296 = vdwg.mxu0
    %2298 = vrot.lane.b32.xlu0 %v1838, 8
    %v2299 = vpop.permute.xlu0 %2298
    %2302 = vrot.lane.b32.xlu0 %v1914, 16
    %v2303 = vpop.permute.xlu0 %2302
    %2306 = vrot.lane.b32.xlu0 %v1990, 24
    %v2307 = vpop.permute.xlu0 %2306
    %v2309 = vsel %vm360, %v1762, %v2299
    %vm2310 = vcmask 130048
    %v2311 = vsel %vm2310, %v2309, %v2303
    %vm2312 = vcmask 195584
    %v2313 = vsel %vm2312, %v2311, %v2307
    %2315 = vrot.lane.b32.xlu0 %v1642, 8
    %v2316 = vpop.permute.xlu0 %2315
    %2319 = vrot.lane.b32.xlu0 %v1643, 16
    %v2320 = vpop.permute.xlu0 %2319
    %2323 = vrot.lane.b32.xlu0 %v1644, 24
    %v2324 = vpop.permute.xlu0 %2323
    %v2326 = vsel %vm360, %v1641, %v2316
    %v2327 = vsel %vm2310, %v2326, %v2320
    %v2328 = vsel %vm2312, %v2327, %v2324
    %2330 = vrot.lane.b32.xlu0 %v2142, 8
    %v2331 = vpop.permute.xlu0 %2330
    %2334 = vrot.lane.b32.xlu0 %v2218, 16
    %v2335 = vpop.permute.xlu0 %2334
    %2338 = vrot.lane.b32.xlu0 %v2294, 24
    %v2339 = vpop.permute.xlu0 %2338
    %v2341 = vsel %vm360, %v2066, %v2331
    %v2342 = vsel %vm2310, %v2341, %v2335
    %v2343 = vsel %vm2312, %v2342, %v2339
    %2345 = vrot.lane.b32.xlu0 %v1646, 8
    %v2346 = vpop.permute.xlu0 %2345
    %2349 = vrot.lane.b32.xlu0 %v1647, 16
    %v2350 = vpop.permute.xlu0 %2349
    %2353 = vrot.lane.b32.xlu0 %v1648, 24
    %v2354 = vpop.permute.xlu0 %2353
    %v2356 = vsel %vm360, %v1645, %v2346
    %v2357 = vsel %vm2310, %v2356, %v2350
    %v2358 = vsel %vm2312, %v2357, %v2354
    %v2359 = vld [vmem:[#allocation10] sm:$0xff]
    %v2360 = vld [vmem:[#allocation10 + $0x8] sm:$0xff]
    %v2361 = vld [vmem:[#allocation10 + $0x10] sm:$0xff]
    %v2362 = vld [vmem:[#allocation10 + $0x18] sm:$0xff]
    %v2363 = vld [vmem:[%s7] sm:$0x1]
    %v2365 = vlaneseq
    %v2366 = vshrl.u32 %v2365, 7
    %v2367 = vsub.s32 0, %v2366
    %v2368 = vrot.slane %v2363, %v2367
    %vm2370 = vcmask 261120
    %v2372 = vsel %vm2370, %v2313, 0
    %v2375 = vsel %vm2370, %v2343, 0
    %2377 = vmatprep.subr.mxu0 0.0
    %2378 = vmatpush1.msra.mxu0 %v2359
    %2379 = vmatprep.subr.mxu0 0.0
    %2380 = vmatpush1.msra.mxu0 %v2360
    %2381 = vmatprep.subr.mxu0 0.0
    %2382 = vmatpush1.msra.mxu0 %v2361
    %2383 = vmatprep.subr.mxu0 0.0
    %2384 = vmatpush1.msra.mxu0 %v2362
    %2385 = vmatprep.subr.mxu0 0.0
    %2386 = vmatpush1.msra.mxu0 0.0
    %2387 = vmatprep.subr.mxu0 0.0
    %2388 = vmatpush1.msra.mxu0 0.0
    %2389 = vmatprep.subr.mxu0 0.0
    %2390 = vmatpush1.msra.mxu0 0.0
    %2391 = vmatprep.subr.mxu0 0.0
    %2392 = vmatpush1.msra.mxu0 0.0
    %2393 = vmatprep.subr.mxu0 0.0
    %2394 = vmatpush1.msra.mxu0 0.0
    %2395 = vmatprep.subr.mxu0 0.0
    %2396 = vmatpush1.msra.mxu0 0.0
    %2397 = vmatprep.subr.mxu0 0.0
    %2398 = vmatpush1.msra.mxu0 0.0
    %2399 = vmatprep.subr.mxu0 0.0
    %2400 = vmatpush1.msra.mxu0 0.0
    %2401 = vmatprep.subr.mxu0 0.0
    %2402 = vmatpush1.msra.mxu0 0.0
    %2403 = vmatprep.subr.mxu0 0.0
    %2404 = vmatpush1.msra.mxu0 0.0
    %2405 = vmatprep.subr.mxu0 0.0
    %2406 = vmatpush1.msra.mxu0 0.0
    %2407 = vmatprep.subr.mxu0 0.0
    %2408 = vmatpush1.msra.mxu0 0.0
    %2409 = vmatprep.subr.mxu0 0.0
    %2410 = vmatpush1.msra.mxu0 0.0
    %2411 = vmatprep.subr.mxu0 0.0
    %2412 = vmatpush1.msra.mxu0 0.0
    %2413 = vmatprep.subr.mxu0 0.0
    %2414 = vmatpush1.msra.mxu0 0.0
    %2415 = vmatprep.subr.mxu0 0.0
    %2416 = vmatpush1.msra.mxu0 0.0
    %2417 = vmatprep.subr.mxu0 0.0
    %2418 = vmatpush1.msra.mxu0 0.0
    %2419 = vmatprep.subr.mxu0 0.0
    %2420 = vmatpush1.msra.mxu0 0.0
    %2421 = vmatprep.subr.mxu0 0.0
    %2422 = vmatpush1.msra.mxu0 0.0
    %2423 = vmatprep.subr.mxu0 0.0
    %2424 = vmatpush1.msra.mxu0 0.0
    %2425 = vmatprep.subr.mxu0 0.0
    %2426 = vmatpush1.msra.mxu0 0.0
    %2427 = vmatprep.subr.mxu0 0.0
    %2428 = vmatpush1.msra.mxu0 0.0
    %2429 = vmatprep.subr.mxu0 0.0
    %2430 = vmatpush1.msra.mxu0 0.0
    %2431 = vmatprep.subr.mxu0 0.0
    %2432 = vmatpush1.msra.mxu0 0.0
    %2433 = vmatprep.subr.mxu0 0.0
    %2434 = vmatpush1.msra.mxu0 0.0
    %2435 = vmatprep.subr.mxu0 0.0
    %2436 = vmatpush1.msra.mxu0 0.0
    %2437 = vmatprep.subr.mxu0 0.0
    %2438 = vmatpush1.msra.mxu0 0.0
    %2439 = vmatprep.subr.mxu0 0.0
    %2440 = vmatpush1.msra.mxu0 0.0
    %2441 = vmatprep.mubr.f32.mxu0 0.0
    %2442 = vmatmul.mubr.f32.gmra.mrb[0].mxu0 %v2372
    %v2443 = vpop.f32.mrb[0].mxu0
    %v2444 = vadd.f32 %v2368, %v2443
    %v2445 = vpop.f32.mrb[0].mxu0
    %2446 = vmatprep.mubr.f32.mxu0 0.0
    %2447 = vmatmul.mubr.f32.gmra.mrb[0].mxu0 %v2375
    %v2448 = vpop.f32.mrb[0].mxu0
    %v2449 = vadd.f32 %v2368, %v2448
    %v2450 = vpop.f32.mrb[0].mxu0
    %2451 = vdwg.mxu0
    %2454 = vrot.lane.b32.xlu0 %v2328, 32
    %v2455 = vpop.permute.xlu0 %2454
    %2456 = vrot.lane.b32.xlu0 %v2358, 32
    %v2457 = vpop.permute.xlu0 %2456
    %v2460 = vsel %vm2370, %v2444, %v2455
    %v2461 = vsel %vm2370, %v2449, %v2457
    %2462 = vst.msk [vmem:[#allocation11] sm:$0xff] %vm218, %v2460
    %2463 = vst.msk [vmem:[#allocation11 + $0x8] sm:$0xff] %vm218, %v2461
    // Predicated region
    $region54: #{tpu_custom_call.1} parent=1 // pred_check
      _
    $region55: #{tpu_custom_call.1} parent=1 // pred_check_branch
      %2465 = sbr.rel (0) target = $region57
    $region56: #{tpu_custom_call.1} parent=1 // pred_region
      %s2467 = ssub.s32 256, 256
      %2468 = vsyncadd [#allocation4], %s2467
      %s2469 = sshll.u32 [#allocation11], 4
      %s2470 = int_to_ptr.vmem [resolvable:$true] %s2469
      %2475 = dma.vmem_to_hbm [thread:$0]  %s2470, 256, %s8, [#allocation4], 128, 128, 8
    $region57: #{tpu_custom_call.1} parent=1 // pred_fallthru
      _
    // Predicated region
    $region58: #{tpu_custom_call.1} parent=1 // pred_check
      _
    $region59: #{tpu_custom_call.1} parent=1 // pred_check_branch
      %2477 = sbr.rel (0) target = $region61
    $region60: #{tpu_custom_call.1} parent=1 // pred_region
      %2478 = dma.done [#allocation4], 256
    $region61: #{tpu_custom_call.1} parent=1 // pred_fallthru
      _
    %2479 = vsyncpa [#allocation3], 1
    %2480 = vsyncpa [#allocation6], 1
    %2481 = vsyncpa [#allocation9], 1
    %2482 = vsyncpa [#allocation4], 1

</llo_original>
